<compile_context>
chip_gen: v6e
topology: v6e:2x2x1
jax: 0.10.0
libtpu: 0.0.40
codegen_flags: <defaults>
</compile_context>

<pallas_src>
import jax
import jax.numpy as jnp
from jax.experimental import pallas as pl
from jax.experimental.pallas import tpu as pltpu


X0 = 8  # left W halo: keeps every in-kernel band read sublane-aligned.


# ----------------------------------------------------------------------------
# Fused Pallas kernel: the whole DAG in one invocation, one image per grid step
# ----------------------------------------------------------------------------
def _fused_dag_kernel(x_ref, wa_ref, ba_ref, wb_ref, bb_ref, wc_ref, bc_ref,
                      o_ref, pa_ref, pb_ref, pc_ref):
    """x_ref: (1, H, W, Cin) NHWC input block (one image per grid step).

    wa/ba: stage A, kx-folded (3, 3*Cin, 2C), (1, 2C)  -> [pre | short]
    wb/bb: stage B, kx-folded (3, 3*2C, 128), (1, 128) -> [d11 | deep_2 | short | 0]
    wc/bc: stage C, kx-folded (3, 3*128, 128), (1, 128)-> [conv(d11)+deep_2+short | 0]
    o_ref: (1, H, W, 128) lane-dense output block (real channels = first 32).
    p*_ref: kx-folded, SAME-padded im2col scratches (H+2, W+X0+1, 3*Cin_stage).
    """
    H, W = x_ref.shape[1], x_ref.shape[2]
    M = H * W

    def im2col_store(p_ref, src):
        """Write src (H, W, Cin) into the kx-folded SAME-padded scratch.

        Channel block kx of p_ref holds src shifted by (kx - 1) along W, so a
        single aligned read p_ref[ky:ky+H, X0:X0+W, :] yields the (H*W, 3*Cin)
        im2col rows of tap row ky.  Only the halo cells the reads touch are
        zeroed (no full-scratch zero, no interior double-write).
        """
        cin = src.shape[-1]
        c3 = p_ref.shape[-1]
        zrow = jnp.zeros((1, W, c3), p_ref.dtype)
        zcol = jnp.zeros((p_ref.shape[0], 1, c3), p_ref.dtype)
        p_ref[0:1, X0:X0 + W, :] = zrow           # top SAME-pad row
        p_ref[H + 1:H + 2, X0:X0 + W, :] = zrow   # bottom SAME-pad row
        p_ref[:, X0:X0 + 1, :] = zcol             # left SAME-pad col (block kx=0)
        p_ref[:, X0 + W - 1:X0 + W, :] = zcol     # right SAME-pad col (block kx=2)
        for kx in range(3):                       # kx-shifted copies on the lane axis
            off = X0 + 1 - kx
            p_ref[1:H + 1, off:off + W, kx * cin:(kx + 1) * cin] = src

    def conv3x3(p_ref, w_ref, b_ref):
        """3x3 SAME conv = 3 MXU matmuls with K = 3*Cin, f32 accumulation."""
        acc = None
        for ky in range(3):
            band = p_ref[ky:ky + H, X0:X0 + W, :]            # aligned (H, W, 3Cin)
            lhs = band.reshape(M, band.shape[-1]).astype(jnp.bfloat16)
            d = jnp.dot(lhs, w_ref[ky], preferred_element_type=jnp.float32)
            acc = d if acc is None else acc + d
        return acc + b_ref[...]                               # (1, Cout) broadcast

    # Stage A: x -> [pre | short]                                   (Cout = 2C)
    im2col_store(pa_ref, x_ref[0])
    a = conv3x3(pa_ref, wa_ref, ba_ref)

    # Stage B: [pre | short] -> [deep_1_1 | deep_2 | short | 0]     (Cout = 128)
    # (`short` rides through an identity center-tap of the packed weights.)
    im2col_store(pb_ref, a.reshape(H, W, a.shape[-1]))
    b = conv3x3(pb_ref, wb_ref, bb_ref)

    # Stage C: conv(deep_1_1) + deep_2 + short -- both Adds folded into the
    # matmul via identity center-taps; output lane-padded to 128.
    im2col_store(pc_ref, b.reshape(H, W, b.shape[-1]))
    out = conv3x3(pc_ref, wc_ref, bc_ref)                     # (M, 128)

    o_ref[0] = out.reshape(H, W, out.shape[-1]).astype(o_ref.dtype)


# ----------------------------------------------------------------------------
# Wrapper: single pallas_call, grid over the batch ("parallel" -> 2 TCs on v7x)
# ----------------------------------------------------------------------------
def _fused_forward(x_nhwc, wa, ba, wb, bb, wc, bc):
    N, H, W, Cin = x_nhwc.shape
    CP = wc.shape[-1]                       # lane-dense (padded) output channels
    assert W % 8 == 0, "aligned band reads assume W % 8 == 0"
    WP = W + X0 + 1                         # left halo 8, right halo 1

    return pl.pallas_call(
        _fused_dag_kernel,
        out_shape=jax.ShapeDtypeStruct((N, H, W, CP), x_nhwc.dtype),
        grid=(N,),
        in_specs=[
            pl.BlockSpec((1, H, W, Cin), lambda n: (n, 0, 0, 0)),
            pl.BlockSpec(wa.shape, lambda n: (0, 0, 0)),
            pl.BlockSpec(ba.shape, lambda n: (0, 0)),
            pl.BlockSpec(wb.shape, lambda n: (0, 0, 0)),
            pl.BlockSpec(bb.shape, lambda n: (0, 0)),
            pl.BlockSpec(wc.shape, lambda n: (0, 0, 0)),
            pl.BlockSpec(bc.shape, lambda n: (0, 0)),
        ],
        out_specs=pl.BlockSpec((1, H, W, CP), lambda n: (n, 0, 0, 0)),
        scratch_shapes=[
            pltpu.VMEM((H + 2, WP, 3 * Cin), jnp.float32),          # x im2col
            pltpu.VMEM((H + 2, WP, 3 * wa.shape[-1]), jnp.float32),  # [pre|short]
            pltpu.VMEM((H + 2, WP, 3 * wb.shape[-1]), jnp.float32),  # [d11|d2|short|0]
        ],
        compiler_params=pltpu.CompilerParams(
            dimension_semantics=("parallel",),
            vmem_limit_bytes=32 * 1024 * 1024),
    )(x_nhwc, wa, ba, wb, bb, wc, bc)


# ----------------------------------------------------------------------------
# Weight packing: 5 per-layer convs -> 3 packed, kx-folded, bf16 convs
# (both Adds folded via identity center-taps; intermediates lane-padded to 128)
# ----------------------------------------------------------------------------
def _pack_params(params, c):
    w_pre, b_pre = params["deep_pre_conv"]
    w11, b11 = params["deep_1_1_conv"]
    w12, b12 = params["deep_1_2_conv"]
    w2, b2 = params["deep_2_conv"]
    w_sh, b_sh = params["short_conv"]
    eye = jnp.eye(c, dtype=jnp.float32)
    cb = 4 * c                                 # 128: lane-dense intermediate/output

    def fold_kx(w_hwio):                       # (3,3,I,O) -> (3, 3*I, O)
        kh, kw, i, o = w_hwio.shape
        return w_hwio.reshape(kh, kw * i, o)

    # Stage A: x -> [pre | short]
    wa = jnp.concatenate([w_pre, w_sh], axis=-1)
    ba = jnp.concatenate([b_pre, b_sh], axis=0)

    # Stage B: [pre | short] -> [deep_1_1 | deep_2 | short | 0]   (96 -> 128 pad)
    wb = jnp.zeros((3, 3, 2 * c, cb), jnp.float32)
    wb = wb.at[:, :, :c, :c].set(w11)
    wb = wb.at[:, :, :c, c:2 * c].set(w2)
    wb = wb.at[1, 1, c:2 * c, 2 * c:3 * c].set(eye)               # short passthrough
    bb = jnp.concatenate([b11, b2, jnp.zeros((2 * c,), jnp.float32)], axis=0)

    # Stage C: [d11 | deep_2 | short | 0] -> [conv(d11)+deep_2+short | 0] (32->128)
    wc = jnp.zeros((3, 3, cb, cb), jnp.float32)
    wc = wc.at[:, :, :c, :c].set(w12)
    wc = wc.at[1, 1, c:2 * c, :c].set(eye)                        # + deep_2
    wc = wc.at[1, 1, 2 * c:3 * c, :c].set(eye)                    # + short
    bc = jnp.concatenate([b12, jnp.zeros((cb - c,), jnp.float32)], axis=0)

    to_bf16 = lambda w: fold_kx(w).astype(jnp.bfloat16)
    return (to_bf16(wa), ba.reshape(1, -1),
            to_bf16(wb), bb.reshape(1, -1),
            to_bf16(wc), bc.reshape(1, -1))


# ----------------------------------------------------------------------------
# Model: parameter init + forward (same DAG / semantics as the PyTorch Model)
# ----------------------------------------------------------------------------
def init_params(key, cin, cout):
    names = ["deep_pre_conv", "deep_1_1_conv", "deep_1_2_conv",
             "deep_2_conv", "short_conv"]
    params = {}
    for i, name in enumerate(names):
        c_in = cin if name in ("deep_pre_conv", "short_conv") else cout
        kw, kb = jax.random.split(jax.random.fold_in(key, i))
        fan_in = 3 * 3 * c_in
        w = jax.random.normal(kw, (3, 3, c_in, cout), jnp.float32) / jnp.sqrt(fan_in)
        b = 0.01 * jax.random.normal(kb, (cout,), jnp.float32)
        params[name] = (w, b)
    return params


@jax.jit
def model_forward(x_nchw, params):
    x = jnp.transpose(x_nchw, (0, 2, 3, 1))                 # NCHW -> NHWC
    c = params["deep_pre_conv"][0].shape[-1]
    wa, ba, wb, bb, wc, bc = _pack_params(params, c)
    out = _fused_forward(x, wa, ba, wb, bb, wc, bc)         # (N, H, W, 128)
    return jnp.transpose(out[..., :c], (0, 3, 1, 2))        # drop lane pad, -> NCHW


# ----------------------------------------------------------------------------
# Pure-JAX reference (correctness check)
# ----------------------------------------------------------------------------
def _ref_conv(x, w, b):
    y = jax.lax.conv_general_dilated(
        x, w, window_strides=(1, 1), padding="SAME",
        dimension_numbers=("NHWC", "HWIO", "NHWC"))
    return y + b[None, None, None, :]


def model_forward_ref(x_nchw, params):
    x = jnp.transpose(x_nchw, (0, 2, 3, 1))
    pre = _ref_conv(x, *params["deep_pre_conv"])
    deep_1 = _ref_conv(pre, *params["deep_1_1_conv"])
    deep_1 = _ref_conv(deep_1, *params["deep_1_2_conv"])
    deep_2 = _ref_conv(pre, *params["deep_2_conv"])
    deep = deep_1 + deep_2
    short = _ref_conv(x, *params["short_conv"])
    return jnp.transpose(short + deep, (0, 3, 1, 2))


if __name__ == "__main__":
    key = jax.random.PRNGKey(0)
    kx, kp = jax.random.split(key)

    N, CIN, H, W = 2, 4, 16, 16
    COUT = 32

    x = jax.random.normal(kx, (N, CIN, H, W), jnp.float32)   # NCHW input
    params = init_params(kp, CIN, COUT)

    out = jax.block_until_ready(model_forward(x, params))
    assert out.shape == (N, COUT, H, W), out.shape

    ref = model_forward_ref(x, params)
    # bf16 MXU operands (per perf review) -> results match the f32 XLA
    # reference to ~1e-2 relative, not 1e-4; check relative to output scale.
    err = float(jnp.max(jnp.abs(out - ref)))
    scale = float(jnp.max(jnp.abs(ref)))
    assert err < 2e-2 * scale + 1e-3, (err, scale)

    print("KERNEL_OK")
</pallas_src>

<mosaic_0001>
module attributes {stable_mosaic.version = 11 : i64} {
  func.func @_fused_dag_kernel(%arg0: i32, %arg1: memref<1x16x16x4xf32, #tpu.memory_space<vmem>>, %arg2: memref<3x12x64xbf16, #tpu.memory_space<vmem>>, %arg3: memref<1x64xf32, #tpu.memory_space<vmem>>, %arg4: memref<3x192x128xbf16, #tpu.memory_space<vmem>>, %arg5: memref<1x128xf32, #tpu.memory_space<vmem>>, %arg6: memref<3x384x128xbf16, #tpu.memory_space<vmem>>, %arg7: memref<1x128xf32, #tpu.memory_space<vmem>>, %arg8: memref<1x16x16x128xf32, #tpu.memory_space<vmem>>, %arg9: memref<18x25x12xf32, #tpu.memory_space<vmem>>, %arg10: memref<18x25x192xf32, #tpu.memory_space<vmem>>, %arg11: memref<18x25x384xf32, #tpu.memory_space<vmem>>) attributes {dimension_semantics = [#tpu.dimension_semantics<parallel>], iteration_bounds = array<i64: 2>, scalar_prefetch = 0 : i64, scratch_operands = 3 : i64, tpu.core_type = #tpu.core_type<tc>, window_params = [{transform_indices = @transform_0, window_bounds = array<i64: 1, 16, 16, 4>}, {pipeline_mode = #tpu.pipeline_mode<synchronous>, transform_indices = @transform_1, window_bounds = array<i64: 3, 12, 64>}, {pipeline_mode = #tpu.pipeline_mode<synchronous>, transform_indices = @transform_2, window_bounds = array<i64: 1, 64>}, {pipeline_mode = #tpu.pipeline_mode<synchronous>, transform_indices = @transform_3, window_bounds = array<i64: 3, 192, 128>}, {pipeline_mode = #tpu.pipeline_mode<synchronous>, transform_indices = @transform_4, window_bounds = array<i64: 1, 128>}, {pipeline_mode = #tpu.pipeline_mode<synchronous>, transform_indices = @transform_5, window_bounds = array<i64: 3, 384, 128>}, {pipeline_mode = #tpu.pipeline_mode<synchronous>, transform_indices = @transform_6, window_bounds = array<i64: 1, 128>}, {transform_indices = @transform_7, window_bounds = array<i64: 1, 16, 16, 128>}]} {
    %c0 = arith.constant 0 : index
    %c0_0 = arith.constant 0 : index
    %c0_1 = arith.constant 0 : index
    %c0_2 = arith.constant 0 : index
    %0 = vector.load %arg1[%c0, %c0_0, %c0_1, %c0_2] : memref<1x16x16x4xf32, #tpu.memory_space<vmem>>, vector<1x16x16x4xf32>
    %1 = vector.shape_cast %0 : vector<1x16x16x4xf32> to vector<16x16x4xf32>
    %cst = arith.constant 0.000000e+00 : f32
    %2 = vector.broadcast %cst : f32 to vector<1x16x12xf32>
    %cst_3 = arith.constant 0.000000e+00 : f32
    %3 = vector.broadcast %cst_3 : f32 to vector<18x1x12xf32>
    %c0_4 = arith.constant 0 : index
    %c8 = arith.constant 8 : index
    %c0_5 = arith.constant 0 : index
    %4 = vector.load %arg9[%c0_4, %c8, %c0_5] : memref<18x25x12xf32, #tpu.memory_space<vmem>>, vector<1x16x12xf32>
    tpu.vector_store %arg9[%c0_4, %c8, %c0_5], %2 {strides = array<i32>} : memref<18x25x12xf32, #tpu.memory_space<vmem>>, vector<1x16x12xf32>,
    %c17 = arith.constant 17 : index
    %c8_6 = arith.constant 8 : index
    %c0_7 = arith.constant 0 : index
    %5 = vector.load %arg9[%c17, %c8_6, %c0_7] : memref<18x25x12xf32, #tpu.memory_space<vmem>>, vector<1x16x12xf32>
    tpu.vector_store %arg9[%c17, %c8_6, %c0_7], %2 {strides = array<i32>} : memref<18x25x12xf32, #tpu.memory_space<vmem>>, vector<1x16x12xf32>,
    %c0_8 = arith.constant 0 : index
    %c8_9 = arith.constant 8 : index
    %c0_10 = arith.constant 0 : index
    %6 = vector.load %arg9[%c0_8, %c8_9, %c0_10] : memref<18x25x12xf32, #tpu.memory_space<vmem>>, vector<18x1x12xf32>
    tpu.vector_store %arg9[%c0_8, %c8_9, %c0_10], %3 {strides = array<i32>} : memref<18x25x12xf32, #tpu.memory_space<vmem>>, vector<18x1x12xf32>,
    %c0_11 = arith.constant 0 : index
    %c23 = arith.constant 23 : index
    %c0_12 = arith.constant 0 : index
    %7 = vector.load %arg9[%c0_11, %c23, %c0_12] : memref<18x25x12xf32, #tpu.memory_space<vmem>>, vector<18x1x12xf32>
    tpu.vector_store %arg9[%c0_11, %c23, %c0_12], %3 {strides = array<i32>} : memref<18x25x12xf32, #tpu.memory_space<vmem>>, vector<18x1x12xf32>,
    %c1 = arith.constant 1 : index
    %c9 = arith.constant 9 : index
    %c0_13 = arith.constant 0 : index
    %8 = vector.load %arg9[%c1, %c9, %c0_13] : memref<18x25x12xf32, #tpu.memory_space<vmem>>, vector<16x16x4xf32>
    tpu.vector_store %arg9[%c1, %c9, %c0_13], %1 {strides = array<i32>} : memref<18x25x12xf32, #tpu.memory_space<vmem>>, vector<16x16x4xf32>,
    %c1_14 = arith.constant 1 : index
    %c8_15 = arith.constant 8 : index
    %c4 = arith.constant 4 : index
    %9 = vector.load %arg9[%c1_14, %c8_15, %c4] : memref<18x25x12xf32, #tpu.memory_space<vmem>>, vector<16x16x4xf32>
    tpu.vector_store %arg9[%c1_14, %c8_15, %c4], %1 {strides = array<i32>} : memref<18x25x12xf32, #tpu.memory_space<vmem>>, vector<16x16x4xf32>,
    %c1_16 = arith.constant 1 : index
    %c7 = arith.constant 7 : index
    %c8_17 = arith.constant 8 : index
    %10 = vector.load %arg9[%c1_16, %c7, %c8_17] : memref<18x25x12xf32, #tpu.memory_space<vmem>>, vector<16x16x4xf32>
    tpu.vector_store %arg9[%c1_16, %c7, %c8_17], %1 {strides = array<i32>} : memref<18x25x12xf32, #tpu.memory_space<vmem>>, vector<16x16x4xf32>,
    %c0_18 = arith.constant 0 : index
    %c8_19 = arith.constant 8 : index
    %c0_20 = arith.constant 0 : index
    %11 = vector.load %arg9[%c0_18, %c8_19, %c0_20] : memref<18x25x12xf32, #tpu.memory_space<vmem>>, vector<16x16x12xf32>
    %12 = vector.shape_cast %11 : vector<16x16x12xf32> to vector<256x12xf32>
    %13 = arith.truncf %12 : vector<256x12xf32> to vector<256x12xbf16>
    %c0_21 = arith.constant 0 : index
    %c0_22 = arith.constant 0 : index
    %c0_23 = arith.constant 0 : index
    %14 = vector.load %arg2[%c0_21, %c0_22, %c0_23] : memref<3x12x64xbf16, #tpu.memory_space<vmem>>, vector<1x12x64xbf16>
    %15 = vector.shape_cast %14 : vector<1x12x64xbf16> to vector<12x64xbf16>
    %cst_24 = arith.constant dense<0.000000e+00> : vector<256x64xf32>
    %16 = tpu.matmul %13, %15, %cst_24 {dimension_numbers = #tpu.dot_dimension_numbers<[1], [0], [0], [1], [0, 0, 1, 1], [], []>} : vector<256x12xbf16>, vector<12x64xbf16>, vector<256x64xf32> -> vector<256x64xf32>
    %c1_25 = arith.constant 1 : index
    %c8_26 = arith.constant 8 : index
    %c0_27 = arith.constant 0 : index
    %17 = vector.load %arg9[%c1_25, %c8_26, %c0_27] : memref<18x25x12xf32, #tpu.memory_space<vmem>>, vector<16x16x12xf32>
    %18 = vector.shape_cast %17 : vector<16x16x12xf32> to vector<256x12xf32>
    %19 = arith.truncf %18 : vector<256x12xf32> to vector<256x12xbf16>
    %c1_28 = arith.constant 1 : index
    %c0_29 = arith.constant 0 : index
    %c0_30 = arith.constant 0 : index
    %20 = vector.load %arg2[%c1_28, %c0_29, %c0_30] : memref<3x12x64xbf16, #tpu.memory_space<vmem>>, vector<1x12x64xbf16>
    %21 = vector.shape_cast %20 : vector<1x12x64xbf16> to vector<12x64xbf16>
    %cst_31 = arith.constant dense<0.000000e+00> : vector<256x64xf32>
    %22 = tpu.matmul %19, %21, %cst_31 {dimension_numbers = #tpu.dot_dimension_numbers<[1], [0], [0], [1], [0, 0, 1, 1], [], []>} : vector<256x12xbf16>, vector<12x64xbf16>, vector<256x64xf32> -> vector<256x64xf32>
    %23 = arith.addf %16, %22 : vector<256x64xf32>
    %c2 = arith.constant 2 : index
    %c8_32 = arith.constant 8 : index
    %c0_33 = arith.constant 0 : index
    %24 = vector.load %arg9[%c2, %c8_32, %c0_33] : memref<18x25x12xf32, #tpu.memory_space<vmem>>, vector<16x16x12xf32>
    %25 = vector.shape_cast %24 : vector<16x16x12xf32> to vector<256x12xf32>
    %26 = arith.truncf %25 : vector<256x12xf32> to vector<256x12xbf16>
    %c2_34 = arith.constant 2 : index
    %c0_35 = arith.constant 0 : index
    %c0_36 = arith.constant 0 : index
    %27 = vector.load %arg2[%c2_34, %c0_35, %c0_36] : memref<3x12x64xbf16, #tpu.memory_space<vmem>>, vector<1x12x64xbf16>
    %28 = vector.shape_cast %27 : vector<1x12x64xbf16> to vector<12x64xbf16>
    %cst_37 = arith.constant dense<0.000000e+00> : vector<256x64xf32>
    %29 = tpu.matmul %26, %28, %cst_37 {dimension_numbers = #tpu.dot_dimension_numbers<[1], [0], [0], [1], [0, 0, 1, 1], [], []>} : vector<256x12xbf16>, vector<12x64xbf16>, vector<256x64xf32> -> vector<256x64xf32>
    %30 = arith.addf %23, %29 : vector<256x64xf32>
    %c0_38 = arith.constant 0 : index
    %c0_39 = arith.constant 0 : index
    %31 = vector.load %arg3[%c0_38, %c0_39] : memref<1x64xf32, #tpu.memory_space<vmem>>, vector<1x64xf32>
    %32 = vector.broadcast %31 : vector<1x64xf32> to vector<256x64xf32>
    %33 = arith.addf %30, %32 : vector<256x64xf32>
    %34 = vector.shape_cast %33 : vector<256x64xf32> to vector<16x16x64xf32>
    %cst_40 = arith.constant 0.000000e+00 : f32
    %35 = vector.broadcast %cst_40 : f32 to vector<1x16x192xf32>
    %cst_41 = arith.constant 0.000000e+00 : f32
    %36 = vector.broadcast %cst_41 : f32 to vector<18x1x192xf32>
    %c0_42 = arith.constant 0 : index
    %c8_43 = arith.constant 8 : index
    %c0_44 = arith.constant 0 : index
    %37 = vector.load %arg10[%c0_42, %c8_43, %c0_44] : memref<18x25x192xf32, #tpu.memory_space<vmem>>, vector<1x16x192xf32>
    tpu.vector_store %arg10[%c0_42, %c8_43, %c0_44], %35 {strides = array<i32>} : memref<18x25x192xf32, #tpu.memory_space<vmem>>, vector<1x16x192xf32>,
    %c17_45 = arith.constant 17 : index
    %c8_46 = arith.constant 8 : index
    %c0_47 = arith.constant 0 : index
    %38 = vector.load %arg10[%c17_45, %c8_46, %c0_47] : memref<18x25x192xf32, #tpu.memory_space<vmem>>, vector<1x16x192xf32>
    tpu.vector_store %arg10[%c17_45, %c8_46, %c0_47], %35 {strides = array<i32>} : memref<18x25x192xf32, #tpu.memory_space<vmem>>, vector<1x16x192xf32>,
    %c0_48 = arith.constant 0 : index
    %c8_49 = arith.constant 8 : index
    %c0_50 = arith.constant 0 : index
    %39 = vector.load %arg10[%c0_48, %c8_49, %c0_50] : memref<18x25x192xf32, #tpu.memory_space<vmem>>, vector<18x1x192xf32>
    tpu.vector_store %arg10[%c0_48, %c8_49, %c0_50], %36 {strides = array<i32>} : memref<18x25x192xf32, #tpu.memory_space<vmem>>, vector<18x1x192xf32>,
    %c0_51 = arith.constant 0 : index
    %c23_52 = arith.constant 23 : index
    %c0_53 = arith.constant 0 : index
    %40 = vector.load %arg10[%c0_51, %c23_52, %c0_53] : memref<18x25x192xf32, #tpu.memory_space<vmem>>, vector<18x1x192xf32>
    tpu.vector_store %arg10[%c0_51, %c23_52, %c0_53], %36 {strides = array<i32>} : memref<18x25x192xf32, #tpu.memory_space<vmem>>, vector<18x1x192xf32>,
    %c1_54 = arith.constant 1 : index
    %c9_55 = arith.constant 9 : index
    %c0_56 = arith.constant 0 : index
    %41 = vector.load %arg10[%c1_54, %c9_55, %c0_56] : memref<18x25x192xf32, #tpu.memory_space<vmem>>, vector<16x16x64xf32>
    tpu.vector_store %arg10[%c1_54, %c9_55, %c0_56], %34 {strides = array<i32>} : memref<18x25x192xf32, #tpu.memory_space<vmem>>, vector<16x16x64xf32>,
    %c1_57 = arith.constant 1 : index
    %c8_58 = arith.constant 8 : index
    %c64 = arith.constant 64 : index
    %42 = vector.load %arg10[%c1_57, %c8_58, %c64] : memref<18x25x192xf32, #tpu.memory_space<vmem>>, vector<16x16x64xf32>
    tpu.vector_store %arg10[%c1_57, %c8_58, %c64], %34 {strides = array<i32>} : memref<18x25x192xf32, #tpu.memory_space<vmem>>, vector<16x16x64xf32>,
    %c1_59 = arith.constant 1 : index
    %c7_60 = arith.constant 7 : index
    %c128 = arith.constant 128 : index
    %43 = vector.load %arg10[%c1_59, %c7_60, %c128] : memref<18x25x192xf32, #tpu.memory_space<vmem>>, vector<16x16x64xf32>
    tpu.vector_store %arg10[%c1_59, %c7_60, %c128], %34 {strides = array<i32>} : memref<18x25x192xf32, #tpu.memory_space<vmem>>, vector<16x16x64xf32>,
    %c0_61 = arith.constant 0 : index
    %c8_62 = arith.constant 8 : index
    %c0_63 = arith.constant 0 : index
    %44 = vector.load %arg10[%c0_61, %c8_62, %c0_63] : memref<18x25x192xf32, #tpu.memory_space<vmem>>, vector<16x16x192xf32>
    %45 = vector.shape_cast %44 : vector<16x16x192xf32> to vector<256x192xf32>
    %46 = arith.truncf %45 : vector<256x192xf32> to vector<256x192xbf16>
    %c0_64 = arith.constant 0 : index
    %c0_65 = arith.constant 0 : index
    %c0_66 = arith.constant 0 : index
    %47 = vector.load %arg4[%c0_64, %c0_65, %c0_66] : memref<3x192x128xbf16, #tpu.memory_space<vmem>>, vector<1x192x128xbf16>
    %48 = vector.shape_cast %47 : vector<1x192x128xbf16> to vector<192x128xbf16>
    %cst_67 = arith.constant dense<0.000000e+00> : vector<256x128xf32>
    %49 = tpu.matmul %46, %48, %cst_67 {dimension_numbers = #tpu.dot_dimension_numbers<[1], [0], [0], [1], [0, 0, 1, 1], [], []>} : vector<256x192xbf16>, vector<192x128xbf16>, vector<256x128xf32> -> vector<256x128xf32>
    %c1_68 = arith.constant 1 : index
    %c8_69 = arith.constant 8 : index
    %c0_70 = arith.constant 0 : index
    %50 = vector.load %arg10[%c1_68, %c8_69, %c0_70] : memref<18x25x192xf32, #tpu.memory_space<vmem>>, vector<16x16x192xf32>
    %51 = vector.shape_cast %50 : vector<16x16x192xf32> to vector<256x192xf32>
    %52 = arith.truncf %51 : vector<256x192xf32> to vector<256x192xbf16>
    %c1_71 = arith.constant 1 : index
    %c0_72 = arith.constant 0 : index
    %c0_73 = arith.constant 0 : index
    %53 = vector.load %arg4[%c1_71, %c0_72, %c0_73] : memref<3x192x128xbf16, #tpu.memory_space<vmem>>, vector<1x192x128xbf16>
    %54 = vector.shape_cast %53 : vector<1x192x128xbf16> to vector<192x128xbf16>
    %cst_74 = arith.constant dense<0.000000e+00> : vector<256x128xf32>
    %55 = tpu.matmul %52, %54, %cst_74 {dimension_numbers = #tpu.dot_dimension_numbers<[1], [0], [0], [1], [0, 0, 1, 1], [], []>} : vector<256x192xbf16>, vector<192x128xbf16>, vector<256x128xf32> -> vector<256x128xf32>
    %56 = arith.addf %49, %55 : vector<256x128xf32>
    %c2_75 = arith.constant 2 : index
    %c8_76 = arith.constant 8 : index
    %c0_77 = arith.constant 0 : index
    %57 = vector.load %arg10[%c2_75, %c8_76, %c0_77] : memref<18x25x192xf32, #tpu.memory_space<vmem>>, vector<16x16x192xf32>
    %58 = vector.shape_cast %57 : vector<16x16x192xf32> to vector<256x192xf32>
    %59 = arith.truncf %58 : vector<256x192xf32> to vector<256x192xbf16>
    %c2_78 = arith.constant 2 : index
    %c0_79 = arith.constant 0 : index
    %c0_80 = arith.constant 0 : index
    %60 = vector.load %arg4[%c2_78, %c0_79, %c0_80] : memref<3x192x128xbf16, #tpu.memory_space<vmem>>, vector<1x192x128xbf16>
    %61 = vector.shape_cast %60 : vector<1x192x128xbf16> to vector<192x128xbf16>
    %cst_81 = arith.constant dense<0.000000e+00> : vector<256x128xf32>
    %62 = tpu.matmul %59, %61, %cst_81 {dimension_numbers = #tpu.dot_dimension_numbers<[1], [0], [0], [1], [0, 0, 1, 1], [], []>} : vector<256x192xbf16>, vector<192x128xbf16>, vector<256x128xf32> -> vector<256x128xf32>
    %63 = arith.addf %56, %62 : vector<256x128xf32>
    %c0_82 = arith.constant 0 : index
    %c0_83 = arith.constant 0 : index
    %64 = vector.load %arg5[%c0_82, %c0_83] : memref<1x128xf32, #tpu.memory_space<vmem>>, vector<1x128xf32>
    %65 = vector.broadcast %64 : vector<1x128xf32> to vector<256x128xf32>
    %66 = arith.addf %63, %65 : vector<256x128xf32>
    %67 = vector.shape_cast %66 : vector<256x128xf32> to vector<16x16x128xf32>
    %cst_84 = arith.constant 0.000000e+00 : f32
    %68 = vector.broadcast %cst_84 : f32 to vector<1x16x384xf32>
    %cst_85 = arith.constant 0.000000e+00 : f32
    %69 = vector.broadcast %cst_85 : f32 to vector<18x1x384xf32>
    %c0_86 = arith.constant 0 : index
    %c8_87 = arith.constant 8 : index
    %c0_88 = arith.constant 0 : index
    %70 = vector.load %arg11[%c0_86, %c8_87, %c0_88] : memref<18x25x384xf32, #tpu.memory_space<vmem>>, vector<1x16x384xf32>
    tpu.vector_store %arg11[%c0_86, %c8_87, %c0_88], %68 {strides = array<i32>} : memref<18x25x384xf32, #tpu.memory_space<vmem>>, vector<1x16x384xf32>,
    %c17_89 = arith.constant 17 : index
    %c8_90 = arith.constant 8 : index
    %c0_91 = arith.constant 0 : index
    %71 = vector.load %arg11[%c17_89, %c8_90, %c0_91] : memref<18x25x384xf32, #tpu.memory_space<vmem>>, vector<1x16x384xf32>
    tpu.vector_store %arg11[%c17_89, %c8_90, %c0_91], %68 {strides = array<i32>} : memref<18x25x384xf32, #tpu.memory_space<vmem>>, vector<1x16x384xf32>,
    %c0_92 = arith.constant 0 : index
    %c8_93 = arith.constant 8 : index
    %c0_94 = arith.constant 0 : index
    %72 = vector.load %arg11[%c0_92, %c8_93, %c0_94] : memref<18x25x384xf32, #tpu.memory_space<vmem>>, vector<18x1x384xf32>
    tpu.vector_store %arg11[%c0_92, %c8_93, %c0_94], %69 {strides = array<i32>} : memref<18x25x384xf32, #tpu.memory_space<vmem>>, vector<18x1x384xf32>,
    %c0_95 = arith.constant 0 : index
    %c23_96 = arith.constant 23 : index
    %c0_97 = arith.constant 0 : index
    %73 = vector.load %arg11[%c0_95, %c23_96, %c0_97] : memref<18x25x384xf32, #tpu.memory_space<vmem>>, vector<18x1x384xf32>
    tpu.vector_store %arg11[%c0_95, %c23_96, %c0_97], %69 {strides = array<i32>} : memref<18x25x384xf32, #tpu.memory_space<vmem>>, vector<18x1x384xf32>,
    %c1_98 = arith.constant 1 : index
    %c9_99 = arith.constant 9 : index
    %c0_100 = arith.constant 0 : index
    %74 = vector.load %arg11[%c1_98, %c9_99, %c0_100] : memref<18x25x384xf32, #tpu.memory_space<vmem>>, vector<16x16x128xf32>
    tpu.vector_store %arg11[%c1_98, %c9_99, %c0_100], %67 {strides = array<i32>} : memref<18x25x384xf32, #tpu.memory_space<vmem>>, vector<16x16x128xf32>,
    %c1_101 = arith.constant 1 : index
    %c8_102 = arith.constant 8 : index
    %c128_103 = arith.constant 128 : index
    %75 = vector.load %arg11[%c1_101, %c8_102, %c128_103] : memref<18x25x384xf32, #tpu.memory_space<vmem>>, vector<16x16x128xf32>
    tpu.vector_store %arg11[%c1_101, %c8_102, %c128_103], %67 {strides = array<i32>} : memref<18x25x384xf32, #tpu.memory_space<vmem>>, vector<16x16x128xf32>,
    %c1_104 = arith.constant 1 : index
    %c7_105 = arith.constant 7 : index
    %c256 = arith.constant 256 : index
    %76 = vector.load %arg11[%c1_104, %c7_105, %c256] : memref<18x25x384xf32, #tpu.memory_space<vmem>>, vector<16x16x128xf32>
    tpu.vector_store %arg11[%c1_104, %c7_105, %c256], %67 {strides = array<i32>} : memref<18x25x384xf32, #tpu.memory_space<vmem>>, vector<16x16x128xf32>,
    %c0_106 = arith.constant 0 : index
    %c8_107 = arith.constant 8 : index
    %c0_108 = arith.constant 0 : index
    %77 = vector.load %arg11[%c0_106, %c8_107, %c0_108] : memref<18x25x384xf32, #tpu.memory_space<vmem>>, vector<16x16x384xf32>
    %78 = vector.shape_cast %77 : vector<16x16x384xf32> to vector<256x384xf32>
    %79 = arith.truncf %78 : vector<256x384xf32> to vector<256x384xbf16>
    %c0_109 = arith.constant 0 : index
    %c0_110 = arith.constant 0 : index
    %c0_111 = arith.constant 0 : index
    %80 = vector.load %arg6[%c0_109, %c0_110, %c0_111] : memref<3x384x128xbf16, #tpu.memory_space<vmem>>, vector<1x384x128xbf16>
    %81 = vector.shape_cast %80 : vector<1x384x128xbf16> to vector<384x128xbf16>
    %cst_112 = arith.constant dense<0.000000e+00> : vector<256x128xf32>
    %82 = tpu.matmul %79, %81, %cst_112 {dimension_numbers = #tpu.dot_dimension_numbers<[1], [0], [0], [1], [0, 0, 1, 1], [], []>} : vector<256x384xbf16>, vector<384x128xbf16>, vector<256x128xf32> -> vector<256x128xf32>
    %c1_113 = arith.constant 1 : index
    %c8_114 = arith.constant 8 : index
    %c0_115 = arith.constant 0 : index
    %83 = vector.load %arg11[%c1_113, %c8_114, %c0_115] : memref<18x25x384xf32, #tpu.memory_space<vmem>>, vector<16x16x384xf32>
    %84 = vector.shape_cast %83 : vector<16x16x384xf32> to vector<256x384xf32>
    %85 = arith.truncf %84 : vector<256x384xf32> to vector<256x384xbf16>
    %c1_116 = arith.constant 1 : index
    %c0_117 = arith.constant 0 : index
    %c0_118 = arith.constant 0 : index
    %86 = vector.load %arg6[%c1_116, %c0_117, %c0_118] : memref<3x384x128xbf16, #tpu.memory_space<vmem>>, vector<1x384x128xbf16>
    %87 = vector.shape_cast %86 : vector<1x384x128xbf16> to vector<384x128xbf16>
    %cst_119 = arith.constant dense<0.000000e+00> : vector<256x128xf32>
    %88 = tpu.matmul %85, %87, %cst_119 {dimension_numbers = #tpu.dot_dimension_numbers<[1], [0], [0], [1], [0, 0, 1, 1], [], []>} : vector<256x384xbf16>, vector<384x128xbf16>, vector<256x128xf32> -> vector<256x128xf32>
    %89 = arith.addf %82, %88 : vector<256x128xf32>
    %c2_120 = arith.constant 2 : index
    %c8_121 = arith.constant 8 : index
    %c0_122 = arith.constant 0 : index
    %90 = vector.load %arg11[%c2_120, %c8_121, %c0_122] : memref<18x25x384xf32, #tpu.memory_space<vmem>>, vector<16x16x384xf32>
    %91 = vector.shape_cast %90 : vector<16x16x384xf32> to vector<256x384xf32>
    %92 = arith.truncf %91 : vector<256x384xf32> to vector<256x384xbf16>
    %c2_123 = arith.constant 2 : index
    %c0_124 = arith.constant 0 : index
    %c0_125 = arith.constant 0 : index
    %93 = vector.load %arg6[%c2_123, %c0_124, %c0_125] : memref<3x384x128xbf16, #tpu.memory_space<vmem>>, vector<1x384x128xbf16>
    %94 = vector.shape_cast %93 : vector<1x384x128xbf16> to vector<384x128xbf16>
    %cst_126 = arith.constant dense<0.000000e+00> : vector<256x128xf32>
    %95 = tpu.matmul %92, %94, %cst_126 {dimension_numbers = #tpu.dot_dimension_numbers<[1], [0], [0], [1], [0, 0, 1, 1], [], []>} : vector<256x384xbf16>, vector<384x128xbf16>, vector<256x128xf32> -> vector<256x128xf32>
    %96 = arith.addf %89, %95 : vector<256x128xf32>
    %c0_127 = arith.constant 0 : index
    %c0_128 = arith.constant 0 : index
    %97 = vector.load %arg7[%c0_127, %c0_128] : memref<1x128xf32, #tpu.memory_space<vmem>>, vector<1x128xf32>
    %98 = vector.broadcast %97 : vector<1x128xf32> to vector<256x128xf32>
    %99 = arith.addf %96, %98 : vector<256x128xf32>
    %100 = vector.shape_cast %99 : vector<256x128xf32> to vector<16x16x128xf32>
    %c0_129 = arith.constant 0 : index
    %c0_130 = arith.constant 0 : index
    %c0_131 = arith.constant 0 : index
    %c0_132 = arith.constant 0 : index
    %101 = vector.load %arg8[%c0_129, %c0_130, %c0_131, %c0_132] : memref<1x16x16x128xf32, #tpu.memory_space<vmem>>, vector<1x16x16x128xf32>
    %102 = vector.shape_cast %101 : vector<1x16x16x128xf32> to vector<16x16x128xf32>
    %103 = vector.shape_cast %100 : vector<16x16x128xf32> to vector<1x16x16x128xf32>
    tpu.vector_store %arg8[%c0_129, %c0_130, %c0_131, %c0_132], %103 {strides = array<i32>} : memref<1x16x16x128xf32, #tpu.memory_space<vmem>>, vector<1x16x16x128xf32>,
    return
  }
  func.func @transform_0(%arg0: i32) -> (i32, i32, i32, i32) {
    %c0_i32 = arith.constant 0 : i32
    %c0_i32_0 = arith.constant 0 : i32
    %c0_i32_1 = arith.constant 0 : i32
    %c0_i32_2 = arith.constant 0 : i32
    return %arg0, %c0_i32, %c0_i32_0, %c0_i32_1 : i32, i32, i32, i32
  }
  func.func @transform_1(%arg0: i32) -> (i32, i32, i32) {
    %c0_i32 = arith.constant 0 : i32
    %c0_i32_0 = arith.constant 0 : i32
    %c0_i32_1 = arith.constant 0 : i32
    %c0_i32_2 = arith.constant 0 : i32
    return %c0_i32, %c0_i32_0, %c0_i32_1 : i32, i32, i32
  }
  func.func @transform_2(%arg0: i32) -> (i32, i32) {
    %c0_i32 = arith.constant 0 : i32
    %c0_i32_0 = arith.constant 0 : i32
    %c0_i32_1 = arith.constant 0 : i32
    return %c0_i32, %c0_i32_0 : i32, i32
  }
  func.func @transform_3(%arg0: i32) -> (i32, i32, i32) {
    %c0_i32 = arith.constant 0 : i32
    %c0_i32_0 = arith.constant 0 : i32
    %c0_i32_1 = arith.constant 0 : i32
    %c0_i32_2 = arith.constant 0 : i32
    return %c0_i32, %c0_i32_0, %c0_i32_1 : i32, i32, i32
  }
  func.func @transform_4(%arg0: i32) -> (i32, i32) {
    %c0_i32 = arith.constant 0 : i32
    %c0_i32_0 = arith.constant 0 : i32
    %c0_i32_1 = arith.constant 0 : i32
    return %c0_i32, %c0_i32_0 : i32, i32
  }
  func.func @transform_5(%arg0: i32) -> (i32, i32, i32) {
    %c0_i32 = arith.constant 0 : i32
    %c0_i32_0 = arith.constant 0 : i32
    %c0_i32_1 = arith.constant 0 : i32
    %c0_i32_2 = arith.constant 0 : i32
    return %c0_i32, %c0_i32_0, %c0_i32_1 : i32, i32, i32
  }
  func.func @transform_6(%arg0: i32) -> (i32, i32) {
    %c0_i32 = arith.constant 0 : i32
    %c0_i32_0 = arith.constant 0 : i32
    %c0_i32_1 = arith.constant 0 : i32
    return %c0_i32, %c0_i32_0 : i32, i32
  }
  func.func @transform_7(%arg0: i32) -> (i32, i32, i32, i32) {
    %c0_i32 = arith.constant 0 : i32
    %c0_i32_0 = arith.constant 0 : i32
    %c0_i32_1 = arith.constant 0 : i32
    %c0_i32_2 = arith.constant 0 : i32
    return %arg0, %c0_i32, %c0_i32_0, %c0_i32_1 : i32, i32, i32, i32
  }
}

</mosaic_0001>

<llo_original>
// kernel: model_forward.1
$region0: #{model_forward.1}
  #allocation0 [shape = 'u32[]', space=smem, size = 0x4, offset = 0x4, fixed_abs, tag = 'smem constant byte address 0x4 - core index']
  #allocation1 [shape = 'u32[144,128]{1,0:T(1,128)}', space=vmem, size = 0x12000, scoped, tag = 'internal scratch']
  #allocation2 [shape = 'f32[18,25,12]{2,1,0:T(8,128)}', space=vmem, size = 0x48000, scoped, tag = 'scratch operand']
  #allocation3 [shape = 'f32[18,25,192]{2,1,0:T(8,128)}', space=vmem, size = 0x90000, scoped, tag = 'scratch operand']
  #allocation4 [shape = 'f32[18,25,384]{2,1,0:T(8,128)}', space=vmem, size = 0xd8000, scoped, tag = 'scratch operand']
  %s0 = inlined_call_operand.vmem [shape: f32[2,16,16,4], index: 0, kind: input, shape index: {}]
  %s1 = inlined_call_operand.vmem [shape: bf16[3,12,64], index: 1, kind: input, shape index: {}]
  %s2 = inlined_call_operand.vmem [shape: f32[1,64], index: 2, kind: input, shape index: {}]
  %s3 = inlined_call_operand.vmem [shape: bf16[3,192,128], index: 3, kind: input, shape index: {}]
  %s4 = inlined_call_operand.vmem [shape: f32[1,128], index: 4, kind: input, shape index: {}]
  %s5 = inlined_call_operand.vmem [shape: bf16[3,384,128], index: 5, kind: input, shape index: {}]
  %s6 = inlined_call_operand.vmem [shape: f32[1,128], index: 6, kind: input, shape index: {}]
  %s7 = inlined_call_operand.vmem [shape: f32[2,16,16,128], index: 7, kind: output, shape index: {}]
  %s8 = sld [smem:[#allocation0]]
  $region61: #{model_forward.1} parent=0
    _
  %s10 = ssub.s32 1, %s8
  %s11 = scalar_select 0, %s10, %s8
  loop: start=0, step=1, limit=4
  $region2: #{model_forward.1} parent=0 // loop_pre_header
    _
  $region3: #{model_forward.1} parent=0 // loop_header
    %s13 = sphi 0, %s17
    %p14 = scmp.ge.s32.totalorder %s13, 4
    %s23 = sphi 0, %s25
    %s26 = sphi 0, %s23
    %s27 = sphi 0, %s26
    %s43 = sphi 0, %s27
    %s47 = sphi 0, %s47
    %s49 = sphi 0, %s47
    %s50 = sphi 0, %s49
    %s64 = sphi 0, %s50
    %s68 = sphi 0, %s68
    %s70 = sphi 0, %s68
    %s71 = sphi 0, %s70
    %s85 = sphi 0, %s71
    %s89 = sphi 0, %s89
    %s91 = sphi 0, %s89
    %s92 = sphi 0, %s91
    %s106 = sphi 0, %s92
    %s110 = sphi 0, %s110
    %s112 = sphi 0, %s110
    %s113 = sphi 0, %s112
    %s127 = sphi 0, %s113
    %s131 = sphi 0, %s131
    %s133 = sphi 0, %s131
    %s134 = sphi 0, %s133
    %s148 = sphi 0, %s134
    %s152 = sphi 0, %s152
    %s154 = sphi 0, %s152
    %s155 = sphi 0, %s154
    %s169 = sphi 0, %s155
    %s175 = sphi 0, %s177
    %s178 = sphi 0, %s175
    %s179 = sphi 0, %s178
    %s195 = sphi 0, %s179
  $region4: #{model_forward.1} parent=0 // loop_header_branch
    %16 = sbr.rel (%p14) target = $region8
  $region5: #{model_forward.1} parent=0 // loop_body
    %s18 = ssub.s32 %s13, 1
    %s19 = ssub.s32 %s13, 2
    %s20 = sadd.s32 %s13, 1
    %s21 = ssub.s32 %s13, %s20
    %p22 = scmp.eq.s32.totalorder %s21, 0
    %s24 = sadd.s32 %s23, 1
    %s25 = scalar_select %p22, %s23, %s24
    %p28 = pneg %p22
    %p29 = scmp.eq.s32.totalorder %s13, 1
    %p30 = por %p28, %p29
    %p31 = scmp.ne.s32.totalorder %s23, %s26
    %p32 = scmp.eq.s32.totalorder %s13, 0
    %p33 = por %p31, %p32
    %p34 = scmp.ne.s32.totalorder %s23, %s26
    %p35 = scmp.eq.s32.totalorder %s18, 1
    %p36 = por %p34, %p35
    %p37 = scmp.ne.s32.totalorder %s26, %s27
    %p38 = scmp.eq.s32.totalorder %s18, 0
    %p39 = por %p37, %p38
    %p40 = scmp.ne.s32.totalorder %s26, %s27
    %p41 = scmp.eq.s32.totalorder %s19, 1
    %p42 = por %p40, %p41
    %p44 = scmp.ne.s32.totalorder %s27, %s43
    %p45 = scmp.eq.s32.totalorder %s19, 0
    %p46 = por %p44, %p45
    %s48 = sadd.s32 %s47, 1
    %p51 = scmp.eq.s32.totalorder %s13, 1
    %p52 = scmp.ne.s32.totalorder %s47, %s49
    %p53 = scmp.eq.s32.totalorder %s13, 0
    %p54 = por %p52, %p53
    %p55 = scmp.ne.s32.totalorder %s47, %s49
    %p56 = scmp.eq.s32.totalorder %s18, 1
    %p57 = por %p55, %p56
    %p58 = scmp.ne.s32.totalorder %s49, %s50
    %p59 = scmp.eq.s32.totalorder %s18, 0
    %p60 = por %p58, %p59
    %p61 = scmp.ne.s32.totalorder %s49, %s50
    %p62 = scmp.eq.s32.totalorder %s19, 1
    %p63 = por %p61, %p62
    %p65 = scmp.ne.s32.totalorder %s50, %s64
    %p66 = scmp.eq.s32.totalorder %s19, 0
    %p67 = por %p65, %p66
    %s69 = sadd.s32 %s68, 1
    %p72 = scmp.eq.s32.totalorder %s13, 1
    %p73 = scmp.ne.s32.totalorder %s68, %s70
    %p74 = scmp.eq.s32.totalorder %s13, 0
    %p75 = por %p73, %p74
    %p76 = scmp.ne.s32.totalorder %s68, %s70
    %p77 = scmp.eq.s32.totalorder %s18, 1
    %p78 = por %p76, %p77
    %p79 = scmp.ne.s32.totalorder %s70, %s71
    %p80 = scmp.eq.s32.totalorder %s18, 0
    %p81 = por %p79, %p80
    %p82 = scmp.ne.s32.totalorder %s70, %s71
    %p83 = scmp.eq.s32.totalorder %s19, 1
    %p84 = por %p82, %p83
    %p86 = scmp.ne.s32.totalorder %s71, %s85
    %p87 = scmp.eq.s32.totalorder %s19, 0
    %p88 = por %p86, %p87
    %s90 = sadd.s32 %s89, 1
    %p93 = scmp.eq.s32.totalorder %s13, 1
    %p94 = scmp.ne.s32.totalorder %s89, %s91
    %p95 = scmp.eq.s32.totalorder %s13, 0
    %p96 = por %p94, %p95
    %p97 = scmp.ne.s32.totalorder %s89, %s91
    %p98 = scmp.eq.s32.totalorder %s18, 1
    %p99 = por %p97, %p98
    %p100 = scmp.ne.s32.totalorder %s91, %s92
    %p101 = scmp.eq.s32.totalorder %s18, 0
    %p102 = por %p100, %p101
    %p103 = scmp.ne.s32.totalorder %s91, %s92
    %p104 = scmp.eq.s32.totalorder %s19, 1
    %p105 = por %p103, %p104
    %p107 = scmp.ne.s32.totalorder %s92, %s106
    %p108 = scmp.eq.s32.totalorder %s19, 0
    %p109 = por %p107, %p108
    %s111 = sadd.s32 %s110, 1
    %p114 = scmp.eq.s32.totalorder %s13, 1
    %p115 = scmp.ne.s32.totalorder %s110, %s112
    %p116 = scmp.eq.s32.totalorder %s13, 0
    %p117 = por %p115, %p116
    %p118 = scmp.ne.s32.totalorder %s110, %s112
    %p119 = scmp.eq.s32.totalorder %s18, 1
    %p120 = por %p118, %p119
    %p121 = scmp.ne.s32.totalorder %s112, %s113
    %p122 = scmp.eq.s32.totalorder %s18, 0
    %p123 = por %p121, %p122
    %p124 = scmp.ne.s32.totalorder %s112, %s113
    %p125 = scmp.eq.s32.totalorder %s19, 1
    %p126 = por %p124, %p125
    %p128 = scmp.ne.s32.totalorder %s113, %s127
    %p129 = scmp.eq.s32.totalorder %s19, 0
    %p130 = por %p128, %p129
    %s132 = sadd.s32 %s131, 1
    %p135 = scmp.eq.s32.totalorder %s13, 1
    %p136 = scmp.ne.s32.totalorder %s131, %s133
    %p137 = scmp.eq.s32.totalorder %s13, 0
    %p138 = por %p136, %p137
    %p139 = scmp.ne.s32.totalorder %s131, %s133
    %p140 = scmp.eq.s32.totalorder %s18, 1
    %p141 = por %p139, %p140
    %p142 = scmp.ne.s32.totalorder %s133, %s134
    %p143 = scmp.eq.s32.totalorder %s18, 0
    %p144 = por %p142, %p143
    %p145 = scmp.ne.s32.totalorder %s133, %s134
    %p146 = scmp.eq.s32.totalorder %s19, 1
    %p147 = por %p145, %p146
    %p149 = scmp.ne.s32.totalorder %s134, %s148
    %p150 = scmp.eq.s32.totalorder %s19, 0
    %p151 = por %p149, %p150
    %s153 = sadd.s32 %s152, 1
    %p156 = scmp.eq.s32.totalorder %s13, 1
    %p157 = scmp.ne.s32.totalorder %s152, %s154
    %p158 = scmp.eq.s32.totalorder %s13, 0
    %p159 = por %p157, %p158
    %p160 = scmp.ne.s32.totalorder %s152, %s154
    %p161 = scmp.eq.s32.totalorder %s18, 1
    %p162 = por %p160, %p161
    %p163 = scmp.ne.s32.totalorder %s154, %s155
    %p164 = scmp.eq.s32.totalorder %s18, 0
    %p165 = por %p163, %p164
    %p166 = scmp.ne.s32.totalorder %s154, %s155
    %p167 = scmp.eq.s32.totalorder %s19, 1
    %p168 = por %p166, %p167
    %p170 = scmp.ne.s32.totalorder %s155, %s169
    %p171 = scmp.eq.s32.totalorder %s19, 0
    %p172 = por %p170, %p171
    %s173 = ssub.s32 %s13, %s20
    %p174 = scmp.eq.s32.totalorder %s173, 0
    %s176 = sadd.s32 %s175, 1
    %s177 = scalar_select %p174, %s175, %s176
    %p180 = pneg %p174
    %p181 = scmp.eq.s32.totalorder %s13, 1
    %p182 = por %p180, %p181
    %p183 = scmp.ne.s32.totalorder %s175, %s178
    %p184 = scmp.eq.s32.totalorder %s13, 0
    %p185 = por %p183, %p184
    %p186 = scmp.ne.s32.totalorder %s175, %s178
    %p187 = scmp.eq.s32.totalorder %s18, 1
    %p188 = por %p186, %p187
    %p189 = scmp.ne.s32.totalorder %s178, %s179
    %p190 = scmp.eq.s32.totalorder %s18, 0
    %p191 = por %p189, %p190
    %p192 = scmp.ne.s32.totalorder %s178, %s179
    %p193 = scmp.eq.s32.totalorder %s19, 1
    %p194 = por %p192, %p193
    %p196 = scmp.ne.s32.totalorder %s179, %s195
    %p197 = scmp.eq.s32.totalorder %s19, 0
    %p198 = por %p196, %p197
    %p199 = scmp.le.s32.totalorder 1, %s13
    %p200 = scmp.lt.s32.totalorder %s13, 3
    %p201 = pnand %p199, %p200
    %p202 = pneg %p201
    // Predicated region
    $region9: #{model_forward.1} parent=5 // pred_check
      _
    $region10: #{model_forward.1} parent=5 // pred_check_branch
      %204 = sbr.rel (%p201) target = $region12
    $region11: #{model_forward.1} parent=5 // pred_region
      %s205 = ssub.s32 %s13, 1
      // Predicated region
      $region13: #{model_forward.1} parent=11 // pred_check
        %p206 = pneg %p60
      $region14: #{model_forward.1} parent=11 // pred_check_branch
        %208 = sbr.rel (%p206) target = $region16
      $region15: #{model_forward.1} parent=11 // pred_region
        _
      $region16: #{model_forward.1} parent=11 // pred_fallthru
        _
      // Predicated region
      $region17: #{model_forward.1} parent=11 // pred_check
        %p209 = pneg %p81
      $region18: #{model_forward.1} parent=11 // pred_check_branch
        %211 = sbr.rel (%p209) target = $region20
      $region19: #{model_forward.1} parent=11 // pred_region
        _
      $region20: #{model_forward.1} parent=11 // pred_fallthru
        _
      // Predicated region
      $region21: #{model_forward.1} parent=11 // pred_check
        %p212 = pneg %p102
      $region22: #{model_forward.1} parent=11 // pred_check_branch
        %214 = sbr.rel (%p212) target = $region24
      $region23: #{model_forward.1} parent=11 // pred_region
        _
      $region24: #{model_forward.1} parent=11 // pred_fallthru
        _
      // Predicated region
      $region25: #{model_forward.1} parent=11 // pred_check
        %p215 = pneg %p123
      $region26: #{model_forward.1} parent=11 // pred_check_branch
        %217 = sbr.rel (%p215) target = $region28
      $region27: #{model_forward.1} parent=11 // pred_region
        _
      $region28: #{model_forward.1} parent=11 // pred_fallthru
        _
      // Predicated region
      $region29: #{model_forward.1} parent=11 // pred_check
        %p218 = pneg %p144
      $region30: #{model_forward.1} parent=11 // pred_check_branch
        %220 = sbr.rel (%p218) target = $region32
      $region31: #{model_forward.1} parent=11 // pred_region
        _
      $region32: #{model_forward.1} parent=11 // pred_fallthru
        _
      // Predicated region
      $region33: #{model_forward.1} parent=11 // pred_check
        %p221 = pneg %p165
      $region34: #{model_forward.1} parent=11 // pred_check_branch
        %223 = sbr.rel (%p221) target = $region36
      $region35: #{model_forward.1} parent=11 // pred_region
        _
      $region36: #{model_forward.1} parent=11 // pred_fallthru
        _
    $region12: #{model_forward.1} parent=5 // pred_fallthru
      _
    %p224 = scmp.lt.s32.totalorder %s13, 2
    // Predicated region
    $region37: #{model_forward.1} parent=5 // pred_check
      %p225 = pneg %p224
    $region38: #{model_forward.1} parent=5 // pred_check_branch
      %227 = sbr.rel (%p225) target = $region40
    $region39: #{model_forward.1} parent=5 // pred_region
      // Predicated region
      $region41: #{model_forward.1} parent=39 // pred_check
        %p228 = pneg %p33
      $region42: #{model_forward.1} parent=39 // pred_check_branch
        %230 = sbr.rel (%p228) target = $region44
      $region43: #{model_forward.1} parent=39 // pred_region
        %p231 = scmp.lt.s32.totalorder %s13, 1
        %s232 = scalar_select %p231, %s13, 1
        %s233 = smul.addr %s232, 32
        %s234 = smul.addr %s233, 8
        %s235 = scalar_lea.vmem %s0, %s234
      $region44: #{model_forward.1} parent=39 // pred_fallthru
        _
    $region40: #{model_forward.1} parent=5 // pred_fallthru
      _
    %p236 = scmp.le.s32.totalorder 1, %s13
    %p237 = scmp.lt.s32.totalorder %s13, 3
    %p238 = pnand %p236, %p237
    %p239 = pneg %p238
    // Predicated region
    $region45: #{model_forward.1} parent=5 // pred_check
      _
    $region46: #{model_forward.1} parent=5 // pred_check_branch
      %241 = sbr.rel (%p238) target = $region48
    $region47: #{model_forward.1} parent=5 // pred_region
      %s242 = ssub.s32 %s13, 1
      %p243 = scmp.lt.s32.totalorder %s18, 1
      %s244 = scalar_select %p243, %s18, 1
      %s245 = smul.addr %s244, 32
      %s246 = smul.addr %s245, 8
      %s247 = scalar_lea.vmem %s0, %s246
      %p248 = pneg %p39
      %p249 = pneg %p36
      %p250 = pneg %p60
      %p251 = pneg %p57
      %p252 = pneg %p81
      %p253 = pneg %p78
      %p254 = pneg %p102
      %p255 = pneg %p99
      %p256 = pneg %p123
      %p257 = pneg %p120
      %p258 = pneg %p144
      %p259 = pneg %p141
      %p260 = pneg %p165
      %p261 = pneg %p162
      %p262 = pneg %p191
      %p263 = pneg %p188
      %p264 = scmp.lt.s32.totalorder %s18, 1
      %s265 = scalar_select %p264, %s18, 1
      %s266 = smul.addr %s265, 32
      %s267 = smul.addr %s266, 8
      %s268 = scalar_lea.vmem %s7, %s267
      %p269 = scmp.lt.s32.totalorder %s18, 1
      %s270 = scalar_select %p269, %s18, 1
      %s271 = smul.addr %s270, 32
      %s272 = smul.addr %s271, 8
      %s273 = scalar_lea.vmem %s0, %s272
      %p274 = scmp.lt.s32.totalorder %s18, 1
      %s275 = scalar_select %p274, %s18, 1
      %s276 = smul.addr %s275, 32
      %s277 = smul.addr %s276, 8
      %s278 = scalar_lea.vmem %s7, %s277
      %v280 = vld [vmem:[%s273] sm:$0xff]
      %v281 = vld [vmem:[%s273 + $0x8] sm:$0xff]
      %v282 = vld [vmem:[%s273 + $0x10] sm:$0xff]
      %v283 = vld [vmem:[%s273 + $0x18] sm:$0xff]
      %v284 = vld [vmem:[%s273 + $0x20] sm:$0xff]
      %v285 = vld [vmem:[%s273 + $0x28] sm:$0xff]
      %v286 = vld [vmem:[%s273 + $0x30] sm:$0xff]
      %v287 = vld [vmem:[%s273 + $0x38] sm:$0xff]
      %v288 = vld [vmem:[%s273 + $0x40] sm:$0xff]
      %v289 = vld [vmem:[%s273 + $0x48] sm:$0xff]
      %v290 = vld [vmem:[%s273 + $0x50] sm:$0xff]
      %v291 = vld [vmem:[%s273 + $0x58] sm:$0xff]
      %v292 = vld [vmem:[%s273 + $0x60] sm:$0xff]
      %v293 = vld [vmem:[%s273 + $0x68] sm:$0xff]
      %v294 = vld [vmem:[%s273 + $0x70] sm:$0xff]
      %v295 = vld [vmem:[%s273 + $0x78] sm:$0xff]
      %v296 = vld [vmem:[%s273 + $0x80] sm:$0xff]
      %v297 = vld [vmem:[%s273 + $0x88] sm:$0xff]
      %v298 = vld [vmem:[%s273 + $0x90] sm:$0xff]
      %v299 = vld [vmem:[%s273 + $0x98] sm:$0xff]
      %v300 = vld [vmem:[%s273 + $0xa0] sm:$0xff]
      %v301 = vld [vmem:[%s273 + $0xa8] sm:$0xff]
      %v302 = vld [vmem:[%s273 + $0xb0] sm:$0xff]
      %v303 = vld [vmem:[%s273 + $0xb8] sm:$0xff]
      %v304 = vld [vmem:[%s273 + $0xc0] sm:$0xff]
      %v305 = vld [vmem:[%s273 + $0xc8] sm:$0xff]
      %v306 = vld [vmem:[%s273 + $0xd0] sm:$0xff]
      %v307 = vld [vmem:[%s273 + $0xd8] sm:$0xff]
      %v308 = vld [vmem:[%s273 + $0xe0] sm:$0xff]
      %v309 = vld [vmem:[%s273 + $0xe8] sm:$0xff]
      %v310 = vld [vmem:[%s273 + $0xf0] sm:$0xff]
      %v311 = vld [vmem:[%s273 + $0xf8] sm:$0xff]
      %vm312 = vcmask 97280
      %313 = vst.msk [vmem:[#allocation2 + $0x8] sm:$0xff] %vm312, 0.0
      %314 = vst.msk [vmem:[#allocation2 + $0x10] sm:$0xff] %vm312, 0.0
      %s315 = scalar_lea.vmem [#allocation2], 544
      %316 = vst.msk [vmem:[%s315 + $0x8] sm:$0xff] %vm312, 0.0
      %317 = vst.msk [vmem:[%s315 + $0x10] sm:$0xff] %vm312, 0.0
      %vm318 = vcmask 90112
      %319 = vst.msk [vmem:[#allocation2 + $0x8] sm:$0x1] %vm318, 0.0
      %320 = vst.msk [vmem:[#allocation2 + $0x28] sm:$0x1] %vm318, 0.0
      %321 = vst.msk [vmem:[#allocation2 + $0x48] sm:$0x1] %vm318, 0.0
      %322 = vst.msk [vmem:[#allocation2 + $0x68] sm:$0x1] %vm318, 0.0
      %323 = vst.msk [vmem:[#allocation2 + $0x88] sm:$0x1] %vm318, 0.0
      %324 = vst.msk [vmem:[#allocation2 + $0xa8] sm:$0x1] %vm318, 0.0
      %325 = vst.msk [vmem:[#allocation2 + $0xc8] sm:$0x1] %vm318, 0.0
      %326 = vst.msk [vmem:[#allocation2 + $0xe8] sm:$0x1] %vm318, 0.0
      %327 = vst.msk [vmem:[#allocation2 + $0x108] sm:$0x1] %vm318, 0.0
      %328 = vst.msk [vmem:[#allocation2 + $0x128] sm:$0x1] %vm318, 0.0
      %329 = vst.msk [vmem:[#allocation2 + $0x148] sm:$0x1] %vm318, 0.0
      %330 = vst.msk [vmem:[#allocation2 + $0x168] sm:$0x1] %vm318, 0.0
      %331 = vst.msk [vmem:[#allocation2 + $0x188] sm:$0x1] %vm318, 0.0
      %332 = vst.msk [vmem:[#allocation2 + $0x1a8] sm:$0x1] %vm318, 0.0
      %333 = vst.msk [vmem:[#allocation2 + $0x1c8] sm:$0x1] %vm318, 0.0
      %334 = vst.msk [vmem:[#allocation2 + $0x1e8] sm:$0x1] %vm318, 0.0
      %335 = vst.msk [vmem:[#allocation2 + $0x208] sm:$0x1] %vm318, 0.0
      %336 = vst.msk [vmem:[#allocation2 + $0x228] sm:$0x1] %vm318, 0.0
      %337 = vst.msk [vmem:[#allocation2 + $0x17] sm:$0x1] %vm318, 0.0
      %338 = vst.msk [vmem:[#allocation2 + $0x37] sm:$0x1] %vm318, 0.0
      %339 = vst.msk [vmem:[#allocation2 + $0x57] sm:$0x1] %vm318, 0.0
      %340 = vst.msk [vmem:[#allocation2 + $0x77] sm:$0x1] %vm318, 0.0
      %341 = vst.msk [vmem:[#allocation2 + $0x97] sm:$0x1] %vm318, 0.0
      %342 = vst.msk [vmem:[#allocation2 + $0xb7] sm:$0x1] %vm318, 0.0
      %343 = vst.msk [vmem:[#allocation2 + $0xd7] sm:$0x1] %vm318, 0.0
      %344 = vst.msk [vmem:[#allocation2 + $0xf7] sm:$0x1] %vm318, 0.0
      %345 = vst.msk [vmem:[#allocation2 + $0x117] sm:$0x1] %vm318, 0.0
      %346 = vst.msk [vmem:[#allocation2 + $0x137] sm:$0x1] %vm318, 0.0
      %347 = vst.msk [vmem:[#allocation2 + $0x157] sm:$0x1] %vm318, 0.0
      %348 = vst.msk [vmem:[#allocation2 + $0x177] sm:$0x1] %vm318, 0.0
      %349 = vst.msk [vmem:[#allocation2 + $0x197] sm:$0x1] %vm318, 0.0
      %350 = vst.msk [vmem:[#allocation2 + $0x1b7] sm:$0x1] %vm318, 0.0
      %351 = vst.msk [vmem:[#allocation2 + $0x1d7] sm:$0x1] %vm318, 0.0
      %352 = vst.msk [vmem:[#allocation2 + $0x1f7] sm:$0x1] %vm318, 0.0
      %353 = vst.msk [vmem:[#allocation2 + $0x217] sm:$0x1] %vm318, 0.0
      %354 = vst.msk [vmem:[#allocation2 + $0x237] sm:$0x1] %vm318, 0.0
      %s355 = scalar_lea.vmem [#allocation2], 32
      %vm356 = vcmask 31744
      %357 = vst.msk [vmem:[%s355 + $0x9] sm:$0xff] %vm356, %v280
      %358 = vst.msk [vmem:[%s355 + $0x11] sm:$0xff] %vm356, %v281
      %359 = vst.msk [vmem:[%s355 + $0x29] sm:$0xff] %vm356, %v282
      %360 = vst.msk [vmem:[%s355 + $0x31] sm:$0xff] %vm356, %v283
      %361 = vst.msk [vmem:[%s355 + $0x49] sm:$0xff] %vm356, %v284
      %362 = vst.msk [vmem:[%s355 + $0x51] sm:$0xff] %vm356, %v285
      %363 = vst.msk [vmem:[%s355 + $0x69] sm:$0xff] %vm356, %v286
      %364 = vst.msk [vmem:[%s355 + $0x71] sm:$0xff] %vm356, %v287
      %365 = vst.msk [vmem:[%s355 + $0x89] sm:$0xff] %vm356, %v288
      %366 = vst.msk [vmem:[%s355 + $0x91] sm:$0xff] %vm356, %v289
      %367 = vst.msk [vmem:[%s355 + $0xa9] sm:$0xff] %vm356, %v290
      %368 = vst.msk [vmem:[%s355 + $0xb1] sm:$0xff] %vm356, %v291
      %369 = vst.msk [vmem:[%s355 + $0xc9] sm:$0xff] %vm356, %v292
      %370 = vst.msk [vmem:[%s355 + $0xd1] sm:$0xff] %vm356, %v293
      %371 = vst.msk [vmem:[%s355 + $0xe9] sm:$0xff] %vm356, %v294
      %372 = vst.msk [vmem:[%s355 + $0xf1] sm:$0xff] %vm356, %v295
      %373 = vst.msk [vmem:[%s355 + $0x109] sm:$0xff] %vm356, %v296
      %374 = vst.msk [vmem:[%s355 + $0x111] sm:$0xff] %vm356, %v297
      %375 = vst.msk [vmem:[%s355 + $0x129] sm:$0xff] %vm356, %v298
      %376 = vst.msk [vmem:[%s355 + $0x131] sm:$0xff] %vm356, %v299
      %377 = vst.msk [vmem:[%s355 + $0x149] sm:$0xff] %vm356, %v300
      %378 = vst.msk [vmem:[%s355 + $0x151] sm:$0xff] %vm356, %v301
      %379 = vst.msk [vmem:[%s355 + $0x169] sm:$0xff] %vm356, %v302
      %380 = vst.msk [vmem:[%s355 + $0x171] sm:$0xff] %vm356, %v303
      %381 = vst.msk [vmem:[%s355 + $0x189] sm:$0xff] %vm356, %v304
      %382 = vst.msk [vmem:[%s355 + $0x191] sm:$0xff] %vm356, %v305
      %383 = vst.msk [vmem:[%s355 + $0x1a9] sm:$0xff] %vm356, %v306
      %384 = vst.msk [vmem:[%s355 + $0x1b1] sm:$0xff] %vm356, %v307
      %385 = vst.msk [vmem:[%s355 + $0x1c9] sm:$0xff] %vm356, %v308
      %386 = vst.msk [vmem:[%s355 + $0x1d1] sm:$0xff] %vm356, %v309
      %387 = vst.msk [vmem:[%s355 + $0x1e9] sm:$0xff] %vm356, %v310
      %388 = vst.msk [vmem:[%s355 + $0x1f1] sm:$0xff] %vm356, %v311
      %421 = vrot.lane.b32.xlu0 %v280, 4
      %v422 = vpop.permute.xlu0 %421
      %423 = vrot.lane.b32.xlu0 %v281, 4
      %v424 = vpop.permute.xlu0 %423
      %425 = vrot.lane.b32.xlu0 %v282, 4
      %v426 = vpop.permute.xlu0 %425
      %427 = vrot.lane.b32.xlu0 %v283, 4
      %v428 = vpop.permute.xlu0 %427
      %429 = vrot.lane.b32.xlu0 %v284, 4
      %v430 = vpop.permute.xlu0 %429
      %431 = vrot.lane.b32.xlu0 %v285, 4
      %v432 = vpop.permute.xlu0 %431
      %433 = vrot.lane.b32.xlu0 %v286, 4
      %v434 = vpop.permute.xlu0 %433
      %435 = vrot.lane.b32.xlu0 %v287, 4
      %v436 = vpop.permute.xlu0 %435
      %437 = vrot.lane.b32.xlu0 %v288, 4
      %v438 = vpop.permute.xlu0 %437
      %439 = vrot.lane.b32.xlu0 %v289, 4
      %v440 = vpop.permute.xlu0 %439
      %441 = vrot.lane.b32.xlu0 %v290, 4
      %v442 = vpop.permute.xlu0 %441
      %443 = vrot.lane.b32.xlu0 %v291, 4
      %v444 = vpop.permute.xlu0 %443
      %445 = vrot.lane.b32.xlu0 %v292, 4
      %v446 = vpop.permute.xlu0 %445
      %447 = vrot.lane.b32.xlu0 %v293, 4
      %v448 = vpop.permute.xlu0 %447
      %449 = vrot.lane.b32.xlu0 %v294, 4
      %v450 = vpop.permute.xlu0 %449
      %451 = vrot.lane.b32.xlu0 %v295, 4
      %v452 = vpop.permute.xlu0 %451
      %453 = vrot.lane.b32.xlu0 %v296, 4
      %v454 = vpop.permute.xlu0 %453
      %455 = vrot.lane.b32.xlu0 %v297, 4
      %v456 = vpop.permute.xlu0 %455
      %457 = vrot.lane.b32.xlu0 %v298, 4
      %v458 = vpop.permute.xlu0 %457
      %459 = vrot.lane.b32.xlu0 %v299, 4
      %v460 = vpop.permute.xlu0 %459
      %461 = vrot.lane.b32.xlu0 %v300, 4
      %v462 = vpop.permute.xlu0 %461
      %463 = vrot.lane.b32.xlu0 %v301, 4
      %v464 = vpop.permute.xlu0 %463
      %465 = vrot.lane.b32.xlu0 %v302, 4
      %v466 = vpop.permute.xlu0 %465
      %467 = vrot.lane.b32.xlu0 %v303, 4
      %v468 = vpop.permute.xlu0 %467
      %469 = vrot.lane.b32.xlu0 %v304, 4
      %v470 = vpop.permute.xlu0 %469
      %471 = vrot.lane.b32.xlu0 %v305, 4
      %v472 = vpop.permute.xlu0 %471
      %473 = vrot.lane.b32.xlu0 %v306, 4
      %v474 = vpop.permute.xlu0 %473
      %475 = vrot.lane.b32.xlu0 %v307, 4
      %v476 = vpop.permute.xlu0 %475
      %477 = vrot.lane.b32.xlu0 %v308, 4
      %v478 = vpop.permute.xlu0 %477
      %479 = vrot.lane.b32.xlu0 %v309, 4
      %v480 = vpop.permute.xlu0 %479
      %481 = vrot.lane.b32.xlu0 %v310, 4
      %v482 = vpop.permute.xlu0 %481
      %483 = vrot.lane.b32.xlu0 %v311, 4
      %v484 = vpop.permute.xlu0 %483
      %vm517 = vcmask 64544
      %518 = vst.msk [vmem:[%s355 + $0x8] sm:$0xff] %vm517, %v422
      %519 = vst.msk [vmem:[%s355 + $0x10] sm:$0xff] %vm517, %v424
      %520 = vst.msk [vmem:[%s355 + $0x28] sm:$0xff] %vm517, %v426
      %521 = vst.msk [vmem:[%s355 + $0x30] sm:$0xff] %vm517, %v428
      %522 = vst.msk [vmem:[%s355 + $0x48] sm:$0xff] %vm517, %v430
      %523 = vst.msk [vmem:[%s355 + $0x50] sm:$0xff] %vm517, %v432
      %524 = vst.msk [vmem:[%s355 + $0x68] sm:$0xff] %vm517, %v434
      %525 = vst.msk [vmem:[%s355 + $0x70] sm:$0xff] %vm517, %v436
      %526 = vst.msk [vmem:[%s355 + $0x88] sm:$0xff] %vm517, %v438
      %527 = vst.msk [vmem:[%s355 + $0x90] sm:$0xff] %vm517, %v440
      %528 = vst.msk [vmem:[%s355 + $0xa8] sm:$0xff] %vm517, %v442
      %529 = vst.msk [vmem:[%s355 + $0xb0] sm:$0xff] %vm517, %v444
      %530 = vst.msk [vmem:[%s355 + $0xc8] sm:$0xff] %vm517, %v446
      %531 = vst.msk [vmem:[%s355 + $0xd0] sm:$0xff] %vm517, %v448
      %532 = vst.msk [vmem:[%s355 + $0xe8] sm:$0xff] %vm517, %v450
      %533 = vst.msk [vmem:[%s355 + $0xf0] sm:$0xff] %vm517, %v452
      %534 = vst.msk [vmem:[%s355 + $0x108] sm:$0xff] %vm517, %v454
      %535 = vst.msk [vmem:[%s355 + $0x110] sm:$0xff] %vm517, %v456
      %536 = vst.msk [vmem:[%s355 + $0x128] sm:$0xff] %vm517, %v458
      %537 = vst.msk [vmem:[%s355 + $0x130] sm:$0xff] %vm517, %v460
      %538 = vst.msk [vmem:[%s355 + $0x148] sm:$0xff] %vm517, %v462
      %539 = vst.msk [vmem:[%s355 + $0x150] sm:$0xff] %vm517, %v464
      %540 = vst.msk [vmem:[%s355 + $0x168] sm:$0xff] %vm517, %v466
      %541 = vst.msk [vmem:[%s355 + $0x170] sm:$0xff] %vm517, %v468
      %542 = vst.msk [vmem:[%s355 + $0x188] sm:$0xff] %vm517, %v470
      %543 = vst.msk [vmem:[%s355 + $0x190] sm:$0xff] %vm517, %v472
      %544 = vst.msk [vmem:[%s355 + $0x1a8] sm:$0xff] %vm517, %v474
      %545 = vst.msk [vmem:[%s355 + $0x1b0] sm:$0xff] %vm517, %v476
      %546 = vst.msk [vmem:[%s355 + $0x1c8] sm:$0xff] %vm517, %v478
      %547 = vst.msk [vmem:[%s355 + $0x1d0] sm:$0xff] %vm517, %v480
      %548 = vst.msk [vmem:[%s355 + $0x1e8] sm:$0xff] %vm517, %v482
      %549 = vst.msk [vmem:[%s355 + $0x1f0] sm:$0xff] %vm517, %v484
      %550 = vrot.lane.b32.xlu0 %v280, 8
      %v551 = vpop.permute.xlu0 %550
      %552 = vrot.lane.b32.xlu0 %v281, 8
      %v553 = vpop.permute.xlu0 %552
      %554 = vrot.lane.b32.xlu0 %v282, 8
      %v555 = vpop.permute.xlu0 %554
      %556 = vrot.lane.b32.xlu0 %v283, 8
      %v557 = vpop.permute.xlu0 %556
      %558 = vrot.lane.b32.xlu0 %v284, 8
      %v559 = vpop.permute.xlu0 %558
      %560 = vrot.lane.b32.xlu0 %v285, 8
      %v561 = vpop.permute.xlu0 %560
      %562 = vrot.lane.b32.xlu0 %v286, 8
      %v563 = vpop.permute.xlu0 %562
      %564 = vrot.lane.b32.xlu0 %v287, 8
      %v565 = vpop.permute.xlu0 %564
      %566 = vrot.lane.b32.xlu0 %v288, 8
      %v567 = vpop.permute.xlu0 %566
      %568 = vrot.lane.b32.xlu0 %v289, 8
      %v569 = vpop.permute.xlu0 %568
      %570 = vrot.lane.b32.xlu0 %v290, 8
      %v571 = vpop.permute.xlu0 %570
      %572 = vrot.lane.b32.xlu0 %v291, 8
      %v573 = vpop.permute.xlu0 %572
      %574 = vrot.lane.b32.xlu0 %v292, 8
      %v575 = vpop.permute.xlu0 %574
      %576 = vrot.lane.b32.xlu0 %v293, 8
      %v577 = vpop.permute.xlu0 %576
      %578 = vrot.lane.b32.xlu0 %v294, 8
      %v579 = vpop.permute.xlu0 %578
      %580 = vrot.lane.b32.xlu0 %v295, 8
      %v581 = vpop.permute.xlu0 %580
      %582 = vrot.lane.b32.xlu0 %v296, 8
      %v583 = vpop.permute.xlu0 %582
      %584 = vrot.lane.b32.xlu0 %v297, 8
      %v585 = vpop.permute.xlu0 %584
      %586 = vrot.lane.b32.xlu0 %v298, 8
      %v587 = vpop.permute.xlu0 %586
      %588 = vrot.lane.b32.xlu0 %v299, 8
      %v589 = vpop.permute.xlu0 %588
      %590 = vrot.lane.b32.xlu0 %v300, 8
      %v591 = vpop.permute.xlu0 %590
      %592 = vrot.lane.b32.xlu0 %v301, 8
      %v593 = vpop.permute.xlu0 %592
      %594 = vrot.lane.b32.xlu0 %v302, 8
      %v595 = vpop.permute.xlu0 %594
      %596 = vrot.lane.b32.xlu0 %v303, 8
      %v597 = vpop.permute.xlu0 %596
      %598 = vrot.lane.b32.xlu0 %v304, 8
      %v599 = vpop.permute.xlu0 %598
      %600 = vrot.lane.b32.xlu0 %v305, 8
      %v601 = vpop.permute.xlu0 %600
      %602 = vrot.lane.b32.xlu0 %v306, 8
      %v603 = vpop.permute.xlu0 %602
      %604 = vrot.lane.b32.xlu0 %v307, 8
      %v605 = vpop.permute.xlu0 %604
      %606 = vrot.lane.b32.xlu0 %v308, 8
      %v607 = vpop.permute.xlu0 %606
      %608 = vrot.lane.b32.xlu0 %v309, 8
      %v609 = vpop.permute.xlu0 %608
      %610 = vrot.lane.b32.xlu0 %v310, 8
      %v611 = vpop.permute.xlu0 %610
      %612 = vrot.lane.b32.xlu0 %v311, 8
      %v613 = vpop.permute.xlu0 %612
      %vm646 = vcmask 97344
      %647 = vst.msk [vmem:[%s355 + $0x7] sm:$0xff] %vm646, %v551
      %648 = vst.msk [vmem:[%s355 + $0xf] sm:$0xff] %vm646, %v553
      %649 = vst.msk [vmem:[%s355 + $0x27] sm:$0xff] %vm646, %v555
      %650 = vst.msk [vmem:[%s355 + $0x2f] sm:$0xff] %vm646, %v557
      %651 = vst.msk [vmem:[%s355 + $0x47] sm:$0xff] %vm646, %v559
      %652 = vst.msk [vmem:[%s355 + $0x4f] sm:$0xff] %vm646, %v561
      %653 = vst.msk [vmem:[%s355 + $0x67] sm:$0xff] %vm646, %v563
      %654 = vst.msk [vmem:[%s355 + $0x6f] sm:$0xff] %vm646, %v565
      %655 = vst.msk [vmem:[%s355 + $0x87] sm:$0xff] %vm646, %v567
      %656 = vst.msk [vmem:[%s355 + $0x8f] sm:$0xff] %vm646, %v569
      %657 = vst.msk [vmem:[%s355 + $0xa7] sm:$0xff] %vm646, %v571
      %658 = vst.msk [vmem:[%s355 + $0xaf] sm:$0xff] %vm646, %v573
      %659 = vst.msk [vmem:[%s355 + $0xc7] sm:$0xff] %vm646, %v575
      %660 = vst.msk [vmem:[%s355 + $0xcf] sm:$0xff] %vm646, %v577
      %661 = vst.msk [vmem:[%s355 + $0xe7] sm:$0xff] %vm646, %v579
      %662 = vst.msk [vmem:[%s355 + $0xef] sm:$0xff] %vm646, %v581
      %663 = vst.msk [vmem:[%s355 + $0x107] sm:$0xff] %vm646, %v583
      %664 = vst.msk [vmem:[%s355 + $0x10f] sm:$0xff] %vm646, %v585
      %665 = vst.msk [vmem:[%s355 + $0x127] sm:$0xff] %vm646, %v587
      %666 = vst.msk [vmem:[%s355 + $0x12f] sm:$0xff] %vm646, %v589
      %667 = vst.msk [vmem:[%s355 + $0x147] sm:$0xff] %vm646, %v591
      %668 = vst.msk [vmem:[%s355 + $0x14f] sm:$0xff] %vm646, %v593
      %669 = vst.msk [vmem:[%s355 + $0x167] sm:$0xff] %vm646, %v595
      %670 = vst.msk [vmem:[%s355 + $0x16f] sm:$0xff] %vm646, %v597
      %671 = vst.msk [vmem:[%s355 + $0x187] sm:$0xff] %vm646, %v599
      %672 = vst.msk [vmem:[%s355 + $0x18f] sm:$0xff] %vm646, %v601
      %673 = vst.msk [vmem:[%s355 + $0x1a7] sm:$0xff] %vm646, %v603
      %674 = vst.msk [vmem:[%s355 + $0x1af] sm:$0xff] %vm646, %v605
      %675 = vst.msk [vmem:[%s355 + $0x1c7] sm:$0xff] %vm646, %v607
      %676 = vst.msk [vmem:[%s355 + $0x1cf] sm:$0xff] %vm646, %v609
      %677 = vst.msk [vmem:[%s355 + $0x1e7] sm:$0xff] %vm646, %v611
      %678 = vst.msk [vmem:[%s355 + $0x1ef] sm:$0xff] %vm646, %v613
      %v679 = vld [vmem:[#allocation2 + $0x8] sm:$0xff]
      %v680 = vld [vmem:[#allocation2 + $0x10] sm:$0xff]
      %v681 = vld [vmem:[#allocation2 + $0x28] sm:$0xff]
      %v682 = vld [vmem:[#allocation2 + $0x30] sm:$0xff]
      %v683 = vld [vmem:[#allocation2 + $0x48] sm:$0xff]
      %v684 = vld [vmem:[#allocation2 + $0x50] sm:$0xff]
      %v685 = vld [vmem:[#allocation2 + $0x68] sm:$0xff]
      %v686 = vld [vmem:[#allocation2 + $0x70] sm:$0xff]
      %v687 = vld [vmem:[#allocation2 + $0x88] sm:$0xff]
      %v688 = vld [vmem:[#allocation2 + $0x90] sm:$0xff]
      %v689 = vld [vmem:[#allocation2 + $0xa8] sm:$0xff]
      %v690 = vld [vmem:[#allocation2 + $0xb0] sm:$0xff]
      %v691 = vld [vmem:[#allocation2 + $0xc8] sm:$0xff]
      %v692 = vld [vmem:[#allocation2 + $0xd0] sm:$0xff]
      %v693 = vld [vmem:[#allocation2 + $0xe8] sm:$0xff]
      %v694 = vld [vmem:[#allocation2 + $0xf0] sm:$0xff]
      %v695 = vld [vmem:[#allocation2 + $0x108] sm:$0xff]
      %v696 = vld [vmem:[#allocation2 + $0x110] sm:$0xff]
      %v697 = vld [vmem:[#allocation2 + $0x128] sm:$0xff]
      %v698 = vld [vmem:[#allocation2 + $0x130] sm:$0xff]
      %v699 = vld [vmem:[#allocation2 + $0x148] sm:$0xff]
      %v700 = vld [vmem:[#allocation2 + $0x150] sm:$0xff]
      %v701 = vld [vmem:[#allocation2 + $0x168] sm:$0xff]
      %v702 = vld [vmem:[#allocation2 + $0x170] sm:$0xff]
      %v703 = vld [vmem:[#allocation2 + $0x188] sm:$0xff]
      %v704 = vld [vmem:[#allocation2 + $0x190] sm:$0xff]
      %v705 = vld [vmem:[#allocation2 + $0x1a8] sm:$0xff]
      %v706 = vld [vmem:[#allocation2 + $0x1b0] sm:$0xff]
      %v707 = vld [vmem:[#allocation2 + $0x1c8] sm:$0xff]
      %v708 = vld [vmem:[#allocation2 + $0x1d0] sm:$0xff]
      %v709 = vld [vmem:[#allocation2 + $0x1e8] sm:$0xff]
      %v710 = vld [vmem:[#allocation2 + $0x1f0] sm:$0xff]
      %v711 = vpack.c.bf16 %v680, %v679
      %v712 = vpack.c.bf16 %v682, %v681
      %v713 = vpack.c.bf16 %v684, %v683
      %v714 = vpack.c.bf16 %v686, %v685
      %v715 = vpack.c.bf16 %v688, %v687
      %v716 = vpack.c.bf16 %v690, %v689
      %v717 = vpack.c.bf16 %v692, %v691
      %v718 = vpack.c.bf16 %v694, %v693
      %v719 = vpack.c.bf16 %v696, %v695
      %v720 = vpack.c.bf16 %v698, %v697
      %v721 = vpack.c.bf16 %v700, %v699
      %v722 = vpack.c.bf16 %v702, %v701
      %v723 = vpack.c.bf16 %v704, %v703
      %v724 = vpack.c.bf16 %v706, %v705
      %v725 = vpack.c.bf16 %v708, %v707
      %v726 = vpack.c.bf16 %v710, %v709
      %v727 = vld [vmem:[%s1] sm:$0xf]
      %v728 = vld [vmem:[%s1 + $0x4] sm:$0x3]
      %v729 = vld [vmem:[%s355 + $0x8] sm:$0xff]
      %v730 = vld [vmem:[%s355 + $0x10] sm:$0xff]
      %v731 = vld [vmem:[%s355 + $0x28] sm:$0xff]
      %v732 = vld [vmem:[%s355 + $0x30] sm:$0xff]
      %v733 = vld [vmem:[%s355 + $0x48] sm:$0xff]
      %v734 = vld [vmem:[%s355 + $0x50] sm:$0xff]
      %v735 = vld [vmem:[%s355 + $0x68] sm:$0xff]
      %v736 = vld [vmem:[%s355 + $0x70] sm:$0xff]
      %v737 = vld [vmem:[%s355 + $0x88] sm:$0xff]
      %v738 = vld [vmem:[%s355 + $0x90] sm:$0xff]
      %v739 = vld [vmem:[%s355 + $0xa8] sm:$0xff]
      %v740 = vld [vmem:[%s355 + $0xb0] sm:$0xff]
      %v741 = vld [vmem:[%s355 + $0xc8] sm:$0xff]
      %v742 = vld [vmem:[%s355 + $0xd0] sm:$0xff]
      %v743 = vld [vmem:[%s355 + $0xe8] sm:$0xff]
      %v744 = vld [vmem:[%s355 + $0xf0] sm:$0xff]
      %v745 = vld [vmem:[%s355 + $0x108] sm:$0xff]
      %v746 = vld [vmem:[%s355 + $0x110] sm:$0xff]
      %v747 = vld [vmem:[%s355 + $0x128] sm:$0xff]
      %v748 = vld [vmem:[%s355 + $0x130] sm:$0xff]
      %v749 = vld [vmem:[%s355 + $0x148] sm:$0xff]
      %v750 = vld [vmem:[%s355 + $0x150] sm:$0xff]
      %v751 = vld [vmem:[%s355 + $0x168] sm:$0xff]
      %v752 = vld [vmem:[%s355 + $0x170] sm:$0xff]
      %v753 = vld [vmem:[%s355 + $0x188] sm:$0xff]
      %v754 = vld [vmem:[%s355 + $0x190] sm:$0xff]
      %v755 = vld [vmem:[%s355 + $0x1a8] sm:$0xff]
      %v756 = vld [vmem:[%s355 + $0x1b0] sm:$0xff]
      %v757 = vld [vmem:[%s355 + $0x1c8] sm:$0xff]
      %v758 = vld [vmem:[%s355 + $0x1d0] sm:$0xff]
      %v759 = vld [vmem:[%s355 + $0x1e8] sm:$0xff]
      %v760 = vld [vmem:[%s355 + $0x1f0] sm:$0xff]
      %v761 = vpack.c.bf16 %v730, %v729
      %v762 = vpack.c.bf16 %v732, %v731
      %v763 = vpack.c.bf16 %v734, %v733
      %v764 = vpack.c.bf16 %v736, %v735
      %v765 = vpack.c.bf16 %v738, %v737
      %v766 = vpack.c.bf16 %v740, %v739
      %v767 = vpack.c.bf16 %v742, %v741
      %v768 = vpack.c.bf16 %v744, %v743
      %v769 = vpack.c.bf16 %v746, %v745
      %v770 = vpack.c.bf16 %v748, %v747
      %v771 = vpack.c.bf16 %v750, %v749
      %v772 = vpack.c.bf16 %v752, %v751
      %v773 = vpack.c.bf16 %v754, %v753
      %v774 = vpack.c.bf16 %v756, %v755
      %v775 = vpack.c.bf16 %v758, %v757
      %v776 = vpack.c.bf16 %v760, %v759
      %s777 = scalar_lea.vmem %s1, 8
      %v778 = vld [vmem:[%s777] sm:$0xf]
      %v779 = vld [vmem:[%s777 + $0x4] sm:$0x3]
      %v782 = vunpack.c.l.b16 %v778
      %v783 = vunpack.c.l.b16 %v779
      %v784 = vpack.c.b16 %v783, %v782
      %v786 = vsel %vm312, %v761, 0
      %v789 = vsel %vm312, %v762, 0
      %v792 = vsel %vm312, %v763, 0
      %v795 = vsel %vm312, %v764, 0
      %v798 = vsel %vm312, %v765, 0
      %v801 = vsel %vm312, %v766, 0
      %v804 = vsel %vm312, %v767, 0
      %v807 = vsel %vm312, %v768, 0
      %v810 = vsel %vm312, %v769, 0
      %v813 = vsel %vm312, %v770, 0
      %v816 = vsel %vm312, %v771, 0
      %v819 = vsel %vm312, %v772, 0
      %v822 = vsel %vm312, %v773, 0
      %v825 = vsel %vm312, %v774, 0
      %v828 = vsel %vm312, %v775, 0
      %v831 = vsel %vm312, %v776, 0
      %vm833 = vcmask 1045504
      %v835 = vsel %vm833, %v784, 0
      %837 = vmatprep.subr.bf16.mxu0 0
      %838 = vmatpush1.bf16.msra.mxu0 0
      %839 = vmatprep.subr.bf16.mxu0 0
      %840 = vmatpush1.bf16.msra.mxu0 0
      %841 = vmatprep.subr.bf16.mxu0 0
      %842 = vmatpush1.bf16.msra.mxu0 0
      %843 = vmatprep.subr.bf16.mxu0 0
      %844 = vmatpush1.bf16.msra.mxu0 0
      %845 = vmatprep.subr.bf16.mxu0 0
      %846 = vmatpush1.bf16.msra.mxu0 0
      %847 = vmatprep.subr.bf16.mxu0 0
      %848 = vmatpush1.bf16.msra.mxu0 0
      %849 = vmatprep.subr.bf16.mxu0 0
      %850 = vmatpush1.bf16.msra.mxu0 0
      %851 = vmatprep.subr.bf16.mxu0 0
      %852 = vmatpush1.bf16.msra.mxu0 %v835
      %853 = vmatprep.subr.bf16.mxu0 0
      %854 = vmatpush2.bf16.msra.mxu0 0
      %855 = vmatprep.subr.bf16.mxu0 0
      %856 = vmatpush2.bf16.msra.mxu0 0
      %857 = vmatprep.subr.bf16.mxu0 0
      %858 = vmatpush2.bf16.msra.mxu0 0
      %859 = vmatprep.subr.bf16.mxu0 0
      %860 = vmatpush2.bf16.msra.mxu0 0
      %861 = vmatprep.subr.bf16.mxu0 0
      %862 = vmatpush2.bf16.msra.mxu0 0
      %863 = vmatprep.subr.bf16.mxu0 0
      %864 = vmatpush2.bf16.msra.mxu0 0
      %865 = vmatprep.subr.bf16.mxu0 0
      %866 = vmatpush2.bf16.msra.mxu0 0
      %867 = vmatprep.subr.bf16.mxu0 0
      %868 = vmatpush2.bf16.msra.mxu0 0
      %869 = vmatprep.mubr.bf16.mxu0 0
      %870 = vmatmul.mubr.bf16.gmra.mxu0 %v786
      %v871 = vpop.f32.mrf.mxu0
      %v872 = vadd.f32 0.0, %v871
      %v873 = vpop.f32.mrf.mxu0
      %v874 = vpop.f32.mrf.mxu0
      %v875 = vadd.f32 0.0, %v874
      %v876 = vpop.f32.mrf.mxu0
      %877 = vmatprep.mubr.bf16.mxu0 0
      %878 = vmatmul.mubr.bf16.gmra.mxu0 %v789
      %v879 = vpop.f32.mrf.mxu0
      %v880 = vadd.f32 0.0, %v879
      %v881 = vpop.f32.mrf.mxu0
      %v882 = vpop.f32.mrf.mxu0
      %v883 = vadd.f32 0.0, %v882
      %v884 = vpop.f32.mrf.mxu0
      %885 = vmatprep.mubr.bf16.mxu0 0
      %886 = vmatmul.mubr.bf16.gmra.mxu0 %v792
      %v887 = vpop.f32.mrf.mxu0
      %v888 = vadd.f32 0.0, %v887
      %v889 = vpop.f32.mrf.mxu0
      %v890 = vpop.f32.mrf.mxu0
      %v891 = vadd.f32 0.0, %v890
      %v892 = vpop.f32.mrf.mxu0
      %893 = vmatprep.mubr.bf16.mxu0 0
      %894 = vmatmul.mubr.bf16.gmra.mxu0 %v795
      %v895 = vpop.f32.mrf.mxu0
      %v896 = vadd.f32 0.0, %v895
      %v897 = vpop.f32.mrf.mxu0
      %v898 = vpop.f32.mrf.mxu0
      %v899 = vadd.f32 0.0, %v898
      %v900 = vpop.f32.mrf.mxu0
      %901 = vmatprep.mubr.bf16.mxu0 0
      %902 = vmatmul.mubr.bf16.gmra.mxu0 %v798
      %v903 = vpop.f32.mrf.mxu0
      %v904 = vadd.f32 0.0, %v903
      %v905 = vpop.f32.mrf.mxu0
      %v906 = vpop.f32.mrf.mxu0
      %v907 = vadd.f32 0.0, %v906
      %v908 = vpop.f32.mrf.mxu0
      %909 = vmatprep.mubr.bf16.mxu0 0
      %910 = vmatmul.mubr.bf16.gmra.mxu0 %v801
      %v911 = vpop.f32.mrf.mxu0
      %v912 = vadd.f32 0.0, %v911
      %v913 = vpop.f32.mrf.mxu0
      %v914 = vpop.f32.mrf.mxu0
      %v915 = vadd.f32 0.0, %v914
      %v916 = vpop.f32.mrf.mxu0
      %917 = vmatprep.mubr.bf16.mxu0 0
      %918 = vmatmul.mubr.bf16.gmra.mxu0 %v804
      %v919 = vpop.f32.mrf.mxu0
      %v920 = vadd.f32 0.0, %v919
      %v921 = vpop.f32.mrf.mxu0
      %v922 = vpop.f32.mrf.mxu0
      %v923 = vadd.f32 0.0, %v922
      %v924 = vpop.f32.mrf.mxu0
      %925 = vmatprep.mubr.bf16.mxu0 0
      %926 = vmatmul.mubr.bf16.gmra.mxu0 %v807
      %v927 = vpop.f32.mrf.mxu0
      %v928 = vadd.f32 0.0, %v927
      %v929 = vpop.f32.mrf.mxu0
      %v930 = vpop.f32.mrf.mxu0
      %v931 = vadd.f32 0.0, %v930
      %v932 = vpop.f32.mrf.mxu0
      %933 = vmatprep.mubr.bf16.mxu0 0
      %934 = vmatmul.mubr.bf16.gmra.mxu0 %v810
      %v935 = vpop.f32.mrf.mxu0
      %v936 = vadd.f32 0.0, %v935
      %v937 = vpop.f32.mrf.mxu0
      %v938 = vpop.f32.mrf.mxu0
      %v939 = vadd.f32 0.0, %v938
      %v940 = vpop.f32.mrf.mxu0
      %941 = vmatprep.mubr.bf16.mxu0 0
      %942 = vmatmul.mubr.bf16.gmra.mxu0 %v813
      %v943 = vpop.f32.mrf.mxu0
      %v944 = vadd.f32 0.0, %v943
      %v945 = vpop.f32.mrf.mxu0
      %v946 = vpop.f32.mrf.mxu0
      %v947 = vadd.f32 0.0, %v946
      %v948 = vpop.f32.mrf.mxu0
      %949 = vmatprep.mubr.bf16.mxu0 0
      %950 = vmatmul.mubr.bf16.gmra.mxu0 %v816
      %v951 = vpop.f32.mrf.mxu0
      %v952 = vadd.f32 0.0, %v951
      %v953 = vpop.f32.mrf.mxu0
      %v954 = vpop.f32.mrf.mxu0
      %v955 = vadd.f32 0.0, %v954
      %v956 = vpop.f32.mrf.mxu0
      %957 = vmatprep.mubr.bf16.mxu0 0
      %958 = vmatmul.mubr.bf16.gmra.mxu0 %v819
      %v959 = vpop.f32.mrf.mxu0
      %v960 = vadd.f32 0.0, %v959
      %v961 = vpop.f32.mrf.mxu0
      %v962 = vpop.f32.mrf.mxu0
      %v963 = vadd.f32 0.0, %v962
      %v964 = vpop.f32.mrf.mxu0
      %965 = vmatprep.mubr.bf16.mxu0 0
      %966 = vmatmul.mubr.bf16.gmra.mxu0 %v822
      %v967 = vpop.f32.mrf.mxu0
      %v968 = vadd.f32 0.0, %v967
      %v969 = vpop.f32.mrf.mxu0
      %v970 = vpop.f32.mrf.mxu0
      %v971 = vadd.f32 0.0, %v970
      %v972 = vpop.f32.mrf.mxu0
      %973 = vmatprep.mubr.bf16.mxu0 0
      %974 = vmatmul.mubr.bf16.gmra.mxu0 %v825
      %v975 = vpop.f32.mrf.mxu0
      %v976 = vadd.f32 0.0, %v975
      %v977 = vpop.f32.mrf.mxu0
      %v978 = vpop.f32.mrf.mxu0
      %v979 = vadd.f32 0.0, %v978
      %v980 = vpop.f32.mrf.mxu0
      %981 = vmatprep.mubr.bf16.mxu0 0
      %982 = vmatmul.mubr.bf16.gmra.mxu0 %v828
      %v983 = vpop.f32.mrf.mxu0
      %v984 = vadd.f32 0.0, %v983
      %v985 = vpop.f32.mrf.mxu0
      %v986 = vpop.f32.mrf.mxu0
      %v987 = vadd.f32 0.0, %v986
      %v988 = vpop.f32.mrf.mxu0
      %989 = vmatprep.mubr.bf16.mxu0 0
      %990 = vmatmul.mubr.bf16.gmra.mxu0 %v831
      %v991 = vpop.f32.mrf.mxu0
      %v992 = vadd.f32 0.0, %v991
      %v993 = vpop.f32.mrf.mxu0
      %v994 = vpop.f32.mrf.mxu0
      %v995 = vadd.f32 0.0, %v994
      %v996 = vpop.f32.mrf.mxu0
      %997 = vdwg.mxu0
      %v1000 = vunpack.c.l.b16 %v727
      %v1001 = vunpack.c.l.b16 %v728
      %v1002 = vpack.c.b16 %v1001, %v1000
      %v1004 = vsel %vm312, %v711, 0
      %v1007 = vsel %vm312, %v712, 0
      %v1010 = vsel %vm312, %v713, 0
      %v1013 = vsel %vm312, %v714, 0
      %v1016 = vsel %vm312, %v715, 0
      %v1019 = vsel %vm312, %v716, 0
      %v1022 = vsel %vm312, %v717, 0
      %v1025 = vsel %vm312, %v718, 0
      %v1028 = vsel %vm312, %v719, 0
      %v1031 = vsel %vm312, %v720, 0
      %v1034 = vsel %vm312, %v721, 0
      %v1037 = vsel %vm312, %v722, 0
      %v1040 = vsel %vm312, %v723, 0
      %v1043 = vsel %vm312, %v724, 0
      %v1046 = vsel %vm312, %v725, 0
      %v1049 = vsel %vm312, %v726, 0
      %v1052 = vsel %vm833, %v1002, 0
      %1054 = vmatprep.subr.bf16.mxu0 0
      %1055 = vmatpush1.bf16.msra.mxu0 0
      %1056 = vmatprep.subr.bf16.mxu0 0
      %1057 = vmatpush1.bf16.msra.mxu0 0
      %1058 = vmatprep.subr.bf16.mxu0 0
      %1059 = vmatpush1.bf16.msra.mxu0 0
      %1060 = vmatprep.subr.bf16.mxu0 0
      %1061 = vmatpush1.bf16.msra.mxu0 0
      %1062 = vmatprep.subr.bf16.mxu0 0
      %1063 = vmatpush1.bf16.msra.mxu0 0
      %1064 = vmatprep.subr.bf16.mxu0 0
      %1065 = vmatpush1.bf16.msra.mxu0 0
      %1066 = vmatprep.subr.bf16.mxu0 0
      %1067 = vmatpush1.bf16.msra.mxu0 0
      %1068 = vmatprep.subr.bf16.mxu0 0
      %1069 = vmatpush1.bf16.msra.mxu0 %v1052
      %1070 = vmatprep.subr.bf16.mxu0 0
      %1071 = vmatpush2.bf16.msra.mxu0 0
      %1072 = vmatprep.subr.bf16.mxu0 0
      %1073 = vmatpush2.bf16.msra.mxu0 0
      %1074 = vmatprep.subr.bf16.mxu0 0
      %1075 = vmatpush2.bf16.msra.mxu0 0
      %1076 = vmatprep.subr.bf16.mxu0 0
      %1077 = vmatpush2.bf16.msra.mxu0 0
      %1078 = vmatprep.subr.bf16.mxu0 0
      %1079 = vmatpush2.bf16.msra.mxu0 0
      %1080 = vmatprep.subr.bf16.mxu0 0
      %1081 = vmatpush2.bf16.msra.mxu0 0
      %1082 = vmatprep.subr.bf16.mxu0 0
      %1083 = vmatpush2.bf16.msra.mxu0 0
      %1084 = vmatprep.subr.bf16.mxu0 0
      %1085 = vmatpush2.bf16.msra.mxu0 0
      %1086 = vmatprep.mubr.bf16.mxu0 0
      %1087 = vmatmul.mubr.bf16.gmra.mxu0 %v1004
      %v1088 = vpop.f32.mrf.mxu0
      %v1089 = vadd.f32 %v872, %v1088
      %v1090 = vpop.f32.mrf.mxu0
      %v1091 = vpop.f32.mrf.mxu0
      %v1092 = vadd.f32 %v875, %v1091
      %v1093 = vpop.f32.mrf.mxu0
      %1094 = vmatprep.mubr.bf16.mxu0 0
      %1095 = vmatmul.mubr.bf16.gmra.mxu0 %v1007
      %v1096 = vpop.f32.mrf.mxu0
      %v1097 = vadd.f32 %v880, %v1096
      %v1098 = vpop.f32.mrf.mxu0
      %v1099 = vpop.f32.mrf.mxu0
      %v1100 = vadd.f32 %v883, %v1099
      %v1101 = vpop.f32.mrf.mxu0
      %1102 = vmatprep.mubr.bf16.mxu0 0
      %1103 = vmatmul.mubr.bf16.gmra.mxu0 %v1010
      %v1104 = vpop.f32.mrf.mxu0
      %v1105 = vadd.f32 %v888, %v1104
      %v1106 = vpop.f32.mrf.mxu0
      %v1107 = vpop.f32.mrf.mxu0
      %v1108 = vadd.f32 %v891, %v1107
      %v1109 = vpop.f32.mrf.mxu0
      %1110 = vmatprep.mubr.bf16.mxu0 0
      %1111 = vmatmul.mubr.bf16.gmra.mxu0 %v1013
      %v1112 = vpop.f32.mrf.mxu0
      %v1113 = vadd.f32 %v896, %v1112
      %v1114 = vpop.f32.mrf.mxu0
      %v1115 = vpop.f32.mrf.mxu0
      %v1116 = vadd.f32 %v899, %v1115
      %v1117 = vpop.f32.mrf.mxu0
      %1118 = vmatprep.mubr.bf16.mxu0 0
      %1119 = vmatmul.mubr.bf16.gmra.mxu0 %v1016
      %v1120 = vpop.f32.mrf.mxu0
      %v1121 = vadd.f32 %v904, %v1120
      %v1122 = vpop.f32.mrf.mxu0
      %v1123 = vpop.f32.mrf.mxu0
      %v1124 = vadd.f32 %v907, %v1123
      %v1125 = vpop.f32.mrf.mxu0
      %1126 = vmatprep.mubr.bf16.mxu0 0
      %1127 = vmatmul.mubr.bf16.gmra.mxu0 %v1019
      %v1128 = vpop.f32.mrf.mxu0
      %v1129 = vadd.f32 %v912, %v1128
      %v1130 = vpop.f32.mrf.mxu0
      %v1131 = vpop.f32.mrf.mxu0
      %v1132 = vadd.f32 %v915, %v1131
      %v1133 = vpop.f32.mrf.mxu0
      %1134 = vmatprep.mubr.bf16.mxu0 0
      %1135 = vmatmul.mubr.bf16.gmra.mxu0 %v1022
      %v1136 = vpop.f32.mrf.mxu0
      %v1137 = vadd.f32 %v920, %v1136
      %v1138 = vpop.f32.mrf.mxu0
      %v1139 = vpop.f32.mrf.mxu0
      %v1140 = vadd.f32 %v923, %v1139
      %v1141 = vpop.f32.mrf.mxu0
      %1142 = vmatprep.mubr.bf16.mxu0 0
      %1143 = vmatmul.mubr.bf16.gmra.mxu0 %v1025
      %v1144 = vpop.f32.mrf.mxu0
      %v1145 = vadd.f32 %v928, %v1144
      %v1146 = vpop.f32.mrf.mxu0
      %v1147 = vpop.f32.mrf.mxu0
      %v1148 = vadd.f32 %v931, %v1147
      %v1149 = vpop.f32.mrf.mxu0
      %1150 = vmatprep.mubr.bf16.mxu0 0
      %1151 = vmatmul.mubr.bf16.gmra.mxu0 %v1028
      %v1152 = vpop.f32.mrf.mxu0
      %v1153 = vadd.f32 %v936, %v1152
      %v1154 = vpop.f32.mrf.mxu0
      %v1155 = vpop.f32.mrf.mxu0
      %v1156 = vadd.f32 %v939, %v1155
      %v1157 = vpop.f32.mrf.mxu0
      %1158 = vmatprep.mubr.bf16.mxu0 0
      %1159 = vmatmul.mubr.bf16.gmra.mxu0 %v1031
      %v1160 = vpop.f32.mrf.mxu0
      %v1161 = vadd.f32 %v944, %v1160
      %v1162 = vpop.f32.mrf.mxu0
      %v1163 = vpop.f32.mrf.mxu0
      %v1164 = vadd.f32 %v947, %v1163
      %v1165 = vpop.f32.mrf.mxu0
      %1166 = vmatprep.mubr.bf16.mxu0 0
      %1167 = vmatmul.mubr.bf16.gmra.mxu0 %v1034
      %v1168 = vpop.f32.mrf.mxu0
      %v1169 = vadd.f32 %v952, %v1168
      %v1170 = vpop.f32.mrf.mxu0
      %v1171 = vpop.f32.mrf.mxu0
      %v1172 = vadd.f32 %v955, %v1171
      %v1173 = vpop.f32.mrf.mxu0
      %1174 = vmatprep.mubr.bf16.mxu0 0
      %1175 = vmatmul.mubr.bf16.gmra.mxu0 %v1037
      %v1176 = vpop.f32.mrf.mxu0
      %v1177 = vadd.f32 %v960, %v1176
      %v1178 = vpop.f32.mrf.mxu0
      %v1179 = vpop.f32.mrf.mxu0
      %v1180 = vadd.f32 %v963, %v1179
      %v1181 = vpop.f32.mrf.mxu0
      %1182 = vmatprep.mubr.bf16.mxu0 0
      %1183 = vmatmul.mubr.bf16.gmra.mxu0 %v1040
      %v1184 = vpop.f32.mrf.mxu0
      %v1185 = vadd.f32 %v968, %v1184
      %v1186 = vpop.f32.mrf.mxu0
      %v1187 = vpop.f32.mrf.mxu0
      %v1188 = vadd.f32 %v971, %v1187
      %v1189 = vpop.f32.mrf.mxu0
      %1190 = vmatprep.mubr.bf16.mxu0 0
      %1191 = vmatmul.mubr.bf16.gmra.mxu0 %v1043
      %v1192 = vpop.f32.mrf.mxu0
      %v1193 = vadd.f32 %v976, %v1192
      %v1194 = vpop.f32.mrf.mxu0
      %v1195 = vpop.f32.mrf.mxu0
      %v1196 = vadd.f32 %v979, %v1195
      %v1197 = vpop.f32.mrf.mxu0
      %1198 = vmatprep.mubr.bf16.mxu0 0
      %1199 = vmatmul.mubr.bf16.gmra.mxu0 %v1046
      %v1200 = vpop.f32.mrf.mxu0
      %v1201 = vadd.f32 %v984, %v1200
      %v1202 = vpop.f32.mrf.mxu0
      %v1203 = vpop.f32.mrf.mxu0
      %v1204 = vadd.f32 %v987, %v1203
      %v1205 = vpop.f32.mrf.mxu0
      %1206 = vmatprep.mubr.bf16.mxu0 0
      %1207 = vmatmul.mubr.bf16.gmra.mxu0 %v1049
      %v1208 = vpop.f32.mrf.mxu0
      %v1209 = vadd.f32 %v992, %v1208
      %v1210 = vpop.f32.mrf.mxu0
      %v1211 = vpop.f32.mrf.mxu0
      %v1212 = vadd.f32 %v995, %v1211
      %v1213 = vpop.f32.mrf.mxu0
      %1214 = vdwg.mxu0
      %s1215 = scalar_lea.vmem [#allocation2], 64
      %v1216 = vld [vmem:[%s1215 + $0x8] sm:$0xff]
      %v1217 = vld [vmem:[%s1215 + $0x10] sm:$0xff]
      %v1218 = vld [vmem:[%s1215 + $0x28] sm:$0xff]
      %v1219 = vld [vmem:[%s1215 + $0x30] sm:$0xff]
      %v1220 = vld [vmem:[%s1215 + $0x48] sm:$0xff]
      %v1221 = vld [vmem:[%s1215 + $0x50] sm:$0xff]
      %v1222 = vld [vmem:[%s1215 + $0x68] sm:$0xff]
      %v1223 = vld [vmem:[%s1215 + $0x70] sm:$0xff]
      %v1224 = vld [vmem:[%s1215 + $0x88] sm:$0xff]
      %v1225 = vld [vmem:[%s1215 + $0x90] sm:$0xff]
      %v1226 = vld [vmem:[%s1215 + $0xa8] sm:$0xff]
      %v1227 = vld [vmem:[%s1215 + $0xb0] sm:$0xff]
      %v1228 = vld [vmem:[%s1215 + $0xc8] sm:$0xff]
      %v1229 = vld [vmem:[%s1215 + $0xd0] sm:$0xff]
      %v1230 = vld [vmem:[%s1215 + $0xe8] sm:$0xff]
      %v1231 = vld [vmem:[%s1215 + $0xf0] sm:$0xff]
      %v1232 = vld [vmem:[%s1215 + $0x108] sm:$0xff]
      %v1233 = vld [vmem:[%s1215 + $0x110] sm:$0xff]
      %v1234 = vld [vmem:[%s1215 + $0x128] sm:$0xff]
      %v1235 = vld [vmem:[%s1215 + $0x130] sm:$0xff]
      %v1236 = vld [vmem:[%s1215 + $0x148] sm:$0xff]
      %v1237 = vld [vmem:[%s1215 + $0x150] sm:$0xff]
      %v1238 = vld [vmem:[%s1215 + $0x168] sm:$0xff]
      %v1239 = vld [vmem:[%s1215 + $0x170] sm:$0xff]
      %v1240 = vld [vmem:[%s1215 + $0x188] sm:$0xff]
      %v1241 = vld [vmem:[%s1215 + $0x190] sm:$0xff]
      %v1242 = vld [vmem:[%s1215 + $0x1a8] sm:$0xff]
      %v1243 = vld [vmem:[%s1215 + $0x1b0] sm:$0xff]
      %v1244 = vld [vmem:[%s1215 + $0x1c8] sm:$0xff]
      %v1245 = vld [vmem:[%s1215 + $0x1d0] sm:$0xff]
      %v1246 = vld [vmem:[%s1215 + $0x1e8] sm:$0xff]
      %v1247 = vld [vmem:[%s1215 + $0x1f0] sm:$0xff]
      %v1248 = vpack.c.bf16 %v1217, %v1216
      %v1249 = vpack.c.bf16 %v1219, %v1218
      %v1250 = vpack.c.bf16 %v1221, %v1220
      %v1251 = vpack.c.bf16 %v1223, %v1222
      %v1252 = vpack.c.bf16 %v1225, %v1224
      %v1253 = vpack.c.bf16 %v1227, %v1226
      %v1254 = vpack.c.bf16 %v1229, %v1228
      %v1255 = vpack.c.bf16 %v1231, %v1230
      %v1256 = vpack.c.bf16 %v1233, %v1232
      %v1257 = vpack.c.bf16 %v1235, %v1234
      %v1258 = vpack.c.bf16 %v1237, %v1236
      %v1259 = vpack.c.bf16 %v1239, %v1238
      %v1260 = vpack.c.bf16 %v1241, %v1240
      %v1261 = vpack.c.bf16 %v1243, %v1242
      %v1262 = vpack.c.bf16 %v1245, %v1244
      %v1263 = vpack.c.bf16 %v1247, %v1246
      %s1264 = scalar_lea.vmem %s1, 16
      %v1265 = vld [vmem:[%s1264] sm:$0xf]
      %v1266 = vld [vmem:[%s1264 + $0x4] sm:$0x3]
      %v1269 = vunpack.c.l.b16 %v1265
      %v1270 = vunpack.c.l.b16 %v1266
      %v1271 = vpack.c.b16 %v1270, %v1269
      %v1273 = vsel %vm312, %v1248, 0
      %v1276 = vsel %vm312, %v1249, 0
      %v1279 = vsel %vm312, %v1250, 0
      %v1282 = vsel %vm312, %v1251, 0
      %v1285 = vsel %vm312, %v1252, 0
      %v1288 = vsel %vm312, %v1253, 0
      %v1291 = vsel %vm312, %v1254, 0
      %v1294 = vsel %vm312, %v1255, 0
      %v1297 = vsel %vm312, %v1256, 0
      %v1300 = vsel %vm312, %v1257, 0
      %v1303 = vsel %vm312, %v1258, 0
      %v1306 = vsel %vm312, %v1259, 0
      %v1309 = vsel %vm312, %v1260, 0
      %v1312 = vsel %vm312, %v1261, 0
      %v1315 = vsel %vm312, %v1262, 0
      %v1318 = vsel %vm312, %v1263, 0
      %v1321 = vsel %vm833, %v1271, 0
      %1323 = vmatprep.subr.bf16.mxu0 0
      %1324 = vmatpush1.bf16.msra.mxu0 0
      %1325 = vmatprep.subr.bf16.mxu0 0
      %1326 = vmatpush1.bf16.msra.mxu0 0
      %1327 = vmatprep.subr.bf16.mxu0 0
      %1328 = vmatpush1.bf16.msra.mxu0 0
      %1329 = vmatprep.subr.bf16.mxu0 0
      %1330 = vmatpush1.bf16.msra.mxu0 0
      %1331 = vmatprep.subr.bf16.mxu0 0
      %1332 = vmatpush1.bf16.msra.mxu0 0
      %1333 = vmatprep.subr.bf16.mxu0 0
      %1334 = vmatpush1.bf16.msra.mxu0 0
      %1335 = vmatprep.subr.bf16.mxu0 0
      %1336 = vmatpush1.bf16.msra.mxu0 0
      %1337 = vmatprep.subr.bf16.mxu0 0
      %1338 = vmatpush1.bf16.msra.mxu0 %v1321
      %1339 = vmatprep.subr.bf16.mxu0 0
      %1340 = vmatpush2.bf16.msra.mxu0 0
      %1341 = vmatprep.subr.bf16.mxu0 0
      %1342 = vmatpush2.bf16.msra.mxu0 0
      %1343 = vmatprep.subr.bf16.mxu0 0
      %1344 = vmatpush2.bf16.msra.mxu0 0
      %1345 = vmatprep.subr.bf16.mxu0 0
      %1346 = vmatpush2.bf16.msra.mxu0 0
      %1347 = vmatprep.subr.bf16.mxu0 0
      %1348 = vmatpush2.bf16.msra.mxu0 0
      %1349 = vmatprep.subr.bf16.mxu0 0
      %1350 = vmatpush2.bf16.msra.mxu0 0
      %1351 = vmatprep.subr.bf16.mxu0 0
      %1352 = vmatpush2.bf16.msra.mxu0 0
      %1353 = vmatprep.subr.bf16.mxu0 0
      %1354 = vmatpush2.bf16.msra.mxu0 0
      %1355 = vmatprep.mubr.bf16.mxu0 0
      %1356 = vmatmul.mubr.bf16.gmra.mxu0 %v1273
      %v1357 = vpop.f32.mrf.mxu0
      %v1358 = vadd.f32 0.0, %v1357
      %v1359 = vpop.f32.mrf.mxu0
      %v1360 = vpop.f32.mrf.mxu0
      %v1361 = vadd.f32 0.0, %v1360
      %v1362 = vpop.f32.mrf.mxu0
      %1363 = vmatprep.mubr.bf16.mxu0 0
      %1364 = vmatmul.mubr.bf16.gmra.mxu0 %v1276
      %v1365 = vpop.f32.mrf.mxu0
      %v1366 = vadd.f32 0.0, %v1365
      %v1367 = vpop.f32.mrf.mxu0
      %v1368 = vpop.f32.mrf.mxu0
      %v1369 = vadd.f32 0.0, %v1368
      %v1370 = vpop.f32.mrf.mxu0
      %1371 = vmatprep.mubr.bf16.mxu0 0
      %1372 = vmatmul.mubr.bf16.gmra.mxu0 %v1279
      %v1373 = vpop.f32.mrf.mxu0
      %v1374 = vadd.f32 0.0, %v1373
      %v1375 = vpop.f32.mrf.mxu0
      %v1376 = vpop.f32.mrf.mxu0
      %v1377 = vadd.f32 0.0, %v1376
      %v1378 = vpop.f32.mrf.mxu0
      %1379 = vmatprep.mubr.bf16.mxu0 0
      %1380 = vmatmul.mubr.bf16.gmra.mxu0 %v1282
      %v1381 = vpop.f32.mrf.mxu0
      %v1382 = vadd.f32 0.0, %v1381
      %v1383 = vpop.f32.mrf.mxu0
      %v1384 = vpop.f32.mrf.mxu0
      %v1385 = vadd.f32 0.0, %v1384
      %v1386 = vpop.f32.mrf.mxu0
      %1387 = vmatprep.mubr.bf16.mxu0 0
      %1388 = vmatmul.mubr.bf16.gmra.mxu0 %v1285
      %v1389 = vpop.f32.mrf.mxu0
      %v1390 = vadd.f32 0.0, %v1389
      %v1391 = vpop.f32.mrf.mxu0
      %v1392 = vpop.f32.mrf.mxu0
      %v1393 = vadd.f32 0.0, %v1392
      %v1394 = vpop.f32.mrf.mxu0
      %1395 = vmatprep.mubr.bf16.mxu0 0
      %1396 = vmatmul.mubr.bf16.gmra.mxu0 %v1288
      %v1397 = vpop.f32.mrf.mxu0
      %v1398 = vadd.f32 0.0, %v1397
      %v1399 = vpop.f32.mrf.mxu0
      %v1400 = vpop.f32.mrf.mxu0
      %v1401 = vadd.f32 0.0, %v1400
      %v1402 = vpop.f32.mrf.mxu0
      %1403 = vmatprep.mubr.bf16.mxu0 0
      %1404 = vmatmul.mubr.bf16.gmra.mxu0 %v1291
      %v1405 = vpop.f32.mrf.mxu0
      %v1406 = vadd.f32 0.0, %v1405
      %v1407 = vpop.f32.mrf.mxu0
      %v1408 = vpop.f32.mrf.mxu0
      %v1409 = vadd.f32 0.0, %v1408
      %v1410 = vpop.f32.mrf.mxu0
      %1411 = vmatprep.mubr.bf16.mxu0 0
      %1412 = vmatmul.mubr.bf16.gmra.mxu0 %v1294
      %v1413 = vpop.f32.mrf.mxu0
      %v1414 = vadd.f32 0.0, %v1413
      %v1415 = vpop.f32.mrf.mxu0
      %v1416 = vpop.f32.mrf.mxu0
      %v1417 = vadd.f32 0.0, %v1416
      %v1418 = vpop.f32.mrf.mxu0
      %1419 = vmatprep.mubr.bf16.mxu0 0
      %1420 = vmatmul.mubr.bf16.gmra.mxu0 %v1297
      %v1421 = vpop.f32.mrf.mxu0
      %v1422 = vadd.f32 0.0, %v1421
      %v1423 = vpop.f32.mrf.mxu0
      %v1424 = vpop.f32.mrf.mxu0
      %v1425 = vadd.f32 0.0, %v1424
      %v1426 = vpop.f32.mrf.mxu0
      %1427 = vmatprep.mubr.bf16.mxu0 0
      %1428 = vmatmul.mubr.bf16.gmra.mxu0 %v1300
      %v1429 = vpop.f32.mrf.mxu0
      %v1430 = vadd.f32 0.0, %v1429
      %v1431 = vpop.f32.mrf.mxu0
      %v1432 = vpop.f32.mrf.mxu0
      %v1433 = vadd.f32 0.0, %v1432
      %v1434 = vpop.f32.mrf.mxu0
      %1435 = vmatprep.mubr.bf16.mxu0 0
      %1436 = vmatmul.mubr.bf16.gmra.mxu0 %v1303
      %v1437 = vpop.f32.mrf.mxu0
      %v1438 = vadd.f32 0.0, %v1437
      %v1439 = vpop.f32.mrf.mxu0
      %v1440 = vpop.f32.mrf.mxu0
      %v1441 = vadd.f32 0.0, %v1440
      %v1442 = vpop.f32.mrf.mxu0
      %1443 = vmatprep.mubr.bf16.mxu0 0
      %1444 = vmatmul.mubr.bf16.gmra.mxu0 %v1306
      %v1445 = vpop.f32.mrf.mxu0
      %v1446 = vadd.f32 0.0, %v1445
      %v1447 = vpop.f32.mrf.mxu0
      %v1448 = vpop.f32.mrf.mxu0
      %v1449 = vadd.f32 0.0, %v1448
      %v1450 = vpop.f32.mrf.mxu0
      %1451 = vmatprep.mubr.bf16.mxu0 0
      %1452 = vmatmul.mubr.bf16.gmra.mxu0 %v1309
      %v1453 = vpop.f32.mrf.mxu0
      %v1454 = vadd.f32 0.0, %v1453
      %v1455 = vpop.f32.mrf.mxu0
      %v1456 = vpop.f32.mrf.mxu0
      %v1457 = vadd.f32 0.0, %v1456
      %v1458 = vpop.f32.mrf.mxu0
      %1459 = vmatprep.mubr.bf16.mxu0 0
      %1460 = vmatmul.mubr.bf16.gmra.mxu0 %v1312
      %v1461 = vpop.f32.mrf.mxu0
      %v1462 = vadd.f32 0.0, %v1461
      %v1463 = vpop.f32.mrf.mxu0
      %v1464 = vpop.f32.mrf.mxu0
      %v1465 = vadd.f32 0.0, %v1464
      %v1466 = vpop.f32.mrf.mxu0
      %1467 = vmatprep.mubr.bf16.mxu0 0
      %1468 = vmatmul.mubr.bf16.gmra.mxu0 %v1315
      %v1469 = vpop.f32.mrf.mxu0
      %v1470 = vadd.f32 0.0, %v1469
      %v1471 = vpop.f32.mrf.mxu0
      %v1472 = vpop.f32.mrf.mxu0
      %v1473 = vadd.f32 0.0, %v1472
      %v1474 = vpop.f32.mrf.mxu0
      %1475 = vmatprep.mubr.bf16.mxu0 0
      %1476 = vmatmul.mubr.bf16.gmra.mxu0 %v1318
      %v1477 = vpop.f32.mrf.mxu0
      %v1478 = vadd.f32 0.0, %v1477
      %v1479 = vpop.f32.mrf.mxu0
      %v1480 = vpop.f32.mrf.mxu0
      %v1481 = vadd.f32 0.0, %v1480
      %v1482 = vpop.f32.mrf.mxu0
      %1483 = vdwg.mxu0
      %v1484 = vadd.f32 %v1089, %v1358
      %v1485 = vadd.f32 %v1092, %v1361
      %v1486 = vadd.f32 %v1097, %v1366
      %v1487 = vadd.f32 %v1100, %v1369
      %v1488 = vadd.f32 %v1105, %v1374
      %v1489 = vadd.f32 %v1108, %v1377
      %v1490 = vadd.f32 %v1113, %v1382
      %v1491 = vadd.f32 %v1116, %v1385
      %v1492 = vadd.f32 %v1121, %v1390
      %v1493 = vadd.f32 %v1124, %v1393
      %v1494 = vadd.f32 %v1129, %v1398
      %v1495 = vadd.f32 %v1132, %v1401
      %v1496 = vadd.f32 %v1137, %v1406
      %v1497 = vadd.f32 %v1140, %v1409
      %v1498 = vadd.f32 %v1145, %v1414
      %v1499 = vadd.f32 %v1148, %v1417
      %v1500 = vadd.f32 %v1153, %v1422
      %v1501 = vadd.f32 %v1156, %v1425
      %v1502 = vadd.f32 %v1161, %v1430
      %v1503 = vadd.f32 %v1164, %v1433
      %v1504 = vadd.f32 %v1169, %v1438
      %v1505 = vadd.f32 %v1172, %v1441
      %v1506 = vadd.f32 %v1177, %v1446
      %v1507 = vadd.f32 %v1180, %v1449
      %v1508 = vadd.f32 %v1185, %v1454
      %v1509 = vadd.f32 %v1188, %v1457
      %v1510 = vadd.f32 %v1193, %v1462
      %v1511 = vadd.f32 %v1196, %v1465
      %v1512 = vadd.f32 %v1201, %v1470
      %v1513 = vadd.f32 %v1204, %v1473
      %v1514 = vadd.f32 %v1209, %v1478
      %v1515 = vadd.f32 %v1212, %v1481
      %v1516 = vld [vmem:[%s2] sm:$0x1]
      %v1518 = vlaneseq
      %v1519 = vshrl.u32 %v1518, 7
      %v1520 = vsub.s32 0, %v1519
      %v1521 = vrot.slane %v1516, %v1520
      %v1523 = vadd.f32 %v1484, %v1521
      %v1524 = vadd.f32 %v1485, %v1521
      %v1525 = vadd.f32 %v1486, %v1521
      %v1526 = vadd.f32 %v1487, %v1521
      %v1527 = vadd.f32 %v1488, %v1521
      %v1528 = vadd.f32 %v1489, %v1521
      %v1529 = vadd.f32 %v1490, %v1521
      %v1530 = vadd.f32 %v1491, %v1521
      %v1531 = vadd.f32 %v1492, %v1521
      %v1532 = vadd.f32 %v1493, %v1521
      %v1533 = vadd.f32 %v1494, %v1521
      %v1534 = vadd.f32 %v1495, %v1521
      %v1535 = vadd.f32 %v1496, %v1521
      %v1536 = vadd.f32 %v1497, %v1521
      %v1537 = vadd.f32 %v1498, %v1521
      %v1538 = vadd.f32 %v1499, %v1521
      %v1539 = vadd.f32 %v1500, %v1521
      %v1540 = vadd.f32 %v1501, %v1521
      %v1541 = vadd.f32 %v1502, %v1521
      %v1542 = vadd.f32 %v1503, %v1521
      %v1543 = vadd.f32 %v1504, %v1521
      %v1544 = vadd.f32 %v1505, %v1521
      %v1545 = vadd.f32 %v1506, %v1521
      %v1546 = vadd.f32 %v1507, %v1521
      %v1547 = vadd.f32 %v1508, %v1521
      %v1548 = vadd.f32 %v1509, %v1521
      %v1549 = vadd.f32 %v1510, %v1521
      %v1550 = vadd.f32 %v1511, %v1521
      %v1551 = vadd.f32 %v1512, %v1521
      %v1552 = vadd.f32 %v1513, %v1521
      %v1553 = vadd.f32 %v1514, %v1521
      %v1554 = vadd.f32 %v1515, %v1521
      %1555 = vst [vmem:[#allocation3 + $0x10] sm:$0xff] 0.0
      %vm1556 = vcmask 523264
      %1557 = vst.msk [vmem:[#allocation3 + $0x18] sm:$0xff] %vm1556, 0.0
      %1558 = vst [vmem:[#allocation3 + $0x20] sm:$0xff] 0.0
      %1559 = vst.msk [vmem:[#allocation3 + $0x28] sm:$0xff] %vm1556, 0.0
      %s1560 = scalar_lea.vmem [#allocation3], 1088
      %1561 = vst [vmem:[%s1560 + $0x10] sm:$0xff] 0.0
      %1562 = vst.msk [vmem:[%s1560 + $0x18] sm:$0xff] %vm1556, 0.0
      %1563 = vst [vmem:[%s1560 + $0x20] sm:$0xff] 0.0
      %1564 = vst.msk [vmem:[%s1560 + $0x28] sm:$0xff] %vm1556, 0.0
      %v1565 = vlaneseq
      %vm1566 = vcmp.ge.s32.totalorder %v1565, 0
      %vm1567 = vcmp.lt.s32.totalorder %v1565, 192
      %vm1568 = vmand %vm1566, %vm1567
      %s1569 = scalar_lea.vmem [#allocation3], 16
      %1570 = vst.msk [vmem:[%s1569] ss:$8 sm:$0x3] %vm1568, 0.0
      %1571 = vst.msk [vmem:[%s1569] ss:$8 sm:$0x0] %vm1568, 0.0
      %s1572 = scalar_lea.vmem [#allocation3], 80
      %1573 = vst.msk [vmem:[%s1572] ss:$8 sm:$0x3] %vm1568, 0.0
      %1574 = vst.msk [vmem:[%s1572] ss:$8 sm:$0x0] %vm1568, 0.0
      %s1575 = scalar_lea.vmem [#allocation3], 144
      %1576 = vst.msk [vmem:[%s1575] ss:$8 sm:$0x3] %vm1568, 0.0
      %1577 = vst.msk [vmem:[%s1575] ss:$8 sm:$0x0] %vm1568, 0.0
      %s1578 = scalar_lea.vmem [#allocation3], 208
      %1579 = vst.msk [vmem:[%s1578] ss:$8 sm:$0x3] %vm1568, 0.0
      %1580 = vst.msk [vmem:[%s1578] ss:$8 sm:$0x0] %vm1568, 0.0
      %s1581 = scalar_lea.vmem [#allocation3], 272
      %1582 = vst.msk [vmem:[%s1581] ss:$8 sm:$0x3] %vm1568, 0.0
      %1583 = vst.msk [vmem:[%s1581] ss:$8 sm:$0x0] %vm1568, 0.0
      %s1584 = scalar_lea.vmem [#allocation3], 336
      %1585 = vst.msk [vmem:[%s1584] ss:$8 sm:$0x3] %vm1568, 0.0
      %1586 = vst.msk [vmem:[%s1584] ss:$8 sm:$0x0] %vm1568, 0.0
      %s1587 = scalar_lea.vmem [#allocation3], 400
      %1588 = vst.msk [vmem:[%s1587] ss:$8 sm:$0x3] %vm1568, 0.0
      %1589 = vst.msk [vmem:[%s1587] ss:$8 sm:$0x0] %vm1568, 0.0
      %s1590 = scalar_lea.vmem [#allocation3], 464
      %1591 = vst.msk [vmem:[%s1590] ss:$8 sm:$0x3] %vm1568, 0.0
      %1592 = vst.msk [vmem:[%s1590] ss:$8 sm:$0x0] %vm1568, 0.0
      %s1593 = scalar_lea.vmem [#allocation3], 528
      %1594 = vst.msk [vmem:[%s1593] ss:$8 sm:$0x3] %vm1568, 0.0
      %1595 = vst.msk [vmem:[%s1593] ss:$8 sm:$0x0] %vm1568, 0.0
      %s1596 = scalar_lea.vmem [#allocation3], 592
      %1597 = vst.msk [vmem:[%s1596] ss:$8 sm:$0x3] %vm1568, 0.0
      %1598 = vst.msk [vmem:[%s1596] ss:$8 sm:$0x0] %vm1568, 0.0
      %s1599 = scalar_lea.vmem [#allocation3], 656
      %1600 = vst.msk [vmem:[%s1599] ss:$8 sm:$0x3] %vm1568, 0.0
      %1601 = vst.msk [vmem:[%s1599] ss:$8 sm:$0x0] %vm1568, 0.0
      %s1602 = scalar_lea.vmem [#allocation3], 720
      %1603 = vst.msk [vmem:[%s1602] ss:$8 sm:$0x3] %vm1568, 0.0
      %1604 = vst.msk [vmem:[%s1602] ss:$8 sm:$0x0] %vm1568, 0.0
      %s1605 = scalar_lea.vmem [#allocation3], 784
      %1606 = vst.msk [vmem:[%s1605] ss:$8 sm:$0x3] %vm1568, 0.0
      %1607 = vst.msk [vmem:[%s1605] ss:$8 sm:$0x0] %vm1568, 0.0
      %s1608 = scalar_lea.vmem [#allocation3], 848
      %1609 = vst.msk [vmem:[%s1608] ss:$8 sm:$0x3] %vm1568, 0.0
      %1610 = vst.msk [vmem:[%s1608] ss:$8 sm:$0x0] %vm1568, 0.0
      %s1611 = scalar_lea.vmem [#allocation3], 912
      %1612 = vst.msk [vmem:[%s1611] ss:$8 sm:$0x3] %vm1568, 0.0
      %1613 = vst.msk [vmem:[%s1611] ss:$8 sm:$0x0] %vm1568, 0.0
      %s1614 = scalar_lea.vmem [#allocation3], 976
      %1615 = vst.msk [vmem:[%s1614] ss:$8 sm:$0x3] %vm1568, 0.0
      %1616 = vst.msk [vmem:[%s1614] ss:$8 sm:$0x0] %vm1568, 0.0
      %s1617 = scalar_lea.vmem [#allocation3], 1040
      %1618 = vst.msk [vmem:[%s1617] ss:$8 sm:$0x3] %vm1568, 0.0
      %1619 = vst.msk [vmem:[%s1617] ss:$8 sm:$0x0] %vm1568, 0.0
      %s1620 = scalar_lea.vmem [#allocation3], 1104
      %1621 = vst.msk [vmem:[%s1620] ss:$8 sm:$0x3] %vm1568, 0.0
      %1622 = vst.msk [vmem:[%s1620] ss:$8 sm:$0x0] %vm1568, 0.0
      %s1623 = scalar_lea.vmem [#allocation3], 39
      %1624 = vst.msk [vmem:[%s1623] ss:$8 sm:$0x3] %vm1568, 0.0
      %1625 = vst.msk [vmem:[%s1623] ss:$8 sm:$0x0] %vm1568, 0.0
      %s1626 = scalar_lea.vmem [#allocation3], 103
      %1627 = vst.msk [vmem:[%s1626] ss:$8 sm:$0x3] %vm1568, 0.0
      %1628 = vst.msk [vmem:[%s1626] ss:$8 sm:$0x0] %vm1568, 0.0
      %s1629 = scalar_lea.vmem [#allocation3], 167
      %1630 = vst.msk [vmem:[%s1629] ss:$8 sm:$0x3] %vm1568, 0.0
      %1631 = vst.msk [vmem:[%s1629] ss:$8 sm:$0x0] %vm1568, 0.0
      %s1632 = scalar_lea.vmem [#allocation3], 231
      %1633 = vst.msk [vmem:[%s1632] ss:$8 sm:$0x3] %vm1568, 0.0
      %1634 = vst.msk [vmem:[%s1632] ss:$8 sm:$0x0] %vm1568, 0.0
      %s1635 = scalar_lea.vmem [#allocation3], 295
      %1636 = vst.msk [vmem:[%s1635] ss:$8 sm:$0x3] %vm1568, 0.0
      %1637 = vst.msk [vmem:[%s1635] ss:$8 sm:$0x0] %vm1568, 0.0
      %s1638 = scalar_lea.vmem [#allocation3], 359
      %1639 = vst.msk [vmem:[%s1638] ss:$8 sm:$0x3] %vm1568, 0.0
      %1640 = vst.msk [vmem:[%s1638] ss:$8 sm:$0x0] %vm1568, 0.0
      %s1641 = scalar_lea.vmem [#allocation3], 423
      %1642 = vst.msk [vmem:[%s1641] ss:$8 sm:$0x3] %vm1568, 0.0
      %1643 = vst.msk [vmem:[%s1641] ss:$8 sm:$0x0] %vm1568, 0.0
      %s1644 = scalar_lea.vmem [#allocation3], 487
      %1645 = vst.msk [vmem:[%s1644] ss:$8 sm:$0x3] %vm1568, 0.0
      %1646 = vst.msk [vmem:[%s1644] ss:$8 sm:$0x0] %vm1568, 0.0
      %s1647 = scalar_lea.vmem [#allocation3], 551
      %1648 = vst.msk [vmem:[%s1647] ss:$8 sm:$0x3] %vm1568, 0.0
      %1649 = vst.msk [vmem:[%s1647] ss:$8 sm:$0x0] %vm1568, 0.0
      %s1650 = scalar_lea.vmem [#allocation3], 615
      %1651 = vst.msk [vmem:[%s1650] ss:$8 sm:$0x3] %vm1568, 0.0
      %1652 = vst.msk [vmem:[%s1650] ss:$8 sm:$0x0] %vm1568, 0.0
      %s1653 = scalar_lea.vmem [#allocation3], 679
      %1654 = vst.msk [vmem:[%s1653] ss:$8 sm:$0x3] %vm1568, 0.0
      %1655 = vst.msk [vmem:[%s1653] ss:$8 sm:$0x0] %vm1568, 0.0
      %s1656 = scalar_lea.vmem [#allocation3], 743
      %1657 = vst.msk [vmem:[%s1656] ss:$8 sm:$0x3] %vm1568, 0.0
      %1658 = vst.msk [vmem:[%s1656] ss:$8 sm:$0x0] %vm1568, 0.0
      %s1659 = scalar_lea.vmem [#allocation3], 807
      %1660 = vst.msk [vmem:[%s1659] ss:$8 sm:$0x3] %vm1568, 0.0
      %1661 = vst.msk [vmem:[%s1659] ss:$8 sm:$0x0] %vm1568, 0.0
      %s1662 = scalar_lea.vmem [#allocation3], 871
      %1663 = vst.msk [vmem:[%s1662] ss:$8 sm:$0x3] %vm1568, 0.0
      %1664 = vst.msk [vmem:[%s1662] ss:$8 sm:$0x0] %vm1568, 0.0
      %s1665 = scalar_lea.vmem [#allocation3], 935
      %1666 = vst.msk [vmem:[%s1665] ss:$8 sm:$0x3] %vm1568, 0.0
      %1667 = vst.msk [vmem:[%s1665] ss:$8 sm:$0x0] %vm1568, 0.0
      %s1668 = scalar_lea.vmem [#allocation3], 999
      %1669 = vst.msk [vmem:[%s1668] ss:$8 sm:$0x3] %vm1568, 0.0
      %1670 = vst.msk [vmem:[%s1668] ss:$8 sm:$0x0] %vm1568, 0.0
      %s1671 = scalar_lea.vmem [#allocation3], 1063
      %1672 = vst.msk [vmem:[%s1671] ss:$8 sm:$0x3] %vm1568, 0.0
      %1673 = vst.msk [vmem:[%s1671] ss:$8 sm:$0x0] %vm1568, 0.0
      %s1674 = scalar_lea.vmem [#allocation3], 1127
      %1675 = vst.msk [vmem:[%s1674] ss:$8 sm:$0x3] %vm1568, 0.0
      %1676 = vst.msk [vmem:[%s1674] ss:$8 sm:$0x0] %vm1568, 0.0
      %vm1709 = vcmask 1040384
      %v1710 = vrot.slane %v1523, 7
      %v1711 = vrot.slane %v1524, 7
      %v1712 = vsel %vm1709, %v1710, %v1711
      %v1713 = vrot.slane %v1525, 7
      %v1714 = vrot.slane %v1526, 7
      %v1715 = vsel %vm1709, %v1713, %v1714
      %v1716 = vrot.slane %v1527, 7
      %v1717 = vrot.slane %v1528, 7
      %v1718 = vsel %vm1709, %v1716, %v1717
      %v1719 = vrot.slane %v1529, 7
      %v1720 = vrot.slane %v1530, 7
      %v1721 = vsel %vm1709, %v1719, %v1720
      %v1722 = vrot.slane %v1531, 7
      %v1723 = vrot.slane %v1532, 7
      %v1724 = vsel %vm1709, %v1722, %v1723
      %v1725 = vrot.slane %v1533, 7
      %v1726 = vrot.slane %v1534, 7
      %v1727 = vsel %vm1709, %v1725, %v1726
      %v1728 = vrot.slane %v1535, 7
      %v1729 = vrot.slane %v1536, 7
      %v1730 = vsel %vm1709, %v1728, %v1729
      %v1731 = vrot.slane %v1537, 7
      %v1732 = vrot.slane %v1538, 7
      %v1733 = vsel %vm1709, %v1731, %v1732
      %v1734 = vrot.slane %v1539, 7
      %v1735 = vrot.slane %v1540, 7
      %v1736 = vsel %vm1709, %v1734, %v1735
      %v1737 = vrot.slane %v1541, 7
      %v1738 = vrot.slane %v1542, 7
      %v1739 = vsel %vm1709, %v1737, %v1738
      %v1740 = vrot.slane %v1543, 7
      %v1741 = vrot.slane %v1544, 7
      %v1742 = vsel %vm1709, %v1740, %v1741
      %v1743 = vrot.slane %v1545, 7
      %v1744 = vrot.slane %v1546, 7
      %v1745 = vsel %vm1709, %v1743, %v1744
      %v1746 = vrot.slane %v1547, 7
      %v1747 = vrot.slane %v1548, 7
      %v1748 = vsel %vm1709, %v1746, %v1747
      %v1749 = vrot.slane %v1549, 7
      %v1750 = vrot.slane %v1550, 7
      %v1751 = vsel %vm1709, %v1749, %v1750
      %v1752 = vrot.slane %v1551, 7
      %v1753 = vrot.slane %v1552, 7
      %v1754 = vsel %vm1709, %v1752, %v1753
      %v1755 = vrot.slane %v1553, 7
      %v1756 = vrot.slane %v1554, 7
      %v1757 = vsel %vm1709, %v1755, %v1756
      %s1806 = scalar_lea.vmem [#allocation3], 64
      %vm1807 = vcmask 523265
      %1808 = vst.msk [vmem:[%s1806 + $0x10] sm:$0xfe] %vm1807, %v1710
      %1809 = vst.msk [vmem:[%s1806 + $0x20] sm:$0xff] %vm1556, %v1712
      %vm1810 = vcmask 516096
      %1811 = vst.msk [vmem:[%s1806 + $0x30] sm:$0x1] %vm1810, %v1711
      %1812 = vst.msk [vmem:[%s1806 + $0x50] sm:$0xfe] %vm1807, %v1713
      %1813 = vst.msk [vmem:[%s1806 + $0x60] sm:$0xff] %vm1556, %v1715
      %1814 = vst.msk [vmem:[%s1806 + $0x70] sm:$0x1] %vm1810, %v1714
      %1815 = vst.msk [vmem:[%s1806 + $0x90] sm:$0xfe] %vm1807, %v1716
      %1816 = vst.msk [vmem:[%s1806 + $0xa0] sm:$0xff] %vm1556, %v1718
      %1817 = vst.msk [vmem:[%s1806 + $0xb0] sm:$0x1] %vm1810, %v1717
      %1818 = vst.msk [vmem:[%s1806 + $0xd0] sm:$0xfe] %vm1807, %v1719
      %1819 = vst.msk [vmem:[%s1806 + $0xe0] sm:$0xff] %vm1556, %v1721
      %1820 = vst.msk [vmem:[%s1806 + $0xf0] sm:$0x1] %vm1810, %v1720
      %1821 = vst.msk [vmem:[%s1806 + $0x110] sm:$0xfe] %vm1807, %v1722
      %1822 = vst.msk [vmem:[%s1806 + $0x120] sm:$0xff] %vm1556, %v1724
      %1823 = vst.msk [vmem:[%s1806 + $0x130] sm:$0x1] %vm1810, %v1723
      %1824 = vst.msk [vmem:[%s1806 + $0x150] sm:$0xfe] %vm1807, %v1725
      %1825 = vst.msk [vmem:[%s1806 + $0x160] sm:$0xff] %vm1556, %v1727
      %1826 = vst.msk [vmem:[%s1806 + $0x170] sm:$0x1] %vm1810, %v1726
      %1827 = vst.msk [vmem:[%s1806 + $0x190] sm:$0xfe] %vm1807, %v1728
      %1828 = vst.msk [vmem:[%s1806 + $0x1a0] sm:$0xff] %vm1556, %v1730
      %1829 = vst.msk [vmem:[%s1806 + $0x1b0] sm:$0x1] %vm1810, %v1729
      %1830 = vst.msk [vmem:[%s1806 + $0x1d0] sm:$0xfe] %vm1807, %v1731
      %1831 = vst.msk [vmem:[%s1806 + $0x1e0] sm:$0xff] %vm1556, %v1733
      %1832 = vst.msk [vmem:[%s1806 + $0x1f0] sm:$0x1] %vm1810, %v1732
      %1833 = vst.msk [vmem:[%s1806 + $0x210] sm:$0xfe] %vm1807, %v1734
      %1834 = vst.msk [vmem:[%s1806 + $0x220] sm:$0xff] %vm1556, %v1736
      %1835 = vst.msk [vmem:[%s1806 + $0x230] sm:$0x1] %vm1810, %v1735
      %1836 = vst.msk [vmem:[%s1806 + $0x250] sm:$0xfe] %vm1807, %v1737
      %1837 = vst.msk [vmem:[%s1806 + $0x260] sm:$0xff] %vm1556, %v1739
      %1838 = vst.msk [vmem:[%s1806 + $0x270] sm:$0x1] %vm1810, %v1738
      %1839 = vst.msk [vmem:[%s1806 + $0x290] sm:$0xfe] %vm1807, %v1740
      %1840 = vst.msk [vmem:[%s1806 + $0x2a0] sm:$0xff] %vm1556, %v1742
      %1841 = vst.msk [vmem:[%s1806 + $0x2b0] sm:$0x1] %vm1810, %v1741
      %1842 = vst.msk [vmem:[%s1806 + $0x2d0] sm:$0xfe] %vm1807, %v1743
      %1843 = vst.msk [vmem:[%s1806 + $0x2e0] sm:$0xff] %vm1556, %v1745
      %1844 = vst.msk [vmem:[%s1806 + $0x2f0] sm:$0x1] %vm1810, %v1744
      %1845 = vst.msk [vmem:[%s1806 + $0x310] sm:$0xfe] %vm1807, %v1746
      %1846 = vst.msk [vmem:[%s1806 + $0x320] sm:$0xff] %vm1556, %v1748
      %1847 = vst.msk [vmem:[%s1806 + $0x330] sm:$0x1] %vm1810, %v1747
      %1848 = vst.msk [vmem:[%s1806 + $0x350] sm:$0xfe] %vm1807, %v1749
      %1849 = vst.msk [vmem:[%s1806 + $0x360] sm:$0xff] %vm1556, %v1751
      %1850 = vst.msk [vmem:[%s1806 + $0x370] sm:$0x1] %vm1810, %v1750
      %1851 = vst.msk [vmem:[%s1806 + $0x390] sm:$0xfe] %vm1807, %v1752
      %1852 = vst.msk [vmem:[%s1806 + $0x3a0] sm:$0xff] %vm1556, %v1754
      %1853 = vst.msk [vmem:[%s1806 + $0x3b0] sm:$0x1] %vm1810, %v1753
      %1854 = vst.msk [vmem:[%s1806 + $0x3d0] sm:$0xfe] %vm1807, %v1755
      %1855 = vst.msk [vmem:[%s1806 + $0x3e0] sm:$0xff] %vm1556, %v1757
      %1856 = vst.msk [vmem:[%s1806 + $0x3f0] sm:$0x1] %vm1810, %v1756
      %1857 = vrot.lane.b32.xlu0 %v1523, 64
      %v1858 = vpop.permute.xlu0 %1857
      %1859 = vrot.lane.b32.xlu0 %v1524, 64
      %v1860 = vpop.permute.xlu0 %1859
      %1861 = vrot.lane.b32.xlu0 %v1525, 64
      %v1862 = vpop.permute.xlu0 %1861
      %1863 = vrot.lane.b32.xlu0 %v1526, 64
      %v1864 = vpop.permute.xlu0 %1863
      %1865 = vrot.lane.b32.xlu0 %v1527, 64
      %v1866 = vpop.permute.xlu0 %1865
      %1867 = vrot.lane.b32.xlu0 %v1528, 64
      %v1868 = vpop.permute.xlu0 %1867
      %1869 = vrot.lane.b32.xlu0 %v1529, 64
      %v1870 = vpop.permute.xlu0 %1869
      %1871 = vrot.lane.b32.xlu0 %v1530, 64
      %v1872 = vpop.permute.xlu0 %1871
      %1873 = vrot.lane.b32.xlu0 %v1531, 64
      %v1874 = vpop.permute.xlu0 %1873
      %1875 = vrot.lane.b32.xlu0 %v1532, 64
      %v1876 = vpop.permute.xlu0 %1875
      %1877 = vrot.lane.b32.xlu0 %v1533, 64
      %v1878 = vpop.permute.xlu0 %1877
      %1879 = vrot.lane.b32.xlu0 %v1534, 64
      %v1880 = vpop.permute.xlu0 %1879
      %1881 = vrot.lane.b32.xlu0 %v1535, 64
      %v1882 = vpop.permute.xlu0 %1881
      %1883 = vrot.lane.b32.xlu0 %v1536, 64
      %v1884 = vpop.permute.xlu0 %1883
      %1885 = vrot.lane.b32.xlu0 %v1537, 64
      %v1886 = vpop.permute.xlu0 %1885
      %1887 = vrot.lane.b32.xlu0 %v1538, 64
      %v1888 = vpop.permute.xlu0 %1887
      %1889 = vrot.lane.b32.xlu0 %v1539, 64
      %v1890 = vpop.permute.xlu0 %1889
      %1891 = vrot.lane.b32.xlu0 %v1540, 64
      %v1892 = vpop.permute.xlu0 %1891
      %1893 = vrot.lane.b32.xlu0 %v1541, 64
      %v1894 = vpop.permute.xlu0 %1893
      %1895 = vrot.lane.b32.xlu0 %v1542, 64
      %v1896 = vpop.permute.xlu0 %1895
      %1897 = vrot.lane.b32.xlu0 %v1543, 64
      %v1898 = vpop.permute.xlu0 %1897
      %1899 = vrot.lane.b32.xlu0 %v1544, 64
      %v1900 = vpop.permute.xlu0 %1899
      %1901 = vrot.lane.b32.xlu0 %v1545, 64
      %v1902 = vpop.permute.xlu0 %1901
      %1903 = vrot.lane.b32.xlu0 %v1546, 64
      %v1904 = vpop.permute.xlu0 %1903
      %1905 = vrot.lane.b32.xlu0 %v1547, 64
      %v1906 = vpop.permute.xlu0 %1905
      %1907 = vrot.lane.b32.xlu0 %v1548, 64
      %v1908 = vpop.permute.xlu0 %1907
      %1909 = vrot.lane.b32.xlu0 %v1549, 64
      %v1910 = vpop.permute.xlu0 %1909
      %1911 = vrot.lane.b32.xlu0 %v1550, 64
      %v1912 = vpop.permute.xlu0 %1911
      %1913 = vrot.lane.b32.xlu0 %v1551, 64
      %v1914 = vpop.permute.xlu0 %1913
      %1915 = vrot.lane.b32.xlu0 %v1552, 64
      %v1916 = vpop.permute.xlu0 %1915
      %1917 = vrot.lane.b32.xlu0 %v1553, 64
      %v1918 = vpop.permute.xlu0 %1917
      %1919 = vrot.lane.b32.xlu0 %v1554, 64
      %v1920 = vpop.permute.xlu0 %1919
      %vm1953 = vcmask 1048064
      %1954 = vst.msk [vmem:[%s1806 + $0x10] sm:$0xff] %vm1953, %v1858
      %1955 = vst.msk [vmem:[%s1806 + $0x20] sm:$0xff] %vm1953, %v1860
      %1956 = vst.msk [vmem:[%s1806 + $0x50] sm:$0xff] %vm1953, %v1862
      %1957 = vst.msk [vmem:[%s1806 + $0x60] sm:$0xff] %vm1953, %v1864
      %1958 = vst.msk [vmem:[%s1806 + $0x90] sm:$0xff] %vm1953, %v1866
      %1959 = vst.msk [vmem:[%s1806 + $0xa0] sm:$0xff] %vm1953, %v1868
      %1960 = vst.msk [vmem:[%s1806 + $0xd0] sm:$0xff] %vm1953, %v1870
      %1961 = vst.msk [vmem:[%s1806 + $0xe0] sm:$0xff] %vm1953, %v1872
      %1962 = vst.msk [vmem:[%s1806 + $0x110] sm:$0xff] %vm1953, %v1874
      %1963 = vst.msk [vmem:[%s1806 + $0x120] sm:$0xff] %vm1953, %v1876
      %1964 = vst.msk [vmem:[%s1806 + $0x150] sm:$0xff] %vm1953, %v1878
      %1965 = vst.msk [vmem:[%s1806 + $0x160] sm:$0xff] %vm1953, %v1880
      %1966 = vst.msk [vmem:[%s1806 + $0x190] sm:$0xff] %vm1953, %v1882
      %1967 = vst.msk [vmem:[%s1806 + $0x1a0] sm:$0xff] %vm1953, %v1884
      %1968 = vst.msk [vmem:[%s1806 + $0x1d0] sm:$0xff] %vm1953, %v1886
      %1969 = vst.msk [vmem:[%s1806 + $0x1e0] sm:$0xff] %vm1953, %v1888
      %1970 = vst.msk [vmem:[%s1806 + $0x210] sm:$0xff] %vm1953, %v1890
      %1971 = vst.msk [vmem:[%s1806 + $0x220] sm:$0xff] %vm1953, %v1892
      %1972 = vst.msk [vmem:[%s1806 + $0x250] sm:$0xff] %vm1953, %v1894
      %1973 = vst.msk [vmem:[%s1806 + $0x260] sm:$0xff] %vm1953, %v1896
      %1974 = vst.msk [vmem:[%s1806 + $0x290] sm:$0xff] %vm1953, %v1898
      %1975 = vst.msk [vmem:[%s1806 + $0x2a0] sm:$0xff] %vm1953, %v1900
      %1976 = vst.msk [vmem:[%s1806 + $0x2d0] sm:$0xff] %vm1953, %v1902
      %1977 = vst.msk [vmem:[%s1806 + $0x2e0] sm:$0xff] %vm1953, %v1904
      %1978 = vst.msk [vmem:[%s1806 + $0x310] sm:$0xff] %vm1953, %v1906
      %1979 = vst.msk [vmem:[%s1806 + $0x320] sm:$0xff] %vm1953, %v1908
      %1980 = vst.msk [vmem:[%s1806 + $0x350] sm:$0xff] %vm1953, %v1910
      %1981 = vst.msk [vmem:[%s1806 + $0x360] sm:$0xff] %vm1953, %v1912
      %1982 = vst.msk [vmem:[%s1806 + $0x390] sm:$0xff] %vm1953, %v1914
      %1983 = vst.msk [vmem:[%s1806 + $0x3a0] sm:$0xff] %vm1953, %v1916
      %1984 = vst.msk [vmem:[%s1806 + $0x3d0] sm:$0xff] %vm1953, %v1918
      %1985 = vst.msk [vmem:[%s1806 + $0x3e0] sm:$0xff] %vm1953, %v1920
      %vm1986 = vcmask 1046528
      %v1987 = vrot.slane %v1523, 1
      %v1988 = vrot.slane %v1524, 1
      %v1989 = vsel %vm1986, %v1987, %v1988
      %v1990 = vrot.slane %v1525, 1
      %v1991 = vrot.slane %v1526, 1
      %v1992 = vsel %vm1986, %v1990, %v1991
      %v1993 = vrot.slane %v1527, 1
      %v1994 = vrot.slane %v1528, 1
      %v1995 = vsel %vm1986, %v1993, %v1994
      %v1996 = vrot.slane %v1529, 1
      %v1997 = vrot.slane %v1530, 1
      %v1998 = vsel %vm1986, %v1996, %v1997
      %v1999 = vrot.slane %v1531, 1
      %v2000 = vrot.slane %v1532, 1
      %v2001 = vsel %vm1986, %v1999, %v2000
      %v2002 = vrot.slane %v1533, 1
      %v2003 = vrot.slane %v1534, 1
      %v2004 = vsel %vm1986, %v2002, %v2003
      %v2005 = vrot.slane %v1535, 1
      %v2006 = vrot.slane %v1536, 1
      %v2007 = vsel %vm1986, %v2005, %v2006
      %v2008 = vrot.slane %v1537, 1
      %v2009 = vrot.slane %v1538, 1
      %v2010 = vsel %vm1986, %v2008, %v2009
      %v2011 = vrot.slane %v1539, 1
      %v2012 = vrot.slane %v1540, 1
      %v2013 = vsel %vm1986, %v2011, %v2012
      %v2014 = vrot.slane %v1541, 1
      %v2015 = vrot.slane %v1542, 1
      %v2016 = vsel %vm1986, %v2014, %v2015
      %v2017 = vrot.slane %v1543, 1
      %v2018 = vrot.slane %v1544, 1
      %v2019 = vsel %vm1986, %v2017, %v2018
      %v2020 = vrot.slane %v1545, 1
      %v2021 = vrot.slane %v1546, 1
      %v2022 = vsel %vm1986, %v2020, %v2021
      %v2023 = vrot.slane %v1547, 1
      %v2024 = vrot.slane %v1548, 1
      %v2025 = vsel %vm1986, %v2023, %v2024
      %v2026 = vrot.slane %v1549, 1
      %v2027 = vrot.slane %v1550, 1
      %v2028 = vsel %vm1986, %v2026, %v2027
      %v2029 = vrot.slane %v1551, 1
      %v2030 = vrot.slane %v1552, 1
      %v2031 = vsel %vm1986, %v2029, %v2030
      %v2032 = vrot.slane %v1553, 1
      %v2033 = vrot.slane %v1554, 1
      %v2034 = vsel %vm1986, %v2032, %v2033
      %vm2083 = vcmask 523271
      %2084 = vst.msk [vmem:[%s1806 + $0x8] sm:$0x80] %vm2083, %v1987
      %2085 = vst.msk [vmem:[%s1806 + $0x18] sm:$0xff] %vm1556, %v1989
      %vm2086 = vcmask 522240
      %2087 = vst.msk [vmem:[%s1806 + $0x28] sm:$0x7f] %vm2086, %v1988
      %2088 = vst.msk [vmem:[%s1806 + $0x48] sm:$0x80] %vm2083, %v1990
      %2089 = vst.msk [vmem:[%s1806 + $0x58] sm:$0xff] %vm1556, %v1992
      %2090 = vst.msk [vmem:[%s1806 + $0x68] sm:$0x7f] %vm2086, %v1991
      %2091 = vst.msk [vmem:[%s1806 + $0x88] sm:$0x80] %vm2083, %v1993
      %2092 = vst.msk [vmem:[%s1806 + $0x98] sm:$0xff] %vm1556, %v1995
      %2093 = vst.msk [vmem:[%s1806 + $0xa8] sm:$0x7f] %vm2086, %v1994
      %2094 = vst.msk [vmem:[%s1806 + $0xc8] sm:$0x80] %vm2083, %v1996
      %2095 = vst.msk [vmem:[%s1806 + $0xd8] sm:$0xff] %vm1556, %v1998
      %2096 = vst.msk [vmem:[%s1806 + $0xe8] sm:$0x7f] %vm2086, %v1997
      %2097 = vst.msk [vmem:[%s1806 + $0x108] sm:$0x80] %vm2083, %v1999
      %2098 = vst.msk [vmem:[%s1806 + $0x118] sm:$0xff] %vm1556, %v2001
      %2099 = vst.msk [vmem:[%s1806 + $0x128] sm:$0x7f] %vm2086, %v2000
      %2100 = vst.msk [vmem:[%s1806 + $0x148] sm:$0x80] %vm2083, %v2002
      %2101 = vst.msk [vmem:[%s1806 + $0x158] sm:$0xff] %vm1556, %v2004
      %2102 = vst.msk [vmem:[%s1806 + $0x168] sm:$0x7f] %vm2086, %v2003
      %2103 = vst.msk [vmem:[%s1806 + $0x188] sm:$0x80] %vm2083, %v2005
      %2104 = vst.msk [vmem:[%s1806 + $0x198] sm:$0xff] %vm1556, %v2007
      %2105 = vst.msk [vmem:[%s1806 + $0x1a8] sm:$0x7f] %vm2086, %v2006
      %2106 = vst.msk [vmem:[%s1806 + $0x1c8] sm:$0x80] %vm2083, %v2008
      %2107 = vst.msk [vmem:[%s1806 + $0x1d8] sm:$0xff] %vm1556, %v2010
      %2108 = vst.msk [vmem:[%s1806 + $0x1e8] sm:$0x7f] %vm2086, %v2009
      %2109 = vst.msk [vmem:[%s1806 + $0x208] sm:$0x80] %vm2083, %v2011
      %2110 = vst.msk [vmem:[%s1806 + $0x218] sm:$0xff] %vm1556, %v2013
      %2111 = vst.msk [vmem:[%s1806 + $0x228] sm:$0x7f] %vm2086, %v2012
      %2112 = vst.msk [vmem:[%s1806 + $0x248] sm:$0x80] %vm2083, %v2014
      %2113 = vst.msk [vmem:[%s1806 + $0x258] sm:$0xff] %vm1556, %v2016
      %2114 = vst.msk [vmem:[%s1806 + $0x268] sm:$0x7f] %vm2086, %v2015
      %2115 = vst.msk [vmem:[%s1806 + $0x288] sm:$0x80] %vm2083, %v2017
      %2116 = vst.msk [vmem:[%s1806 + $0x298] sm:$0xff] %vm1556, %v2019
      %2117 = vst.msk [vmem:[%s1806 + $0x2a8] sm:$0x7f] %vm2086, %v2018
      %2118 = vst.msk [vmem:[%s1806 + $0x2c8] sm:$0x80] %vm2083, %v2020
      %2119 = vst.msk [vmem:[%s1806 + $0x2d8] sm:$0xff] %vm1556, %v2022
      %2120 = vst.msk [vmem:[%s1806 + $0x2e8] sm:$0x7f] %vm2086, %v2021
      %2121 = vst.msk [vmem:[%s1806 + $0x308] sm:$0x80] %vm2083, %v2023
      %2122 = vst.msk [vmem:[%s1806 + $0x318] sm:$0xff] %vm1556, %v2025
      %2123 = vst.msk [vmem:[%s1806 + $0x328] sm:$0x7f] %vm2086, %v2024
      %2124 = vst.msk [vmem:[%s1806 + $0x348] sm:$0x80] %vm2083, %v2026
      %2125 = vst.msk [vmem:[%s1806 + $0x358] sm:$0xff] %vm1556, %v2028
      %2126 = vst.msk [vmem:[%s1806 + $0x368] sm:$0x7f] %vm2086, %v2027
      %2127 = vst.msk [vmem:[%s1806 + $0x388] sm:$0x80] %vm2083, %v2029
      %2128 = vst.msk [vmem:[%s1806 + $0x398] sm:$0xff] %vm1556, %v2031
      %2129 = vst.msk [vmem:[%s1806 + $0x3a8] sm:$0x7f] %vm2086, %v2030
      %2130 = vst.msk [vmem:[%s1806 + $0x3c8] sm:$0x80] %vm2083, %v2032
      %2131 = vst.msk [vmem:[%s1806 + $0x3d8] sm:$0xff] %vm1556, %v2034
      %2132 = vst.msk [vmem:[%s1806 + $0x3e8] sm:$0x7f] %vm2086, %v2033
      %v2133 = vld [vmem:[#allocation3 + $0x10] sm:$0xff]
      %v2134 = vld [vmem:[#allocation3 + $0x18] sm:$0xff]
      %v2135 = vld [vmem:[#allocation3 + $0x20] sm:$0xff]
      %v2136 = vld [vmem:[#allocation3 + $0x28] sm:$0xff]
      %v2137 = vld [vmem:[#allocation3 + $0x50] sm:$0xff]
      %v2138 = vld [vmem:[#allocation3 + $0x58] sm:$0xff]
      %v2139 = vld [vmem:[#allocation3 + $0x60] sm:$0xff]
      %v2140 = vld [vmem:[#allocation3 + $0x68] sm:$0xff]
      %v2141 = vld [vmem:[#allocation3 + $0x90] sm:$0xff]
      %v2142 = vld [vmem:[#allocation3 + $0x98] sm:$0xff]
      %v2143 = vld [vmem:[#allocation3 + $0xa0] sm:$0xff]
      %v2144 = vld [vmem:[#allocation3 + $0xa8] sm:$0xff]
      %v2145 = vld [vmem:[#allocation3 + $0xd0] sm:$0xff]
      %v2146 = vld [vmem:[#allocation3 + $0xd8] sm:$0xff]
      %v2147 = vld [vmem:[#allocation3 + $0xe0] sm:$0xff]
      %v2148 = vld [vmem:[#allocation3 + $0xe8] sm:$0xff]
      %v2149 = vld [vmem:[#allocation3 + $0x110] sm:$0xff]
      %v2150 = vld [vmem:[#allocation3 + $0x118] sm:$0xff]
      %v2151 = vld [vmem:[#allocation3 + $0x120] sm:$0xff]
      %v2152 = vld [vmem:[#allocation3 + $0x128] sm:$0xff]
      %v2153 = vld [vmem:[#allocation3 + $0x150] sm:$0xff]
      %v2154 = vld [vmem:[#allocation3 + $0x158] sm:$0xff]
      %v2155 = vld [vmem:[#allocation3 + $0x160] sm:$0xff]
      %v2156 = vld [vmem:[#allocation3 + $0x168] sm:$0xff]
      %v2157 = vld [vmem:[#allocation3 + $0x190] sm:$0xff]
      %v2158 = vld [vmem:[#allocation3 + $0x198] sm:$0xff]
      %v2159 = vld [vmem:[#allocation3 + $0x1a0] sm:$0xff]
      %v2160 = vld [vmem:[#allocation3 + $0x1a8] sm:$0xff]
      %v2161 = vld [vmem:[#allocation3 + $0x1d0] sm:$0xff]
      %v2162 = vld [vmem:[#allocation3 + $0x1d8] sm:$0xff]
      %v2163 = vld [vmem:[#allocation3 + $0x1e0] sm:$0xff]
      %v2164 = vld [vmem:[#allocation3 + $0x1e8] sm:$0xff]
      %v2165 = vld [vmem:[#allocation3 + $0x210] sm:$0xff]
      %v2166 = vld [vmem:[#allocation3 + $0x218] sm:$0xff]
      %v2167 = vld [vmem:[#allocation3 + $0x220] sm:$0xff]
      %v2168 = vld [vmem:[#allocation3 + $0x228] sm:$0xff]
      %v2169 = vld [vmem:[#allocation3 + $0x250] sm:$0xff]
      %v2170 = vld [vmem:[#allocation3 + $0x258] sm:$0xff]
      %v2171 = vld [vmem:[#allocation3 + $0x260] sm:$0xff]
      %v2172 = vld [vmem:[#allocation3 + $0x268] sm:$0xff]
      %v2173 = vld [vmem:[#allocation3 + $0x290] sm:$0xff]
      %v2174 = vld [vmem:[#allocation3 + $0x298] sm:$0xff]
      %v2175 = vld [vmem:[#allocation3 + $0x2a0] sm:$0xff]
      %v2176 = vld [vmem:[#allocation3 + $0x2a8] sm:$0xff]
      %v2177 = vld [vmem:[#allocation3 + $0x2d0] sm:$0xff]
      %v2178 = vld [vmem:[#allocation3 + $0x2d8] sm:$0xff]
      %v2179 = vld [vmem:[#allocation3 + $0x2e0] sm:$0xff]
      %v2180 = vld [vmem:[#allocation3 + $0x2e8] sm:$0xff]
      %v2181 = vld [vmem:[#allocation3 + $0x310] sm:$0xff]
      %v2182 = vld [vmem:[#allocation3 + $0x318] sm:$0xff]
      %v2183 = vld [vmem:[#allocation3 + $0x320] sm:$0xff]
      %v2184 = vld [vmem:[#allocation3 + $0x328] sm:$0xff]
      %v2185 = vld [vmem:[#allocation3 + $0x350] sm:$0xff]
      %v2186 = vld [vmem:[#allocation3 + $0x358] sm:$0xff]
      %v2187 = vld [vmem:[#allocation3 + $0x360] sm:$0xff]
      %v2188 = vld [vmem:[#allocation3 + $0x368] sm:$0xff]
      %v2189 = vld [vmem:[#allocation3 + $0x390] sm:$0xff]
      %v2190 = vld [vmem:[#allocation3 + $0x398] sm:$0xff]
      %v2191 = vld [vmem:[#allocation3 + $0x3a0] sm:$0xff]
      %v2192 = vld [vmem:[#allocation3 + $0x3a8] sm:$0xff]
      %v2193 = vld [vmem:[#allocation3 + $0x3d0] sm:$0xff]
      %v2194 = vld [vmem:[#allocation3 + $0x3d8] sm:$0xff]
      %v2195 = vld [vmem:[#allocation3 + $0x3e0] sm:$0xff]
      %v2196 = vld [vmem:[#allocation3 + $0x3e8] sm:$0xff]
      %v2197 = vpack.c.bf16 %v2135, %v2133
      %v2198 = vpack.c.bf16 %v2136, %v2134
      %v2199 = vpack.c.bf16 %v2139, %v2137
      %v2200 = vpack.c.bf16 %v2140, %v2138
      %v2201 = vpack.c.bf16 %v2143, %v2141
      %v2202 = vpack.c.bf16 %v2144, %v2142
      %v2203 = vpack.c.bf16 %v2147, %v2145
      %v2204 = vpack.c.bf16 %v2148, %v2146
      %v2205 = vpack.c.bf16 %v2151, %v2149
      %v2206 = vpack.c.bf16 %v2152, %v2150
      %v2207 = vpack.c.bf16 %v2155, %v2153
      %v2208 = vpack.c.bf16 %v2156, %v2154
      %v2209 = vpack.c.bf16 %v2159, %v2157
      %v2210 = vpack.c.bf16 %v2160, %v2158
      %v2211 = vpack.c.bf16 %v2163, %v2161
      %v2212 = vpack.c.bf16 %v2164, %v2162
      %v2213 = vpack.c.bf16 %v2167, %v2165
      %v2214 = vpack.c.bf16 %v2168, %v2166
      %v2215 = vpack.c.bf16 %v2171, %v2169
      %v2216 = vpack.c.bf16 %v2172, %v2170
      %v2217 = vpack.c.bf16 %v2175, %v2173
      %v2218 = vpack.c.bf16 %v2176, %v2174
      %v2219 = vpack.c.bf16 %v2179, %v2177
      %v2220 = vpack.c.bf16 %v2180, %v2178
      %v2221 = vpack.c.bf16 %v2183, %v2181
      %v2222 = vpack.c.bf16 %v2184, %v2182
      %v2223 = vpack.c.bf16 %v2187, %v2185
      %v2224 = vpack.c.bf16 %v2188, %v2186
      %v2225 = vpack.c.bf16 %v2191, %v2189
      %v2226 = vpack.c.bf16 %v2192, %v2190
      %v2227 = vpack.c.bf16 %v2195, %v2193
      %v2228 = vpack.c.bf16 %v2196, %v2194
      %v2229 = vld [vmem:[%s3] sm:$0xf]
      %v2230 = vld [vmem:[%s3 + $0x4] sm:$0xf]
      %v2231 = vld [vmem:[%s3 + $0x8] sm:$0xf]
      %v2232 = vld [vmem:[%s3 + $0xc] sm:$0xf]
      %v2233 = vld [vmem:[%s3 + $0x10] sm:$0xf]
      %v2234 = vld [vmem:[%s3 + $0x14] sm:$0xf]
      %v2235 = vld [vmem:[%s3 + $0x18] sm:$0xf]
      %v2236 = vld [vmem:[%s3 + $0x1c] sm:$0xf]
      %v2237 = vld [vmem:[%s3 + $0x20] sm:$0xf]
      %v2238 = vld [vmem:[%s3 + $0x24] sm:$0xf]
      %v2239 = vld [vmem:[%s3 + $0x28] sm:$0xf]
      %v2240 = vld [vmem:[%s3 + $0x2c] sm:$0xf]
      %v2241 = vld [vmem:[%s3 + $0x30] sm:$0xf]
      %v2242 = vld [vmem:[%s3 + $0x34] sm:$0xf]
      %v2243 = vld [vmem:[%s3 + $0x38] sm:$0xf]
      %v2244 = vld [vmem:[%s3 + $0x3c] sm:$0xf]
      %v2245 = vld [vmem:[%s3 + $0x40] sm:$0xf]
      %v2246 = vld [vmem:[%s3 + $0x44] sm:$0xf]
      %v2247 = vld [vmem:[%s3 + $0x48] sm:$0xf]
      %v2248 = vld [vmem:[%s3 + $0x4c] sm:$0xf]
      %v2249 = vld [vmem:[%s3 + $0x50] sm:$0xf]
      %v2250 = vld [vmem:[%s3 + $0x54] sm:$0xf]
      %v2251 = vld [vmem:[%s3 + $0x58] sm:$0xf]
      %v2252 = vld [vmem:[%s3 + $0x5c] sm:$0xf]
      %v2253 = vld [vmem:[%s1806 + $0x10] sm:$0xff]
      %v2254 = vld [vmem:[%s1806 + $0x18] sm:$0xff]
      %v2255 = vld [vmem:[%s1806 + $0x20] sm:$0xff]
      %v2256 = vld [vmem:[%s1806 + $0x28] sm:$0xff]
      %v2257 = vld [vmem:[%s1806 + $0x50] sm:$0xff]
      %v2258 = vld [vmem:[%s1806 + $0x58] sm:$0xff]
      %v2259 = vld [vmem:[%s1806 + $0x60] sm:$0xff]
      %v2260 = vld [vmem:[%s1806 + $0x68] sm:$0xff]
      %v2261 = vld [vmem:[%s1806 + $0x90] sm:$0xff]
      %v2262 = vld [vmem:[%s1806 + $0x98] sm:$0xff]
      %v2263 = vld [vmem:[%s1806 + $0xa0] sm:$0xff]
      %v2264 = vld [vmem:[%s1806 + $0xa8] sm:$0xff]
      %v2265 = vld [vmem:[%s1806 + $0xd0] sm:$0xff]
      %v2266 = vld [vmem:[%s1806 + $0xd8] sm:$0xff]
      %v2267 = vld [vmem:[%s1806 + $0xe0] sm:$0xff]
      %v2268 = vld [vmem:[%s1806 + $0xe8] sm:$0xff]
      %v2269 = vld [vmem:[%s1806 + $0x110] sm:$0xff]
      %v2270 = vld [vmem:[%s1806 + $0x118] sm:$0xff]
      %v2271 = vld [vmem:[%s1806 + $0x120] sm:$0xff]
      %v2272 = vld [vmem:[%s1806 + $0x128] sm:$0xff]
      %v2273 = vld [vmem:[%s1806 + $0x150] sm:$0xff]
      %v2274 = vld [vmem:[%s1806 + $0x158] sm:$0xff]
      %v2275 = vld [vmem:[%s1806 + $0x160] sm:$0xff]
      %v2276 = vld [vmem:[%s1806 + $0x168] sm:$0xff]
      %v2277 = vld [vmem:[%s1806 + $0x190] sm:$0xff]
      %v2278 = vld [vmem:[%s1806 + $0x198] sm:$0xff]
      %v2279 = vld [vmem:[%s1806 + $0x1a0] sm:$0xff]
      %v2280 = vld [vmem:[%s1806 + $0x1a8] sm:$0xff]
      %v2281 = vld [vmem:[%s1806 + $0x1d0] sm:$0xff]
      %v2282 = vld [vmem:[%s1806 + $0x1d8] sm:$0xff]
      %v2283 = vld [vmem:[%s1806 + $0x1e0] sm:$0xff]
      %v2284 = vld [vmem:[%s1806 + $0x1e8] sm:$0xff]
      %v2285 = vld [vmem:[%s1806 + $0x210] sm:$0xff]
      %v2286 = vld [vmem:[%s1806 + $0x218] sm:$0xff]
      %v2287 = vld [vmem:[%s1806 + $0x220] sm:$0xff]
      %v2288 = vld [vmem:[%s1806 + $0x228] sm:$0xff]
      %v2289 = vld [vmem:[%s1806 + $0x250] sm:$0xff]
      %v2290 = vld [vmem:[%s1806 + $0x258] sm:$0xff]
      %v2291 = vld [vmem:[%s1806 + $0x260] sm:$0xff]
      %v2292 = vld [vmem:[%s1806 + $0x268] sm:$0xff]
      %v2293 = vld [vmem:[%s1806 + $0x290] sm:$0xff]
      %v2294 = vld [vmem:[%s1806 + $0x298] sm:$0xff]
      %v2295 = vld [vmem:[%s1806 + $0x2a0] sm:$0xff]
      %v2296 = vld [vmem:[%s1806 + $0x2a8] sm:$0xff]
      %v2297 = vld [vmem:[%s1806 + $0x2d0] sm:$0xff]
      %v2298 = vld [vmem:[%s1806 + $0x2d8] sm:$0xff]
      %v2299 = vld [vmem:[%s1806 + $0x2e0] sm:$0xff]
      %v2300 = vld [vmem:[%s1806 + $0x2e8] sm:$0xff]
      %v2301 = vld [vmem:[%s1806 + $0x310] sm:$0xff]
      %v2302 = vld [vmem:[%s1806 + $0x318] sm:$0xff]
      %v2303 = vld [vmem:[%s1806 + $0x320] sm:$0xff]
      %v2304 = vld [vmem:[%s1806 + $0x328] sm:$0xff]
      %v2305 = vld [vmem:[%s1806 + $0x350] sm:$0xff]
      %v2306 = vld [vmem:[%s1806 + $0x358] sm:$0xff]
      %v2307 = vld [vmem:[%s1806 + $0x360] sm:$0xff]
      %v2308 = vld [vmem:[%s1806 + $0x368] sm:$0xff]
      %v2309 = vld [vmem:[%s1806 + $0x390] sm:$0xff]
      %v2310 = vld [vmem:[%s1806 + $0x398] sm:$0xff]
      %v2311 = vld [vmem:[%s1806 + $0x3a0] sm:$0xff]
      %v2312 = vld [vmem:[%s1806 + $0x3a8] sm:$0xff]
      %v2313 = vld [vmem:[%s1806 + $0x3d0] sm:$0xff]
      %v2314 = vld [vmem:[%s1806 + $0x3d8] sm:$0xff]
      %v2315 = vld [vmem:[%s1806 + $0x3e0] sm:$0xff]
      %v2316 = vld [vmem:[%s1806 + $0x3e8] sm:$0xff]
      %v2317 = vpack.c.bf16 %v2255, %v2253
      %v2318 = vpack.c.bf16 %v2256, %v2254
      %v2319 = vpack.c.bf16 %v2259, %v2257
      %v2320 = vpack.c.bf16 %v2260, %v2258
      %v2321 = vpack.c.bf16 %v2263, %v2261
      %v2322 = vpack.c.bf16 %v2264, %v2262
      %v2323 = vpack.c.bf16 %v2267, %v2265
      %v2324 = vpack.c.bf16 %v2268, %v2266
      %v2325 = vpack.c.bf16 %v2271, %v2269
      %v2326 = vpack.c.bf16 %v2272, %v2270
      %v2327 = vpack.c.bf16 %v2275, %v2273
      %v2328 = vpack.c.bf16 %v2276, %v2274
      %v2329 = vpack.c.bf16 %v2279, %v2277
      %v2330 = vpack.c.bf16 %v2280, %v2278
      %v2331 = vpack.c.bf16 %v2283, %v2281
      %v2332 = vpack.c.bf16 %v2284, %v2282
      %v2333 = vpack.c.bf16 %v2287, %v2285
      %v2334 = vpack.c.bf16 %v2288, %v2286
      %v2335 = vpack.c.bf16 %v2291, %v2289
      %v2336 = vpack.c.bf16 %v2292, %v2290
      %v2337 = vpack.c.bf16 %v2295, %v2293
      %v2338 = vpack.c.bf16 %v2296, %v2294
      %v2339 = vpack.c.bf16 %v2299, %v2297
      %v2340 = vpack.c.bf16 %v2300, %v2298
      %v2341 = vpack.c.bf16 %v2303, %v2301
      %v2342 = vpack.c.bf16 %v2304, %v2302
      %v2343 = vpack.c.bf16 %v2307, %v2305
      %v2344 = vpack.c.bf16 %v2308, %v2306
      %v2345 = vpack.c.bf16 %v2311, %v2309
      %v2346 = vpack.c.bf16 %v2312, %v2310
      %v2347 = vpack.c.bf16 %v2315, %v2313
      %v2348 = vpack.c.bf16 %v2316, %v2314
      %s2349 = scalar_lea.vmem %s3, 96
      %v2350 = vld [vmem:[%s2349] sm:$0xf]
      %v2351 = vld [vmem:[%s2349 + $0x4] sm:$0xf]
      %v2352 = vld [vmem:[%s2349 + $0x8] sm:$0xf]
      %v2353 = vld [vmem:[%s2349 + $0xc] sm:$0xf]
      %v2354 = vld [vmem:[%s2349 + $0x10] sm:$0xf]
      %v2355 = vld [vmem:[%s2349 + $0x14] sm:$0xf]
      %v2356 = vld [vmem:[%s2349 + $0x18] sm:$0xf]
      %v2357 = vld [vmem:[%s2349 + $0x1c] sm:$0xf]
      %v2358 = vld [vmem:[%s2349 + $0x20] sm:$0xf]
      %v2359 = vld [vmem:[%s2349 + $0x24] sm:$0xf]
      %v2360 = vld [vmem:[%s2349 + $0x28] sm:$0xf]
      %v2361 = vld [vmem:[%s2349 + $0x2c] sm:$0xf]
      %v2362 = vld [vmem:[%s2349 + $0x30] sm:$0xf]
      %v2363 = vld [vmem:[%s2349 + $0x34] sm:$0xf]
      %v2364 = vld [vmem:[%s2349 + $0x38] sm:$0xf]
      %v2365 = vld [vmem:[%s2349 + $0x3c] sm:$0xf]
      %v2366 = vld [vmem:[%s2349 + $0x40] sm:$0xf]
      %v2367 = vld [vmem:[%s2349 + $0x44] sm:$0xf]
      %v2368 = vld [vmem:[%s2349 + $0x48] sm:$0xf]
      %v2369 = vld [vmem:[%s2349 + $0x4c] sm:$0xf]
      %v2370 = vld [vmem:[%s2349 + $0x50] sm:$0xf]
      %v2371 = vld [vmem:[%s2349 + $0x54] sm:$0xf]
      %v2372 = vld [vmem:[%s2349 + $0x58] sm:$0xf]
      %v2373 = vld [vmem:[%s2349 + $0x5c] sm:$0xf]
      %v2398 = vunpack.c.l.b16 %v2350
      %v2399 = vunpack.c.l.b16 %v2351
      %v2400 = vunpack.c.l.b16 %v2352
      %v2401 = vunpack.c.l.b16 %v2353
      %v2402 = vunpack.c.l.b16 %v2354
      %v2403 = vunpack.c.l.b16 %v2355
      %v2404 = vunpack.c.l.b16 %v2356
      %v2405 = vunpack.c.l.b16 %v2357
      %v2406 = vunpack.c.l.b16 %v2358
      %v2407 = vunpack.c.l.b16 %v2359
      %v2408 = vunpack.c.l.b16 %v2360
      %v2409 = vunpack.c.l.b16 %v2361
      %v2410 = vunpack.c.l.b16 %v2362
      %v2411 = vunpack.c.l.b16 %v2363
      %v2412 = vunpack.c.l.b16 %v2364
      %v2413 = vunpack.c.l.b16 %v2365
      %v2414 = vunpack.c.l.b16 %v2366
      %v2415 = vunpack.c.l.b16 %v2367
      %v2416 = vunpack.c.l.b16 %v2368
      %v2417 = vunpack.c.l.b16 %v2369
      %v2418 = vunpack.c.l.b16 %v2370
      %v2419 = vunpack.c.l.b16 %v2371
      %v2420 = vunpack.c.l.b16 %v2372
      %v2421 = vunpack.c.l.b16 %v2373
      %v2422 = vpack.c.b16 %v2399, %v2398
      %v2423 = vpack.c.b16 %v2401, %v2400
      %v2424 = vpack.c.b16 %v2403, %v2402
      %v2425 = vpack.c.b16 %v2405, %v2404
      %v2426 = vpack.c.b16 %v2407, %v2406
      %v2427 = vpack.c.b16 %v2409, %v2408
      %v2428 = vpack.c.b16 %v2411, %v2410
      %v2429 = vpack.c.b16 %v2413, %v2412
      %v2430 = vpack.c.b16 %v2415, %v2414
      %v2431 = vpack.c.b16 %v2417, %v2416
      %v2432 = vpack.c.b16 %v2419, %v2418
      %v2433 = vpack.c.b16 %v2421, %v2420
      %v2447 = vsel %vm1556, %v2318, 0
      %v2450 = vsel %vm1556, %v2320, 0
      %v2453 = vsel %vm1556, %v2322, 0
      %v2456 = vsel %vm1556, %v2324, 0
      %v2459 = vsel %vm1556, %v2326, 0
      %v2462 = vsel %vm1556, %v2328, 0
      %v2465 = vsel %vm1556, %v2330, 0
      %v2468 = vsel %vm1556, %v2332, 0
      %v2471 = vsel %vm1556, %v2334, 0
      %v2474 = vsel %vm1556, %v2336, 0
      %v2477 = vsel %vm1556, %v2338, 0
      %v2480 = vsel %vm1556, %v2340, 0
      %v2483 = vsel %vm1556, %v2342, 0
      %v2486 = vsel %vm1556, %v2344, 0
      %v2489 = vsel %vm1556, %v2346, 0
      %v2492 = vsel %vm1556, %v2348, 0
      %2494 = vmatprep.subr.bf16.mxu0 0
      %2495 = vmatpush1.bf16.msra.mxu0 %v2429
      %2496 = vmatprep.subr.bf16.mxu0 0
      %2497 = vmatpush1.bf16.msra.mxu0 %v2428
      %2498 = vmatprep.subr.bf16.mxu0 0
      %2499 = vmatpush1.bf16.msra.mxu0 %v2427
      %2500 = vmatprep.subr.bf16.mxu0 0
      %2501 = vmatpush1.bf16.msra.mxu0 %v2426
      %2502 = vmatprep.subr.bf16.mxu0 0
      %2503 = vmatpush1.bf16.msra.mxu0 %v2425
      %2504 = vmatprep.subr.bf16.mxu0 0
      %2505 = vmatpush1.bf16.msra.mxu0 %v2424
      %2506 = vmatprep.subr.bf16.mxu0 0
      %2507 = vmatpush1.bf16.msra.mxu0 %v2423
      %2508 = vmatprep.subr.bf16.mxu0 0
      %2509 = vmatpush1.bf16.msra.mxu0 %v2422
      %2510 = vmatprep.subr.bf16.mxu0 0
      %2511 = vmatpush2.bf16.msra.mxu0 0
      %2512 = vmatprep.subr.bf16.mxu0 0
      %2513 = vmatpush2.bf16.msra.mxu0 0
      %2514 = vmatprep.subr.bf16.mxu0 0
      %2515 = vmatpush2.bf16.msra.mxu0 0
      %2516 = vmatprep.subr.bf16.mxu0 0
      %2517 = vmatpush2.bf16.msra.mxu0 0
      %2518 = vmatprep.subr.bf16.mxu0 0
      %2519 = vmatpush2.bf16.msra.mxu0 %v2433
      %2520 = vmatprep.subr.bf16.mxu0 0
      %2521 = vmatpush2.bf16.msra.mxu0 %v2432
      %2522 = vmatprep.subr.bf16.mxu0 0
      %2523 = vmatpush2.bf16.msra.mxu0 %v2431
      %2524 = vmatprep.subr.bf16.mxu0 0
      %2525 = vmatpush2.bf16.msra.mxu0 %v2430
      %2526 = vmatprep.mubr.bf16.mxu0 %v2447
      %2527 = vmatmul.mubr.bf16.gmra.mxu0 %v2317
      %v2528 = vpop.f32.mrf.mxu0
      %v2529 = vadd.f32 0.0, %v2528
      %v2530 = vpop.f32.mrf.mxu0
      %v2531 = vpop.f32.mrf.mxu0
      %v2532 = vadd.f32 0.0, %v2531
      %v2533 = vpop.f32.mrf.mxu0
      %2534 = vmatprep.mubr.bf16.mxu0 %v2450
      %2535 = vmatmul.mubr.bf16.gmra.mxu0 %v2319
      %v2536 = vpop.f32.mrf.mxu0
      %v2537 = vadd.f32 0.0, %v2536
      %v2538 = vpop.f32.mrf.mxu0
      %v2539 = vpop.f32.mrf.mxu0
      %v2540 = vadd.f32 0.0, %v2539
      %v2541 = vpop.f32.mrf.mxu0
      %2542 = vmatprep.mubr.bf16.mxu0 %v2453
      %2543 = vmatmul.mubr.bf16.gmra.mxu0 %v2321
      %v2544 = vpop.f32.mrf.mxu0
      %v2545 = vadd.f32 0.0, %v2544
      %v2546 = vpop.f32.mrf.mxu0
      %v2547 = vpop.f32.mrf.mxu0
      %v2548 = vadd.f32 0.0, %v2547
      %v2549 = vpop.f32.mrf.mxu0
      %2550 = vmatprep.mubr.bf16.mxu0 %v2456
      %2551 = vmatmul.mubr.bf16.gmra.mxu0 %v2323
      %v2552 = vpop.f32.mrf.mxu0
      %v2553 = vadd.f32 0.0, %v2552
      %v2554 = vpop.f32.mrf.mxu0
      %v2555 = vpop.f32.mrf.mxu0
      %v2556 = vadd.f32 0.0, %v2555
      %v2557 = vpop.f32.mrf.mxu0
      %2558 = vmatprep.mubr.bf16.mxu0 %v2459
      %2559 = vmatmul.mubr.bf16.gmra.mxu0 %v2325
      %v2560 = vpop.f32.mrf.mxu0
      %v2561 = vadd.f32 0.0, %v2560
      %v2562 = vpop.f32.mrf.mxu0
      %v2563 = vpop.f32.mrf.mxu0
      %v2564 = vadd.f32 0.0, %v2563
      %v2565 = vpop.f32.mrf.mxu0
      %2566 = vmatprep.mubr.bf16.mxu0 %v2462
      %2567 = vmatmul.mubr.bf16.gmra.mxu0 %v2327
      %v2568 = vpop.f32.mrf.mxu0
      %v2569 = vadd.f32 0.0, %v2568
      %v2570 = vpop.f32.mrf.mxu0
      %v2571 = vpop.f32.mrf.mxu0
      %v2572 = vadd.f32 0.0, %v2571
      %v2573 = vpop.f32.mrf.mxu0
      %2574 = vmatprep.mubr.bf16.mxu0 %v2465
      %2575 = vmatmul.mubr.bf16.gmra.mxu0 %v2329
      %v2576 = vpop.f32.mrf.mxu0
      %v2577 = vadd.f32 0.0, %v2576
      %v2578 = vpop.f32.mrf.mxu0
      %v2579 = vpop.f32.mrf.mxu0
      %v2580 = vadd.f32 0.0, %v2579
      %v2581 = vpop.f32.mrf.mxu0
      %2582 = vmatprep.mubr.bf16.mxu0 %v2468
      %2583 = vmatmul.mubr.bf16.gmra.mxu0 %v2331
      %v2584 = vpop.f32.mrf.mxu0
      %v2585 = vadd.f32 0.0, %v2584
      %v2586 = vpop.f32.mrf.mxu0
      %v2587 = vpop.f32.mrf.mxu0
      %v2588 = vadd.f32 0.0, %v2587
      %v2589 = vpop.f32.mrf.mxu0
      %2590 = vmatprep.mubr.bf16.mxu0 %v2471
      %2591 = vmatmul.mubr.bf16.gmra.mxu0 %v2333
      %v2592 = vpop.f32.mrf.mxu0
      %v2593 = vadd.f32 0.0, %v2592
      %v2594 = vpop.f32.mrf.mxu0
      %v2595 = vpop.f32.mrf.mxu0
      %v2596 = vadd.f32 0.0, %v2595
      %v2597 = vpop.f32.mrf.mxu0
      %2598 = vmatprep.mubr.bf16.mxu0 %v2474
      %2599 = vmatmul.mubr.bf16.gmra.mxu0 %v2335
      %v2600 = vpop.f32.mrf.mxu0
      %v2601 = vadd.f32 0.0, %v2600
      %v2602 = vpop.f32.mrf.mxu0
      %v2603 = vpop.f32.mrf.mxu0
      %v2604 = vadd.f32 0.0, %v2603
      %v2605 = vpop.f32.mrf.mxu0
      %2606 = vmatprep.mubr.bf16.mxu0 %v2477
      %2607 = vmatmul.mubr.bf16.gmra.mxu0 %v2337
      %v2608 = vpop.f32.mrf.mxu0
      %v2609 = vadd.f32 0.0, %v2608
      %v2610 = vpop.f32.mrf.mxu0
      %v2611 = vpop.f32.mrf.mxu0
      %v2612 = vadd.f32 0.0, %v2611
      %v2613 = vpop.f32.mrf.mxu0
      %2614 = vmatprep.mubr.bf16.mxu0 %v2480
      %2615 = vmatmul.mubr.bf16.gmra.mxu0 %v2339
      %v2616 = vpop.f32.mrf.mxu0
      %v2617 = vadd.f32 0.0, %v2616
      %v2618 = vpop.f32.mrf.mxu0
      %v2619 = vpop.f32.mrf.mxu0
      %v2620 = vadd.f32 0.0, %v2619
      %v2621 = vpop.f32.mrf.mxu0
      %2622 = vmatprep.mubr.bf16.mxu0 %v2483
      %2623 = vmatmul.mubr.bf16.gmra.mxu0 %v2341
      %v2624 = vpop.f32.mrf.mxu0
      %v2625 = vadd.f32 0.0, %v2624
      %v2626 = vpop.f32.mrf.mxu0
      %v2627 = vpop.f32.mrf.mxu0
      %v2628 = vadd.f32 0.0, %v2627
      %v2629 = vpop.f32.mrf.mxu0
      %2630 = vmatprep.mubr.bf16.mxu0 %v2486
      %2631 = vmatmul.mubr.bf16.gmra.mxu0 %v2343
      %v2632 = vpop.f32.mrf.mxu0
      %v2633 = vadd.f32 0.0, %v2632
      %v2634 = vpop.f32.mrf.mxu0
      %v2635 = vpop.f32.mrf.mxu0
      %v2636 = vadd.f32 0.0, %v2635
      %v2637 = vpop.f32.mrf.mxu0
      %2638 = vmatprep.mubr.bf16.mxu0 %v2489
      %2639 = vmatmul.mubr.bf16.gmra.mxu0 %v2345
      %v2640 = vpop.f32.mrf.mxu0
      %v2641 = vadd.f32 0.0, %v2640
      %v2642 = vpop.f32.mrf.mxu0
      %v2643 = vpop.f32.mrf.mxu0
      %v2644 = vadd.f32 0.0, %v2643
      %v2645 = vpop.f32.mrf.mxu0
      %2646 = vmatprep.mubr.bf16.mxu0 %v2492
      %2647 = vmatmul.mubr.bf16.gmra.mxu0 %v2347
      %v2648 = vpop.f32.mrf.mxu0
      %v2649 = vadd.f32 0.0, %v2648
      %v2650 = vpop.f32.mrf.mxu0
      %v2651 = vpop.f32.mrf.mxu0
      %v2652 = vadd.f32 0.0, %v2651
      %v2653 = vpop.f32.mrf.mxu0
      %2654 = vdwg.mxu0
      %v2679 = vunpack.c.l.b16 %v2229
      %v2680 = vunpack.c.l.b16 %v2230
      %v2681 = vunpack.c.l.b16 %v2231
      %v2682 = vunpack.c.l.b16 %v2232
      %v2683 = vunpack.c.l.b16 %v2233
      %v2684 = vunpack.c.l.b16 %v2234
      %v2685 = vunpack.c.l.b16 %v2235
      %v2686 = vunpack.c.l.b16 %v2236
      %v2687 = vunpack.c.l.b16 %v2237
      %v2688 = vunpack.c.l.b16 %v2238
      %v2689 = vunpack.c.l.b16 %v2239
      %v2690 = vunpack.c.l.b16 %v2240
      %v2691 = vunpack.c.l.b16 %v2241
      %v2692 = vunpack.c.l.b16 %v2242
      %v2693 = vunpack.c.l.b16 %v2243
      %v2694 = vunpack.c.l.b16 %v2244
      %v2695 = vunpack.c.l.b16 %v2245
      %v2696 = vunpack.c.l.b16 %v2246
      %v2697 = vunpack.c.l.b16 %v2247
      %v2698 = vunpack.c.l.b16 %v2248
      %v2699 = vunpack.c.l.b16 %v2249
      %v2700 = vunpack.c.l.b16 %v2250
      %v2701 = vunpack.c.l.b16 %v2251
      %v2702 = vunpack.c.l.b16 %v2252
      %v2703 = vpack.c.b16 %v2680, %v2679
      %v2704 = vpack.c.b16 %v2682, %v2681
      %v2705 = vpack.c.b16 %v2684, %v2683
      %v2706 = vpack.c.b16 %v2686, %v2685
      %v2707 = vpack.c.b16 %v2688, %v2687
      %v2708 = vpack.c.b16 %v2690, %v2689
      %v2709 = vpack.c.b16 %v2692, %v2691
      %v2710 = vpack.c.b16 %v2694, %v2693
      %v2711 = vpack.c.b16 %v2696, %v2695
      %v2712 = vpack.c.b16 %v2698, %v2697
      %v2713 = vpack.c.b16 %v2700, %v2699
      %v2714 = vpack.c.b16 %v2702, %v2701
      %v2728 = vsel %vm1556, %v2198, 0
      %v2731 = vsel %vm1556, %v2200, 0
      %v2734 = vsel %vm1556, %v2202, 0
      %v2737 = vsel %vm1556, %v2204, 0
      %v2740 = vsel %vm1556, %v2206, 0
      %v2743 = vsel %vm1556, %v2208, 0
      %v2746 = vsel %vm1556, %v2210, 0
      %v2749 = vsel %vm1556, %v2212, 0
      %v2752 = vsel %vm1556, %v2214, 0
      %v2755 = vsel %vm1556, %v2216, 0
      %v2758 = vsel %vm1556, %v2218, 0
      %v2761 = vsel %vm1556, %v2220, 0
      %v2764 = vsel %vm1556, %v2222, 0
      %v2767 = vsel %vm1556, %v2224, 0
      %v2770 = vsel %vm1556, %v2226, 0
      %v2773 = vsel %vm1556, %v2228, 0
      %2775 = vmatprep.subr.bf16.mxu0 0
      %2776 = vmatpush1.bf16.msra.mxu0 %v2710
      %2777 = vmatprep.subr.bf16.mxu0 0
      %2778 = vmatpush1.bf16.msra.mxu0 %v2709
      %2779 = vmatprep.subr.bf16.mxu0 0
      %2780 = vmatpush1.bf16.msra.mxu0 %v2708
      %2781 = vmatprep.subr.bf16.mxu0 0
      %2782 = vmatpush1.bf16.msra.mxu0 %v2707
      %2783 = vmatprep.subr.bf16.mxu0 0
      %2784 = vmatpush1.bf16.msra.mxu0 %v2706
      %2785 = vmatprep.subr.bf16.mxu0 0
      %2786 = vmatpush1.bf16.msra.mxu0 %v2705
      %2787 = vmatprep.subr.bf16.mxu0 0
      %2788 = vmatpush1.bf16.msra.mxu0 %v2704
      %2789 = vmatprep.subr.bf16.mxu0 0
      %2790 = vmatpush1.bf16.msra.mxu0 %v2703
      %2791 = vmatprep.subr.bf16.mxu0 0
      %2792 = vmatpush2.bf16.msra.mxu0 0
      %2793 = vmatprep.subr.bf16.mxu0 0
      %2794 = vmatpush2.bf16.msra.mxu0 0
      %2795 = vmatprep.subr.bf16.mxu0 0
      %2796 = vmatpush2.bf16.msra.mxu0 0
      %2797 = vmatprep.subr.bf16.mxu0 0
      %2798 = vmatpush2.bf16.msra.mxu0 0
      %2799 = vmatprep.subr.bf16.mxu0 0
      %2800 = vmatpush2.bf16.msra.mxu0 %v2714
      %2801 = vmatprep.subr.bf16.mxu0 0
      %2802 = vmatpush2.bf16.msra.mxu0 %v2713
      %2803 = vmatprep.subr.bf16.mxu0 0
      %2804 = vmatpush2.bf16.msra.mxu0 %v2712
      %2805 = vmatprep.subr.bf16.mxu0 0
      %2806 = vmatpush2.bf16.msra.mxu0 %v2711
      %2807 = vmatprep.mubr.bf16.mxu0 %v2728
      %2808 = vmatmul.mubr.bf16.gmra.mxu0 %v2197
      %v2809 = vpop.f32.mrf.mxu0
      %v2810 = vadd.f32 %v2529, %v2809
      %v2811 = vpop.f32.mrf.mxu0
      %v2812 = vpop.f32.mrf.mxu0
      %v2813 = vadd.f32 %v2532, %v2812
      %v2814 = vpop.f32.mrf.mxu0
      %2815 = vmatprep.mubr.bf16.mxu0 %v2731
      %2816 = vmatmul.mubr.bf16.gmra.mxu0 %v2199
      %v2817 = vpop.f32.mrf.mxu0
      %v2818 = vadd.f32 %v2537, %v2817
      %v2819 = vpop.f32.mrf.mxu0
      %v2820 = vpop.f32.mrf.mxu0
      %v2821 = vadd.f32 %v2540, %v2820
      %v2822 = vpop.f32.mrf.mxu0
      %2823 = vmatprep.mubr.bf16.mxu0 %v2734
      %2824 = vmatmul.mubr.bf16.gmra.mxu0 %v2201
      %v2825 = vpop.f32.mrf.mxu0
      %v2826 = vadd.f32 %v2545, %v2825
      %v2827 = vpop.f32.mrf.mxu0
      %v2828 = vpop.f32.mrf.mxu0
      %v2829 = vadd.f32 %v2548, %v2828
      %v2830 = vpop.f32.mrf.mxu0
      %2831 = vmatprep.mubr.bf16.mxu0 %v2737
      %2832 = vmatmul.mubr.bf16.gmra.mxu0 %v2203
      %v2833 = vpop.f32.mrf.mxu0
      %v2834 = vadd.f32 %v2553, %v2833
      %v2835 = vpop.f32.mrf.mxu0
      %v2836 = vpop.f32.mrf.mxu0
      %v2837 = vadd.f32 %v2556, %v2836
      %v2838 = vpop.f32.mrf.mxu0
      %2839 = vmatprep.mubr.bf16.mxu0 %v2740
      %2840 = vmatmul.mubr.bf16.gmra.mxu0 %v2205
      %v2841 = vpop.f32.mrf.mxu0
      %v2842 = vadd.f32 %v2561, %v2841
      %v2843 = vpop.f32.mrf.mxu0
      %v2844 = vpop.f32.mrf.mxu0
      %v2845 = vadd.f32 %v2564, %v2844
      %v2846 = vpop.f32.mrf.mxu0
      %2847 = vmatprep.mubr.bf16.mxu0 %v2743
      %2848 = vmatmul.mubr.bf16.gmra.mxu0 %v2207
      %v2849 = vpop.f32.mrf.mxu0
      %v2850 = vadd.f32 %v2569, %v2849
      %v2851 = vpop.f32.mrf.mxu0
      %v2852 = vpop.f32.mrf.mxu0
      %v2853 = vadd.f32 %v2572, %v2852
      %v2854 = vpop.f32.mrf.mxu0
      %2855 = vmatprep.mubr.bf16.mxu0 %v2746
      %2856 = vmatmul.mubr.bf16.gmra.mxu0 %v2209
      %v2857 = vpop.f32.mrf.mxu0
      %v2858 = vadd.f32 %v2577, %v2857
      %v2859 = vpop.f32.mrf.mxu0
      %v2860 = vpop.f32.mrf.mxu0
      %v2861 = vadd.f32 %v2580, %v2860
      %v2862 = vpop.f32.mrf.mxu0
      %2863 = vmatprep.mubr.bf16.mxu0 %v2749
      %2864 = vmatmul.mubr.bf16.gmra.mxu0 %v2211
      %v2865 = vpop.f32.mrf.mxu0
      %v2866 = vadd.f32 %v2585, %v2865
      %v2867 = vpop.f32.mrf.mxu0
      %v2868 = vpop.f32.mrf.mxu0
      %v2869 = vadd.f32 %v2588, %v2868
      %v2870 = vpop.f32.mrf.mxu0
      %2871 = vmatprep.mubr.bf16.mxu0 %v2752
      %2872 = vmatmul.mubr.bf16.gmra.mxu0 %v2213
      %v2873 = vpop.f32.mrf.mxu0
      %v2874 = vadd.f32 %v2593, %v2873
      %v2875 = vpop.f32.mrf.mxu0
      %v2876 = vpop.f32.mrf.mxu0
      %v2877 = vadd.f32 %v2596, %v2876
      %v2878 = vpop.f32.mrf.mxu0
      %2879 = vmatprep.mubr.bf16.mxu0 %v2755
      %2880 = vmatmul.mubr.bf16.gmra.mxu0 %v2215
      %v2881 = vpop.f32.mrf.mxu0
      %v2882 = vadd.f32 %v2601, %v2881
      %v2883 = vpop.f32.mrf.mxu0
      %v2884 = vpop.f32.mrf.mxu0
      %v2885 = vadd.f32 %v2604, %v2884
      %v2886 = vpop.f32.mrf.mxu0
      %2887 = vmatprep.mubr.bf16.mxu0 %v2758
      %2888 = vmatmul.mubr.bf16.gmra.mxu0 %v2217
      %v2889 = vpop.f32.mrf.mxu0
      %v2890 = vadd.f32 %v2609, %v2889
      %v2891 = vpop.f32.mrf.mxu0
      %v2892 = vpop.f32.mrf.mxu0
      %v2893 = vadd.f32 %v2612, %v2892
      %v2894 = vpop.f32.mrf.mxu0
      %2895 = vmatprep.mubr.bf16.mxu0 %v2761
      %2896 = vmatmul.mubr.bf16.gmra.mxu0 %v2219
      %v2897 = vpop.f32.mrf.mxu0
      %v2898 = vadd.f32 %v2617, %v2897
      %v2899 = vpop.f32.mrf.mxu0
      %v2900 = vpop.f32.mrf.mxu0
      %v2901 = vadd.f32 %v2620, %v2900
      %v2902 = vpop.f32.mrf.mxu0
      %2903 = vmatprep.mubr.bf16.mxu0 %v2764
      %2904 = vmatmul.mubr.bf16.gmra.mxu0 %v2221
      %v2905 = vpop.f32.mrf.mxu0
      %v2906 = vadd.f32 %v2625, %v2905
      %v2907 = vpop.f32.mrf.mxu0
      %v2908 = vpop.f32.mrf.mxu0
      %v2909 = vadd.f32 %v2628, %v2908
      %v2910 = vpop.f32.mrf.mxu0
      %2911 = vmatprep.mubr.bf16.mxu0 %v2767
      %2912 = vmatmul.mubr.bf16.gmra.mxu0 %v2223
      %v2913 = vpop.f32.mrf.mxu0
      %v2914 = vadd.f32 %v2633, %v2913
      %v2915 = vpop.f32.mrf.mxu0
      %v2916 = vpop.f32.mrf.mxu0
      %v2917 = vadd.f32 %v2636, %v2916
      %v2918 = vpop.f32.mrf.mxu0
      %2919 = vmatprep.mubr.bf16.mxu0 %v2770
      %2920 = vmatmul.mubr.bf16.gmra.mxu0 %v2225
      %v2921 = vpop.f32.mrf.mxu0
      %v2922 = vadd.f32 %v2641, %v2921
      %v2923 = vpop.f32.mrf.mxu0
      %v2924 = vpop.f32.mrf.mxu0
      %v2925 = vadd.f32 %v2644, %v2924
      %v2926 = vpop.f32.mrf.mxu0
      %2927 = vmatprep.mubr.bf16.mxu0 %v2773
      %2928 = vmatmul.mubr.bf16.gmra.mxu0 %v2227
      %v2929 = vpop.f32.mrf.mxu0
      %v2930 = vadd.f32 %v2649, %v2929
      %v2931 = vpop.f32.mrf.mxu0
      %v2932 = vpop.f32.mrf.mxu0
      %v2933 = vadd.f32 %v2652, %v2932
      %v2934 = vpop.f32.mrf.mxu0
      %2935 = vdwg.mxu0
      %s2936 = scalar_lea.vmem [#allocation3], 128
      %v2937 = vld [vmem:[%s2936 + $0x10] sm:$0xff]
      %v2938 = vld [vmem:[%s2936 + $0x18] sm:$0xff]
      %v2939 = vld [vmem:[%s2936 + $0x20] sm:$0xff]
      %v2940 = vld [vmem:[%s2936 + $0x28] sm:$0xff]
      %v2941 = vld [vmem:[%s2936 + $0x50] sm:$0xff]
      %v2942 = vld [vmem:[%s2936 + $0x58] sm:$0xff]
      %v2943 = vld [vmem:[%s2936 + $0x60] sm:$0xff]
      %v2944 = vld [vmem:[%s2936 + $0x68] sm:$0xff]
      %v2945 = vld [vmem:[%s2936 + $0x90] sm:$0xff]
      %v2946 = vld [vmem:[%s2936 + $0x98] sm:$0xff]
      %v2947 = vld [vmem:[%s2936 + $0xa0] sm:$0xff]
      %v2948 = vld [vmem:[%s2936 + $0xa8] sm:$0xff]
      %v2949 = vld [vmem:[%s2936 + $0xd0] sm:$0xff]
      %v2950 = vld [vmem:[%s2936 + $0xd8] sm:$0xff]
      %v2951 = vld [vmem:[%s2936 + $0xe0] sm:$0xff]
      %v2952 = vld [vmem:[%s2936 + $0xe8] sm:$0xff]
      %v2953 = vld [vmem:[%s2936 + $0x110] sm:$0xff]
      %v2954 = vld [vmem:[%s2936 + $0x118] sm:$0xff]
      %v2955 = vld [vmem:[%s2936 + $0x120] sm:$0xff]
      %v2956 = vld [vmem:[%s2936 + $0x128] sm:$0xff]
      %v2957 = vld [vmem:[%s2936 + $0x150] sm:$0xff]
      %v2958 = vld [vmem:[%s2936 + $0x158] sm:$0xff]
      %v2959 = vld [vmem:[%s2936 + $0x160] sm:$0xff]
      %v2960 = vld [vmem:[%s2936 + $0x168] sm:$0xff]
      %v2961 = vld [vmem:[%s2936 + $0x190] sm:$0xff]
      %v2962 = vld [vmem:[%s2936 + $0x198] sm:$0xff]
      %v2963 = vld [vmem:[%s2936 + $0x1a0] sm:$0xff]
      %v2964 = vld [vmem:[%s2936 + $0x1a8] sm:$0xff]
      %v2965 = vld [vmem:[%s2936 + $0x1d0] sm:$0xff]
      %v2966 = vld [vmem:[%s2936 + $0x1d8] sm:$0xff]
      %v2967 = vld [vmem:[%s2936 + $0x1e0] sm:$0xff]
      %v2968 = vld [vmem:[%s2936 + $0x1e8] sm:$0xff]
      %v2969 = vld [vmem:[%s2936 + $0x210] sm:$0xff]
      %v2970 = vld [vmem:[%s2936 + $0x218] sm:$0xff]
      %v2971 = vld [vmem:[%s2936 + $0x220] sm:$0xff]
      %v2972 = vld [vmem:[%s2936 + $0x228] sm:$0xff]
      %v2973 = vld [vmem:[%s2936 + $0x250] sm:$0xff]
      %v2974 = vld [vmem:[%s2936 + $0x258] sm:$0xff]
      %v2975 = vld [vmem:[%s2936 + $0x260] sm:$0xff]
      %v2976 = vld [vmem:[%s2936 + $0x268] sm:$0xff]
      %v2977 = vld [vmem:[%s2936 + $0x290] sm:$0xff]
      %v2978 = vld [vmem:[%s2936 + $0x298] sm:$0xff]
      %v2979 = vld [vmem:[%s2936 + $0x2a0] sm:$0xff]
      %v2980 = vld [vmem:[%s2936 + $0x2a8] sm:$0xff]
      %v2981 = vld [vmem:[%s2936 + $0x2d0] sm:$0xff]
      %v2982 = vld [vmem:[%s2936 + $0x2d8] sm:$0xff]
      %v2983 = vld [vmem:[%s2936 + $0x2e0] sm:$0xff]
      %v2984 = vld [vmem:[%s2936 + $0x2e8] sm:$0xff]
      %v2985 = vld [vmem:[%s2936 + $0x310] sm:$0xff]
      %v2986 = vld [vmem:[%s2936 + $0x318] sm:$0xff]
      %v2987 = vld [vmem:[%s2936 + $0x320] sm:$0xff]
      %v2988 = vld [vmem:[%s2936 + $0x328] sm:$0xff]
      %v2989 = vld [vmem:[%s2936 + $0x350] sm:$0xff]
      %v2990 = vld [vmem:[%s2936 + $0x358] sm:$0xff]
      %v2991 = vld [vmem:[%s2936 + $0x360] sm:$0xff]
      %v2992 = vld [vmem:[%s2936 + $0x368] sm:$0xff]
      %v2993 = vld [vmem:[%s2936 + $0x390] sm:$0xff]
      %v2994 = vld [vmem:[%s2936 + $0x398] sm:$0xff]
      %v2995 = vld [vmem:[%s2936 + $0x3a0] sm:$0xff]
      %v2996 = vld [vmem:[%s2936 + $0x3a8] sm:$0xff]
      %v2997 = vld [vmem:[%s2936 + $0x3d0] sm:$0xff]
      %v2998 = vld [vmem:[%s2936 + $0x3d8] sm:$0xff]
      %v2999 = vld [vmem:[%s2936 + $0x3e0] sm:$0xff]
      %v3000 = vld [vmem:[%s2936 + $0x3e8] sm:$0xff]
      %v3001 = vpack.c.bf16 %v2939, %v2937
      %v3002 = vpack.c.bf16 %v2940, %v2938
      %v3003 = vpack.c.bf16 %v2943, %v2941
      %v3004 = vpack.c.bf16 %v2944, %v2942
      %v3005 = vpack.c.bf16 %v2947, %v2945
      %v3006 = vpack.c.bf16 %v2948, %v2946
      %v3007 = vpack.c.bf16 %v2951, %v2949
      %v3008 = vpack.c.bf16 %v2952, %v2950
      %v3009 = vpack.c.bf16 %v2955, %v2953
      %v3010 = vpack.c.bf16 %v2956, %v2954
      %v3011 = vpack.c.bf16 %v2959, %v2957
      %v3012 = vpack.c.bf16 %v2960, %v2958
      %v3013 = vpack.c.bf16 %v2963, %v2961
      %v3014 = vpack.c.bf16 %v2964, %v2962
      %v3015 = vpack.c.bf16 %v2967, %v2965
      %v3016 = vpack.c.bf16 %v2968, %v2966
      %v3017 = vpack.c.bf16 %v2971, %v2969
      %v3018 = vpack.c.bf16 %v2972, %v2970
      %v3019 = vpack.c.bf16 %v2975, %v2973
      %v3020 = vpack.c.bf16 %v2976, %v2974
      %v3021 = vpack.c.bf16 %v2979, %v2977
      %v3022 = vpack.c.bf16 %v2980, %v2978
      %v3023 = vpack.c.bf16 %v2983, %v2981
      %v3024 = vpack.c.bf16 %v2984, %v2982
      %v3025 = vpack.c.bf16 %v2987, %v2985
      %v3026 = vpack.c.bf16 %v2988, %v2986
      %v3027 = vpack.c.bf16 %v2991, %v2989
      %v3028 = vpack.c.bf16 %v2992, %v2990
      %v3029 = vpack.c.bf16 %v2995, %v2993
      %v3030 = vpack.c.bf16 %v2996, %v2994
      %v3031 = vpack.c.bf16 %v2999, %v2997
      %v3032 = vpack.c.bf16 %v3000, %v2998
      %s3033 = scalar_lea.vmem %s3, 192
      %v3034 = vld [vmem:[%s3033] sm:$0xf]
      %v3035 = vld [vmem:[%s3033 + $0x4] sm:$0xf]
      %v3036 = vld [vmem:[%s3033 + $0x8] sm:$0xf]
      %v3037 = vld [vmem:[%s3033 + $0xc] sm:$0xf]
      %v3038 = vld [vmem:[%s3033 + $0x10] sm:$0xf]
      %v3039 = vld [vmem:[%s3033 + $0x14] sm:$0xf]
      %v3040 = vld [vmem:[%s3033 + $0x18] sm:$0xf]
      %v3041 = vld [vmem:[%s3033 + $0x1c] sm:$0xf]
      %v3042 = vld [vmem:[%s3033 + $0x20] sm:$0xf]
      %v3043 = vld [vmem:[%s3033 + $0x24] sm:$0xf]
      %v3044 = vld [vmem:[%s3033 + $0x28] sm:$0xf]
      %v3045 = vld [vmem:[%s3033 + $0x2c] sm:$0xf]
      %v3046 = vld [vmem:[%s3033 + $0x30] sm:$0xf]
      %v3047 = vld [vmem:[%s3033 + $0x34] sm:$0xf]
      %v3048 = vld [vmem:[%s3033 + $0x38] sm:$0xf]
      %v3049 = vld [vmem:[%s3033 + $0x3c] sm:$0xf]
      %v3050 = vld [vmem:[%s3033 + $0x40] sm:$0xf]
      %v3051 = vld [vmem:[%s3033 + $0x44] sm:$0xf]
      %v3052 = vld [vmem:[%s3033 + $0x48] sm:$0xf]
      %v3053 = vld [vmem:[%s3033 + $0x4c] sm:$0xf]
      %v3054 = vld [vmem:[%s3033 + $0x50] sm:$0xf]
      %v3055 = vld [vmem:[%s3033 + $0x54] sm:$0xf]
      %v3056 = vld [vmem:[%s3033 + $0x58] sm:$0xf]
      %v3057 = vld [vmem:[%s3033 + $0x5c] sm:$0xf]
      %v3082 = vunpack.c.l.b16 %v3034
      %v3083 = vunpack.c.l.b16 %v3035
      %v3084 = vunpack.c.l.b16 %v3036
      %v3085 = vunpack.c.l.b16 %v3037
      %v3086 = vunpack.c.l.b16 %v3038
      %v3087 = vunpack.c.l.b16 %v3039
      %v3088 = vunpack.c.l.b16 %v3040
      %v3089 = vunpack.c.l.b16 %v3041
      %v3090 = vunpack.c.l.b16 %v3042
      %v3091 = vunpack.c.l.b16 %v3043
      %v3092 = vunpack.c.l.b16 %v3044
      %v3093 = vunpack.c.l.b16 %v3045
      %v3094 = vunpack.c.l.b16 %v3046
      %v3095 = vunpack.c.l.b16 %v3047
      %v3096 = vunpack.c.l.b16 %v3048
      %v3097 = vunpack.c.l.b16 %v3049
      %v3098 = vunpack.c.l.b16 %v3050
      %v3099 = vunpack.c.l.b16 %v3051
      %v3100 = vunpack.c.l.b16 %v3052
      %v3101 = vunpack.c.l.b16 %v3053
      %v3102 = vunpack.c.l.b16 %v3054
      %v3103 = vunpack.c.l.b16 %v3055
      %v3104 = vunpack.c.l.b16 %v3056
      %v3105 = vunpack.c.l.b16 %v3057
      %v3106 = vpack.c.b16 %v3083, %v3082
      %v3107 = vpack.c.b16 %v3085, %v3084
      %v3108 = vpack.c.b16 %v3087, %v3086
      %v3109 = vpack.c.b16 %v3089, %v3088
      %v3110 = vpack.c.b16 %v3091, %v3090
      %v3111 = vpack.c.b16 %v3093, %v3092
      %v3112 = vpack.c.b16 %v3095, %v3094
      %v3113 = vpack.c.b16 %v3097, %v3096
      %v3114 = vpack.c.b16 %v3099, %v3098
      %v3115 = vpack.c.b16 %v3101, %v3100
      %v3116 = vpack.c.b16 %v3103, %v3102
      %v3117 = vpack.c.b16 %v3105, %v3104
      %v3131 = vsel %vm1556, %v3002, 0
      %v3134 = vsel %vm1556, %v3004, 0
      %v3137 = vsel %vm1556, %v3006, 0
      %v3140 = vsel %vm1556, %v3008, 0
      %v3143 = vsel %vm1556, %v3010, 0
      %v3146 = vsel %vm1556, %v3012, 0
      %v3149 = vsel %vm1556, %v3014, 0
      %v3152 = vsel %vm1556, %v3016, 0
      %v3155 = vsel %vm1556, %v3018, 0
      %v3158 = vsel %vm1556, %v3020, 0
      %v3161 = vsel %vm1556, %v3022, 0
      %v3164 = vsel %vm1556, %v3024, 0
      %v3167 = vsel %vm1556, %v3026, 0
      %v3170 = vsel %vm1556, %v3028, 0
      %v3173 = vsel %vm1556, %v3030, 0
      %v3176 = vsel %vm1556, %v3032, 0
      %3178 = vmatprep.subr.bf16.mxu0 0
      %3179 = vmatpush1.bf16.msra.mxu0 %v3113
      %3180 = vmatprep.subr.bf16.mxu0 0
      %3181 = vmatpush1.bf16.msra.mxu0 %v3112
      %3182 = vmatprep.subr.bf16.mxu0 0
      %3183 = vmatpush1.bf16.msra.mxu0 %v3111
      %3184 = vmatprep.subr.bf16.mxu0 0
      %3185 = vmatpush1.bf16.msra.mxu0 %v3110
      %3186 = vmatprep.subr.bf16.mxu0 0
      %3187 = vmatpush1.bf16.msra.mxu0 %v3109
      %3188 = vmatprep.subr.bf16.mxu0 0
      %3189 = vmatpush1.bf16.msra.mxu0 %v3108
      %3190 = vmatprep.subr.bf16.mxu0 0
      %3191 = vmatpush1.bf16.msra.mxu0 %v3107
      %3192 = vmatprep.subr.bf16.mxu0 0
      %3193 = vmatpush1.bf16.msra.mxu0 %v3106
      %3194 = vmatprep.subr.bf16.mxu0 0
      %3195 = vmatpush2.bf16.msra.mxu0 0
      %3196 = vmatprep.subr.bf16.mxu0 0
      %3197 = vmatpush2.bf16.msra.mxu0 0
      %3198 = vmatprep.subr.bf16.mxu0 0
      %3199 = vmatpush2.bf16.msra.mxu0 0
      %3200 = vmatprep.subr.bf16.mxu0 0
      %3201 = vmatpush2.bf16.msra.mxu0 0
      %3202 = vmatprep.subr.bf16.mxu0 0
      %3203 = vmatpush2.bf16.msra.mxu0 %v3117
      %3204 = vmatprep.subr.bf16.mxu0 0
      %3205 = vmatpush2.bf16.msra.mxu0 %v3116
      %3206 = vmatprep.subr.bf16.mxu0 0
      %3207 = vmatpush2.bf16.msra.mxu0 %v3115
      %3208 = vmatprep.subr.bf16.mxu0 0
      %3209 = vmatpush2.bf16.msra.mxu0 %v3114
      %3210 = vmatprep.mubr.bf16.mxu0 %v3131
      %3211 = vmatmul.mubr.bf16.gmra.mxu0 %v3001
      %v3212 = vpop.f32.mrf.mxu0
      %v3213 = vadd.f32 0.0, %v3212
      %v3214 = vpop.f32.mrf.mxu0
      %v3215 = vpop.f32.mrf.mxu0
      %v3216 = vadd.f32 0.0, %v3215
      %v3217 = vpop.f32.mrf.mxu0
      %3218 = vmatprep.mubr.bf16.mxu0 %v3134
      %3219 = vmatmul.mubr.bf16.gmra.mxu0 %v3003
      %v3220 = vpop.f32.mrf.mxu0
      %v3221 = vadd.f32 0.0, %v3220
      %v3222 = vpop.f32.mrf.mxu0
      %v3223 = vpop.f32.mrf.mxu0
      %v3224 = vadd.f32 0.0, %v3223
      %v3225 = vpop.f32.mrf.mxu0
      %3226 = vmatprep.mubr.bf16.mxu0 %v3137
      %3227 = vmatmul.mubr.bf16.gmra.mxu0 %v3005
      %v3228 = vpop.f32.mrf.mxu0
      %v3229 = vadd.f32 0.0, %v3228
      %v3230 = vpop.f32.mrf.mxu0
      %v3231 = vpop.f32.mrf.mxu0
      %v3232 = vadd.f32 0.0, %v3231
      %v3233 = vpop.f32.mrf.mxu0
      %3234 = vmatprep.mubr.bf16.mxu0 %v3140
      %3235 = vmatmul.mubr.bf16.gmra.mxu0 %v3007
      %v3236 = vpop.f32.mrf.mxu0
      %v3237 = vadd.f32 0.0, %v3236
      %v3238 = vpop.f32.mrf.mxu0
      %v3239 = vpop.f32.mrf.mxu0
      %v3240 = vadd.f32 0.0, %v3239
      %v3241 = vpop.f32.mrf.mxu0
      %3242 = vmatprep.mubr.bf16.mxu0 %v3143
      %3243 = vmatmul.mubr.bf16.gmra.mxu0 %v3009
      %v3244 = vpop.f32.mrf.mxu0
      %v3245 = vadd.f32 0.0, %v3244
      %v3246 = vpop.f32.mrf.mxu0
      %v3247 = vpop.f32.mrf.mxu0
      %v3248 = vadd.f32 0.0, %v3247
      %v3249 = vpop.f32.mrf.mxu0
      %3250 = vmatprep.mubr.bf16.mxu0 %v3146
      %3251 = vmatmul.mubr.bf16.gmra.mxu0 %v3011
      %v3252 = vpop.f32.mrf.mxu0
      %v3253 = vadd.f32 0.0, %v3252
      %v3254 = vpop.f32.mrf.mxu0
      %v3255 = vpop.f32.mrf.mxu0
      %v3256 = vadd.f32 0.0, %v3255
      %v3257 = vpop.f32.mrf.mxu0
      %3258 = vmatprep.mubr.bf16.mxu0 %v3149
      %3259 = vmatmul.mubr.bf16.gmra.mxu0 %v3013
      %v3260 = vpop.f32.mrf.mxu0
      %v3261 = vadd.f32 0.0, %v3260
      %v3262 = vpop.f32.mrf.mxu0
      %v3263 = vpop.f32.mrf.mxu0
      %v3264 = vadd.f32 0.0, %v3263
      %v3265 = vpop.f32.mrf.mxu0
      %3266 = vmatprep.mubr.bf16.mxu0 %v3152
      %3267 = vmatmul.mubr.bf16.gmra.mxu0 %v3015
      %v3268 = vpop.f32.mrf.mxu0
      %v3269 = vadd.f32 0.0, %v3268
      %v3270 = vpop.f32.mrf.mxu0
      %v3271 = vpop.f32.mrf.mxu0
      %v3272 = vadd.f32 0.0, %v3271
      %v3273 = vpop.f32.mrf.mxu0
      %3274 = vmatprep.mubr.bf16.mxu0 %v3155
      %3275 = vmatmul.mubr.bf16.gmra.mxu0 %v3017
      %v3276 = vpop.f32.mrf.mxu0
      %v3277 = vadd.f32 0.0, %v3276
      %v3278 = vpop.f32.mrf.mxu0
      %v3279 = vpop.f32.mrf.mxu0
      %v3280 = vadd.f32 0.0, %v3279
      %v3281 = vpop.f32.mrf.mxu0
      %3282 = vmatprep.mubr.bf16.mxu0 %v3158
      %3283 = vmatmul.mubr.bf16.gmra.mxu0 %v3019
      %v3284 = vpop.f32.mrf.mxu0
      %v3285 = vadd.f32 0.0, %v3284
      %v3286 = vpop.f32.mrf.mxu0
      %v3287 = vpop.f32.mrf.mxu0
      %v3288 = vadd.f32 0.0, %v3287
      %v3289 = vpop.f32.mrf.mxu0
      %3290 = vmatprep.mubr.bf16.mxu0 %v3161
      %3291 = vmatmul.mubr.bf16.gmra.mxu0 %v3021
      %v3292 = vpop.f32.mrf.mxu0
      %v3293 = vadd.f32 0.0, %v3292
      %v3294 = vpop.f32.mrf.mxu0
      %v3295 = vpop.f32.mrf.mxu0
      %v3296 = vadd.f32 0.0, %v3295
      %v3297 = vpop.f32.mrf.mxu0
      %3298 = vmatprep.mubr.bf16.mxu0 %v3164
      %3299 = vmatmul.mubr.bf16.gmra.mxu0 %v3023
      %v3300 = vpop.f32.mrf.mxu0
      %v3301 = vadd.f32 0.0, %v3300
      %v3302 = vpop.f32.mrf.mxu0
      %v3303 = vpop.f32.mrf.mxu0
      %v3304 = vadd.f32 0.0, %v3303
      %v3305 = vpop.f32.mrf.mxu0
      %3306 = vmatprep.mubr.bf16.mxu0 %v3167
      %3307 = vmatmul.mubr.bf16.gmra.mxu0 %v3025
      %v3308 = vpop.f32.mrf.mxu0
      %v3309 = vadd.f32 0.0, %v3308
      %v3310 = vpop.f32.mrf.mxu0
      %v3311 = vpop.f32.mrf.mxu0
      %v3312 = vadd.f32 0.0, %v3311
      %v3313 = vpop.f32.mrf.mxu0
      %3314 = vmatprep.mubr.bf16.mxu0 %v3170
      %3315 = vmatmul.mubr.bf16.gmra.mxu0 %v3027
      %v3316 = vpop.f32.mrf.mxu0
      %v3317 = vadd.f32 0.0, %v3316
      %v3318 = vpop.f32.mrf.mxu0
      %v3319 = vpop.f32.mrf.mxu0
      %v3320 = vadd.f32 0.0, %v3319
      %v3321 = vpop.f32.mrf.mxu0
      %3322 = vmatprep.mubr.bf16.mxu0 %v3173
      %3323 = vmatmul.mubr.bf16.gmra.mxu0 %v3029
      %v3324 = vpop.f32.mrf.mxu0
      %v3325 = vadd.f32 0.0, %v3324
      %v3326 = vpop.f32.mrf.mxu0
      %v3327 = vpop.f32.mrf.mxu0
      %v3328 = vadd.f32 0.0, %v3327
      %v3329 = vpop.f32.mrf.mxu0
      %3330 = vmatprep.mubr.bf16.mxu0 %v3176
      %3331 = vmatmul.mubr.bf16.gmra.mxu0 %v3031
      %v3332 = vpop.f32.mrf.mxu0
      %v3333 = vadd.f32 0.0, %v3332
      %v3334 = vpop.f32.mrf.mxu0
      %v3335 = vpop.f32.mrf.mxu0
      %v3336 = vadd.f32 0.0, %v3335
      %v3337 = vpop.f32.mrf.mxu0
      %3338 = vdwg.mxu0
      %v3339 = vadd.f32 %v2810, %v3213
      %v3340 = vadd.f32 %v2813, %v3216
      %v3341 = vadd.f32 %v2818, %v3221
      %v3342 = vadd.f32 %v2821, %v3224
      %v3343 = vadd.f32 %v2826, %v3229
      %v3344 = vadd.f32 %v2829, %v3232
      %v3345 = vadd.f32 %v2834, %v3237
      %v3346 = vadd.f32 %v2837, %v3240
      %v3347 = vadd.f32 %v2842, %v3245
      %v3348 = vadd.f32 %v2845, %v3248
      %v3349 = vadd.f32 %v2850, %v3253
      %v3350 = vadd.f32 %v2853, %v3256
      %v3351 = vadd.f32 %v2858, %v3261
      %v3352 = vadd.f32 %v2861, %v3264
      %v3353 = vadd.f32 %v2866, %v3269
      %v3354 = vadd.f32 %v2869, %v3272
      %v3355 = vadd.f32 %v2874, %v3277
      %v3356 = vadd.f32 %v2877, %v3280
      %v3357 = vadd.f32 %v2882, %v3285
      %v3358 = vadd.f32 %v2885, %v3288
      %v3359 = vadd.f32 %v2890, %v3293
      %v3360 = vadd.f32 %v2893, %v3296
      %v3361 = vadd.f32 %v2898, %v3301
      %v3362 = vadd.f32 %v2901, %v3304
      %v3363 = vadd.f32 %v2906, %v3309
      %v3364 = vadd.f32 %v2909, %v3312
      %v3365 = vadd.f32 %v2914, %v3317
      %v3366 = vadd.f32 %v2917, %v3320
      %v3367 = vadd.f32 %v2922, %v3325
      %v3368 = vadd.f32 %v2925, %v3328
      %v3369 = vadd.f32 %v2930, %v3333
      %v3370 = vadd.f32 %v2933, %v3336
      %v3371 = vld [vmem:[%s4] sm:$0x1]
      %v3373 = vlaneseq
      %v3374 = vshrl.u32 %v3373, 7
      %v3375 = vsub.s32 0, %v3374
      %v3376 = vrot.slane %v3371, %v3375
      %v3378 = vadd.f32 %v3339, %v3376
      %v3379 = vadd.f32 %v3340, %v3376
      %v3380 = vadd.f32 %v3341, %v3376
      %v3381 = vadd.f32 %v3342, %v3376
      %v3382 = vadd.f32 %v3343, %v3376
      %v3383 = vadd.f32 %v3344, %v3376
      %v3384 = vadd.f32 %v3345, %v3376
      %v3385 = vadd.f32 %v3346, %v3376
      %v3386 = vadd.f32 %v3347, %v3376
      %v3387 = vadd.f32 %v3348, %v3376
      %v3388 = vadd.f32 %v3349, %v3376
      %v3389 = vadd.f32 %v3350, %v3376
      %v3390 = vadd.f32 %v3351, %v3376
      %v3391 = vadd.f32 %v3352, %v3376
      %v3392 = vadd.f32 %v3353, %v3376
      %v3393 = vadd.f32 %v3354, %v3376
      %v3394 = vadd.f32 %v3355, %v3376
      %v3395 = vadd.f32 %v3356, %v3376
      %v3396 = vadd.f32 %v3357, %v3376
      %v3397 = vadd.f32 %v3358, %v3376
      %v3398 = vadd.f32 %v3359, %v3376
      %v3399 = vadd.f32 %v3360, %v3376
      %v3400 = vadd.f32 %v3361, %v3376
      %v3401 = vadd.f32 %v3362, %v3376
      %v3402 = vadd.f32 %v3363, %v3376
      %v3403 = vadd.f32 %v3364, %v3376
      %v3404 = vadd.f32 %v3365, %v3376
      %v3405 = vadd.f32 %v3366, %v3376
      %v3406 = vadd.f32 %v3367, %v3376
      %v3407 = vadd.f32 %v3368, %v3376
      %v3408 = vadd.f32 %v3369, %v3376
      %v3409 = vadd.f32 %v3370, %v3376
      %3410 = vst [vmem:[#allocation4 + $0x18] sm:$0xff] 0.0
      %3411 = vst [vmem:[#allocation4 + $0x20] sm:$0xff] 0.0
      %3412 = vst [vmem:[#allocation4 + $0x28] sm:$0xff] 0.0
      %3413 = vst [vmem:[#allocation4 + $0x30] sm:$0xff] 0.0
      %3414 = vst [vmem:[#allocation4 + $0x38] sm:$0xff] 0.0
      %3415 = vst [vmem:[#allocation4 + $0x40] sm:$0xff] 0.0
      %s3416 = scalar_lea.vmem [#allocation4], 1632
      %3417 = vst [vmem:[%s3416 + $0x18] sm:$0xff] 0.0
      %3418 = vst [vmem:[%s3416 + $0x20] sm:$0xff] 0.0
      %3419 = vst [vmem:[%s3416 + $0x28] sm:$0xff] 0.0
      %3420 = vst [vmem:[%s3416 + $0x30] sm:$0xff] 0.0
      %3421 = vst [vmem:[%s3416 + $0x38] sm:$0xff] 0.0
      %3422 = vst [vmem:[%s3416 + $0x40] sm:$0xff] 0.0
      %vm3423 = vcmp.lt.s32.totalorder %v1565, 384
      %vm3424 = vmand %vm1566, %vm3423
      %s3425 = scalar_lea.vmem [#allocation4], 24
      %3426 = vst.msk [vmem:[%s3425] ss:$8 sm:$0x7] %vm3424, 0.0
      %3427 = vst.msk [vmem:[%s3425] ss:$8 sm:$0x0] %vm3424, 0.0
      %s3428 = scalar_lea.vmem [#allocation4], 120
      %3429 = vst.msk [vmem:[%s3428] ss:$8 sm:$0x7] %vm3424, 0.0
      %3430 = vst.msk [vmem:[%s3428] ss:$8 sm:$0x0] %vm3424, 0.0
      %s3431 = scalar_lea.vmem [#allocation4], 216
      %3432 = vst.msk [vmem:[%s3431] ss:$8 sm:$0x7] %vm3424, 0.0
      %3433 = vst.msk [vmem:[%s3431] ss:$8 sm:$0x0] %vm3424, 0.0
      %s3434 = scalar_lea.vmem [#allocation4], 312
      %3435 = vst.msk [vmem:[%s3434] ss:$8 sm:$0x7] %vm3424, 0.0
      %3436 = vst.msk [vmem:[%s3434] ss:$8 sm:$0x0] %vm3424, 0.0
      %s3437 = scalar_lea.vmem [#allocation4], 408
      %3438 = vst.msk [vmem:[%s3437] ss:$8 sm:$0x7] %vm3424, 0.0
      %3439 = vst.msk [vmem:[%s3437] ss:$8 sm:$0x0] %vm3424, 0.0
      %s3440 = scalar_lea.vmem [#allocation4], 504
      %3441 = vst.msk [vmem:[%s3440] ss:$8 sm:$0x7] %vm3424, 0.0
      %3442 = vst.msk [vmem:[%s3440] ss:$8 sm:$0x0] %vm3424, 0.0
      %s3443 = scalar_lea.vmem [#allocation4], 600
      %3444 = vst.msk [vmem:[%s3443] ss:$8 sm:$0x7] %vm3424, 0.0
      %3445 = vst.msk [vmem:[%s3443] ss:$8 sm:$0x0] %vm3424, 0.0
      %s3446 = scalar_lea.vmem [#allocation4], 696
      %3447 = vst.msk [vmem:[%s3446] ss:$8 sm:$0x7] %vm3424, 0.0
      %3448 = vst.msk [vmem:[%s3446] ss:$8 sm:$0x0] %vm3424, 0.0
      %s3449 = scalar_lea.vmem [#allocation4], 792
      %3450 = vst.msk [vmem:[%s3449] ss:$8 sm:$0x7] %vm3424, 0.0
      %3451 = vst.msk [vmem:[%s3449] ss:$8 sm:$0x0] %vm3424, 0.0
      %s3452 = scalar_lea.vmem [#allocation4], 888
      %3453 = vst.msk [vmem:[%s3452] ss:$8 sm:$0x7] %vm3424, 0.0
      %3454 = vst.msk [vmem:[%s3452] ss:$8 sm:$0x0] %vm3424, 0.0
      %s3455 = scalar_lea.vmem [#allocation4], 984
      %3456 = vst.msk [vmem:[%s3455] ss:$8 sm:$0x7] %vm3424, 0.0
      %3457 = vst.msk [vmem:[%s3455] ss:$8 sm:$0x0] %vm3424, 0.0
      %s3458 = scalar_lea.vmem [#allocation4], 1080
      %3459 = vst.msk [vmem:[%s3458] ss:$8 sm:$0x7] %vm3424, 0.0
      %3460 = vst.msk [vmem:[%s3458] ss:$8 sm:$0x0] %vm3424, 0.0
      %s3461 = scalar_lea.vmem [#allocation4], 1176
      %3462 = vst.msk [vmem:[%s3461] ss:$8 sm:$0x7] %vm3424, 0.0
      %3463 = vst.msk [vmem:[%s3461] ss:$8 sm:$0x0] %vm3424, 0.0
      %s3464 = scalar_lea.vmem [#allocation4], 1272
      %3465 = vst.msk [vmem:[%s3464] ss:$8 sm:$0x7] %vm3424, 0.0
      %3466 = vst.msk [vmem:[%s3464] ss:$8 sm:$0x0] %vm3424, 0.0
      %s3467 = scalar_lea.vmem [#allocation4], 1368
      %3468 = vst.msk [vmem:[%s3467] ss:$8 sm:$0x7] %vm3424, 0.0
      %3469 = vst.msk [vmem:[%s3467] ss:$8 sm:$0x0] %vm3424, 0.0
      %s3470 = scalar_lea.vmem [#allocation4], 1464
      %3471 = vst.msk [vmem:[%s3470] ss:$8 sm:$0x7] %vm3424, 0.0
      %3472 = vst.msk [vmem:[%s3470] ss:$8 sm:$0x0] %vm3424, 0.0
      %s3473 = scalar_lea.vmem [#allocation4], 1560
      %3474 = vst.msk [vmem:[%s3473] ss:$8 sm:$0x7] %vm3424, 0.0
      %3475 = vst.msk [vmem:[%s3473] ss:$8 sm:$0x0] %vm3424, 0.0
      %s3476 = scalar_lea.vmem [#allocation4], 1656
      %3477 = vst.msk [vmem:[%s3476] ss:$8 sm:$0x7] %vm3424, 0.0
      %3478 = vst.msk [vmem:[%s3476] ss:$8 sm:$0x0] %vm3424, 0.0
      %s3479 = scalar_lea.vmem [#allocation4], 55
      %3480 = vst.msk [vmem:[%s3479] ss:$8 sm:$0x7] %vm3424, 0.0
      %3481 = vst.msk [vmem:[%s3479] ss:$8 sm:$0x0] %vm3424, 0.0
      %s3482 = scalar_lea.vmem [#allocation4], 151
      %3483 = vst.msk [vmem:[%s3482] ss:$8 sm:$0x7] %vm3424, 0.0
      %3484 = vst.msk [vmem:[%s3482] ss:$8 sm:$0x0] %vm3424, 0.0
      %s3485 = scalar_lea.vmem [#allocation4], 247
      %3486 = vst.msk [vmem:[%s3485] ss:$8 sm:$0x7] %vm3424, 0.0
      %3487 = vst.msk [vmem:[%s3485] ss:$8 sm:$0x0] %vm3424, 0.0
      %s3488 = scalar_lea.vmem [#allocation4], 343
      %3489 = vst.msk [vmem:[%s3488] ss:$8 sm:$0x7] %vm3424, 0.0
      %3490 = vst.msk [vmem:[%s3488] ss:$8 sm:$0x0] %vm3424, 0.0
      %s3491 = scalar_lea.vmem [#allocation4], 439
      %3492 = vst.msk [vmem:[%s3491] ss:$8 sm:$0x7] %vm3424, 0.0
      %3493 = vst.msk [vmem:[%s3491] ss:$8 sm:$0x0] %vm3424, 0.0
      %s3494 = scalar_lea.vmem [#allocation4], 535
      %3495 = vst.msk [vmem:[%s3494] ss:$8 sm:$0x7] %vm3424, 0.0
      %3496 = vst.msk [vmem:[%s3494] ss:$8 sm:$0x0] %vm3424, 0.0
      %s3497 = scalar_lea.vmem [#allocation4], 631
      %3498 = vst.msk [vmem:[%s3497] ss:$8 sm:$0x7] %vm3424, 0.0
      %3499 = vst.msk [vmem:[%s3497] ss:$8 sm:$0x0] %vm3424, 0.0
      %s3500 = scalar_lea.vmem [#allocation4], 727
      %3501 = vst.msk [vmem:[%s3500] ss:$8 sm:$0x7] %vm3424, 0.0
      %3502 = vst.msk [vmem:[%s3500] ss:$8 sm:$0x0] %vm3424, 0.0
      %s3503 = scalar_lea.vmem [#allocation4], 823
      %3504 = vst.msk [vmem:[%s3503] ss:$8 sm:$0x7] %vm3424, 0.0
      %3505 = vst.msk [vmem:[%s3503] ss:$8 sm:$0x0] %vm3424, 0.0
      %s3506 = scalar_lea.vmem [#allocation4], 919
      %3507 = vst.msk [vmem:[%s3506] ss:$8 sm:$0x7] %vm3424, 0.0
      %3508 = vst.msk [vmem:[%s3506] ss:$8 sm:$0x0] %vm3424, 0.0
      %s3509 = scalar_lea.vmem [#allocation4], 1015
      %3510 = vst.msk [vmem:[%s3509] ss:$8 sm:$0x7] %vm3424, 0.0
      %3511 = vst.msk [vmem:[%s3509] ss:$8 sm:$0x0] %vm3424, 0.0
      %s3512 = scalar_lea.vmem [#allocation4], 1111
      %3513 = vst.msk [vmem:[%s3512] ss:$8 sm:$0x7] %vm3424, 0.0
      %3514 = vst.msk [vmem:[%s3512] ss:$8 sm:$0x0] %vm3424, 0.0
      %s3515 = scalar_lea.vmem [#allocation4], 1207
      %3516 = vst.msk [vmem:[%s3515] ss:$8 sm:$0x7] %vm3424, 0.0
      %3517 = vst.msk [vmem:[%s3515] ss:$8 sm:$0x0] %vm3424, 0.0
      %s3518 = scalar_lea.vmem [#allocation4], 1303
      %3519 = vst.msk [vmem:[%s3518] ss:$8 sm:$0x7] %vm3424, 0.0
      %3520 = vst.msk [vmem:[%s3518] ss:$8 sm:$0x0] %vm3424, 0.0
      %s3521 = scalar_lea.vmem [#allocation4], 1399
      %3522 = vst.msk [vmem:[%s3521] ss:$8 sm:$0x7] %vm3424, 0.0
      %3523 = vst.msk [vmem:[%s3521] ss:$8 sm:$0x0] %vm3424, 0.0
      %s3524 = scalar_lea.vmem [#allocation4], 1495
      %3525 = vst.msk [vmem:[%s3524] ss:$8 sm:$0x7] %vm3424, 0.0
      %3526 = vst.msk [vmem:[%s3524] ss:$8 sm:$0x0] %vm3424, 0.0
      %s3527 = scalar_lea.vmem [#allocation4], 1591
      %3528 = vst.msk [vmem:[%s3527] ss:$8 sm:$0x7] %vm3424, 0.0
      %3529 = vst.msk [vmem:[%s3527] ss:$8 sm:$0x0] %vm3424, 0.0
      %s3530 = scalar_lea.vmem [#allocation4], 1687
      %3531 = vst.msk [vmem:[%s3530] ss:$8 sm:$0x7] %vm3424, 0.0
      %3532 = vst.msk [vmem:[%s3530] ss:$8 sm:$0x0] %vm3424, 0.0
      %v3565 = vrot.slane %v3378, 7
      %v3566 = vrot.slane %v3379, 7
      %v3567 = vsel %vm1709, %v3565, %v3566
      %v3568 = vrot.slane %v3380, 7
      %v3569 = vrot.slane %v3381, 7
      %v3570 = vsel %vm1709, %v3568, %v3569
      %v3571 = vrot.slane %v3382, 7
      %v3572 = vrot.slane %v3383, 7
      %v3573 = vsel %vm1709, %v3571, %v3572
      %v3574 = vrot.slane %v3384, 7
      %v3575 = vrot.slane %v3385, 7
      %v3576 = vsel %vm1709, %v3574, %v3575
      %v3577 = vrot.slane %v3386, 7
      %v3578 = vrot.slane %v3387, 7
      %v3579 = vsel %vm1709, %v3577, %v3578
      %v3580 = vrot.slane %v3388, 7
      %v3581 = vrot.slane %v3389, 7
      %v3582 = vsel %vm1709, %v3580, %v3581
      %v3583 = vrot.slane %v3390, 7
      %v3584 = vrot.slane %v3391, 7
      %v3585 = vsel %vm1709, %v3583, %v3584
      %v3586 = vrot.slane %v3392, 7
      %v3587 = vrot.slane %v3393, 7
      %v3588 = vsel %vm1709, %v3586, %v3587
      %v3589 = vrot.slane %v3394, 7
      %v3590 = vrot.slane %v3395, 7
      %v3591 = vsel %vm1709, %v3589, %v3590
      %v3592 = vrot.slane %v3396, 7
      %v3593 = vrot.slane %v3397, 7
      %v3594 = vsel %vm1709, %v3592, %v3593
      %v3595 = vrot.slane %v3398, 7
      %v3596 = vrot.slane %v3399, 7
      %v3597 = vsel %vm1709, %v3595, %v3596
      %v3598 = vrot.slane %v3400, 7
      %v3599 = vrot.slane %v3401, 7
      %v3600 = vsel %vm1709, %v3598, %v3599
      %v3601 = vrot.slane %v3402, 7
      %v3602 = vrot.slane %v3403, 7
      %v3603 = vsel %vm1709, %v3601, %v3602
      %v3604 = vrot.slane %v3404, 7
      %v3605 = vrot.slane %v3405, 7
      %v3606 = vsel %vm1709, %v3604, %v3605
      %v3607 = vrot.slane %v3406, 7
      %v3608 = vrot.slane %v3407, 7
      %v3609 = vsel %vm1709, %v3607, %v3608
      %v3610 = vrot.slane %v3408, 7
      %v3611 = vrot.slane %v3409, 7
      %v3612 = vsel %vm1709, %v3610, %v3611
      %s3661 = scalar_lea.vmem [#allocation4], 96
      %3662 = vst [vmem:[%s3661 + $0x18] sm:$0xfe] %v3565
      %3663 = vst [vmem:[%s3661 + $0x30] sm:$0xff] %v3567
      %3664 = vst [vmem:[%s3661 + $0x48] sm:$0x1] %v3566
      %3665 = vst [vmem:[%s3661 + $0x78] sm:$0xfe] %v3568
      %3666 = vst [vmem:[%s3661 + $0x90] sm:$0xff] %v3570
      %3667 = vst [vmem:[%s3661 + $0xa8] sm:$0x1] %v3569
      %3668 = vst [vmem:[%s3661 + $0xd8] sm:$0xfe] %v3571
      %3669 = vst [vmem:[%s3661 + $0xf0] sm:$0xff] %v3573
      %3670 = vst [vmem:[%s3661 + $0x108] sm:$0x1] %v3572
      %3671 = vst [vmem:[%s3661 + $0x138] sm:$0xfe] %v3574
      %3672 = vst [vmem:[%s3661 + $0x150] sm:$0xff] %v3576
      %3673 = vst [vmem:[%s3661 + $0x168] sm:$0x1] %v3575
      %3674 = vst [vmem:[%s3661 + $0x198] sm:$0xfe] %v3577
      %3675 = vst [vmem:[%s3661 + $0x1b0] sm:$0xff] %v3579
      %3676 = vst [vmem:[%s3661 + $0x1c8] sm:$0x1] %v3578
      %3677 = vst [vmem:[%s3661 + $0x1f8] sm:$0xfe] %v3580
      %3678 = vst [vmem:[%s3661 + $0x210] sm:$0xff] %v3582
      %3679 = vst [vmem:[%s3661 + $0x228] sm:$0x1] %v3581
      %3680 = vst [vmem:[%s3661 + $0x258] sm:$0xfe] %v3583
      %3681 = vst [vmem:[%s3661 + $0x270] sm:$0xff] %v3585
      %3682 = vst [vmem:[%s3661 + $0x288] sm:$0x1] %v3584
      %3683 = vst [vmem:[%s3661 + $0x2b8] sm:$0xfe] %v3586
      %3684 = vst [vmem:[%s3661 + $0x2d0] sm:$0xff] %v3588
      %3685 = vst [vmem:[%s3661 + $0x2e8] sm:$0x1] %v3587
      %3686 = vst [vmem:[%s3661 + $0x318] sm:$0xfe] %v3589
      %3687 = vst [vmem:[%s3661 + $0x330] sm:$0xff] %v3591
      %3688 = vst [vmem:[%s3661 + $0x348] sm:$0x1] %v3590
      %3689 = vst [vmem:[%s3661 + $0x378] sm:$0xfe] %v3592
      %3690 = vst [vmem:[%s3661 + $0x390] sm:$0xff] %v3594
      %3691 = vst [vmem:[%s3661 + $0x3a8] sm:$0x1] %v3593
      %3692 = vst [vmem:[%s3661 + $0x3d8] sm:$0xfe] %v3595
      %3693 = vst [vmem:[%s3661 + $0x3f0] sm:$0xff] %v3597
      %3694 = vst [vmem:[%s3661 + $0x408] sm:$0x1] %v3596
      %3695 = vst [vmem:[%s3661 + $0x438] sm:$0xfe] %v3598
      %3696 = vst [vmem:[%s3661 + $0x450] sm:$0xff] %v3600
      %3697 = vst [vmem:[%s3661 + $0x468] sm:$0x1] %v3599
      %3698 = vst [vmem:[%s3661 + $0x498] sm:$0xfe] %v3601
      %3699 = vst [vmem:[%s3661 + $0x4b0] sm:$0xff] %v3603
      %3700 = vst [vmem:[%s3661 + $0x4c8] sm:$0x1] %v3602
      %3701 = vst [vmem:[%s3661 + $0x4f8] sm:$0xfe] %v3604
      %3702 = vst [vmem:[%s3661 + $0x510] sm:$0xff] %v3606
      %3703 = vst [vmem:[%s3661 + $0x528] sm:$0x1] %v3605
      %3704 = vst [vmem:[%s3661 + $0x558] sm:$0xfe] %v3607
      %3705 = vst [vmem:[%s3661 + $0x570] sm:$0xff] %v3609
      %3706 = vst [vmem:[%s3661 + $0x588] sm:$0x1] %v3608
      %3707 = vst [vmem:[%s3661 + $0x5b8] sm:$0xfe] %v3610
      %3708 = vst [vmem:[%s3661 + $0x5d0] sm:$0xff] %v3612
      %3709 = vst [vmem:[%s3661 + $0x5e8] sm:$0x1] %v3611
      %3710 = vst [vmem:[%s3661 + $0x20] sm:$0xff] %v3378
      %3711 = vst [vmem:[%s3661 + $0x38] sm:$0xff] %v3379
      %3712 = vst [vmem:[%s3661 + $0x80] sm:$0xff] %v3380
      %3713 = vst [vmem:[%s3661 + $0x98] sm:$0xff] %v3381
      %3714 = vst [vmem:[%s3661 + $0xe0] sm:$0xff] %v3382
      %3715 = vst [vmem:[%s3661 + $0xf8] sm:$0xff] %v3383
      %3716 = vst [vmem:[%s3661 + $0x140] sm:$0xff] %v3384
      %3717 = vst [vmem:[%s3661 + $0x158] sm:$0xff] %v3385
      %3718 = vst [vmem:[%s3661 + $0x1a0] sm:$0xff] %v3386
      %3719 = vst [vmem:[%s3661 + $0x1b8] sm:$0xff] %v3387
      %3720 = vst [vmem:[%s3661 + $0x200] sm:$0xff] %v3388
      %3721 = vst [vmem:[%s3661 + $0x218] sm:$0xff] %v3389
      %3722 = vst [vmem:[%s3661 + $0x260] sm:$0xff] %v3390
      %3723 = vst [vmem:[%s3661 + $0x278] sm:$0xff] %v3391
      %3724 = vst [vmem:[%s3661 + $0x2c0] sm:$0xff] %v3392
      %3725 = vst [vmem:[%s3661 + $0x2d8] sm:$0xff] %v3393
      %3726 = vst [vmem:[%s3661 + $0x320] sm:$0xff] %v3394
      %3727 = vst [vmem:[%s3661 + $0x338] sm:$0xff] %v3395
      %3728 = vst [vmem:[%s3661 + $0x380] sm:$0xff] %v3396
      %3729 = vst [vmem:[%s3661 + $0x398] sm:$0xff] %v3397
      %3730 = vst [vmem:[%s3661 + $0x3e0] sm:$0xff] %v3398
      %3731 = vst [vmem:[%s3661 + $0x3f8] sm:$0xff] %v3399
      %3732 = vst [vmem:[%s3661 + $0x440] sm:$0xff] %v3400
      %3733 = vst [vmem:[%s3661 + $0x458] sm:$0xff] %v3401
      %3734 = vst [vmem:[%s3661 + $0x4a0] sm:$0xff] %v3402
      %3735 = vst [vmem:[%s3661 + $0x4b8] sm:$0xff] %v3403
      %3736 = vst [vmem:[%s3661 + $0x500] sm:$0xff] %v3404
      %3737 = vst [vmem:[%s3661 + $0x518] sm:$0xff] %v3405
      %3738 = vst [vmem:[%s3661 + $0x560] sm:$0xff] %v3406
      %3739 = vst [vmem:[%s3661 + $0x578] sm:$0xff] %v3407
      %3740 = vst [vmem:[%s3661 + $0x5c0] sm:$0xff] %v3408
      %3741 = vst [vmem:[%s3661 + $0x5d8] sm:$0xff] %v3409
      %v3742 = vrot.slane %v3378, 1
      %v3743 = vrot.slane %v3379, 1
      %v3744 = vsel %vm1986, %v3742, %v3743
      %v3745 = vrot.slane %v3380, 1
      %v3746 = vrot.slane %v3381, 1
      %v3747 = vsel %vm1986, %v3745, %v3746
      %v3748 = vrot.slane %v3382, 1
      %v3749 = vrot.slane %v3383, 1
      %v3750 = vsel %vm1986, %v3748, %v3749
      %v3751 = vrot.slane %v3384, 1
      %v3752 = vrot.slane %v3385, 1
      %v3753 = vsel %vm1986, %v3751, %v3752
      %v3754 = vrot.slane %v3386, 1
      %v3755 = vrot.slane %v3387, 1
      %v3756 = vsel %vm1986, %v3754, %v3755
      %v3757 = vrot.slane %v3388, 1
      %v3758 = vrot.slane %v3389, 1
      %v3759 = vsel %vm1986, %v3757, %v3758
      %v3760 = vrot.slane %v3390, 1
      %v3761 = vrot.slane %v3391, 1
      %v3762 = vsel %vm1986, %v3760, %v3761
      %v3763 = vrot.slane %v3392, 1
      %v3764 = vrot.slane %v3393, 1
      %v3765 = vsel %vm1986, %v3763, %v3764
      %v3766 = vrot.slane %v3394, 1
      %v3767 = vrot.slane %v3395, 1
      %v3768 = vsel %vm1986, %v3766, %v3767
      %v3769 = vrot.slane %v3396, 1
      %v3770 = vrot.slane %v3397, 1
      %v3771 = vsel %vm1986, %v3769, %v3770
      %v3772 = vrot.slane %v3398, 1
      %v3773 = vrot.slane %v3399, 1
      %v3774 = vsel %vm1986, %v3772, %v3773
      %v3775 = vrot.slane %v3400, 1
      %v3776 = vrot.slane %v3401, 1
      %v3777 = vsel %vm1986, %v3775, %v3776
      %v3778 = vrot.slane %v3402, 1
      %v3779 = vrot.slane %v3403, 1
      %v3780 = vsel %vm1986, %v3778, %v3779
      %v3781 = vrot.slane %v3404, 1
      %v3782 = vrot.slane %v3405, 1
      %v3783 = vsel %vm1986, %v3781, %v3782
      %v3784 = vrot.slane %v3406, 1
      %v3785 = vrot.slane %v3407, 1
      %v3786 = vsel %vm1986, %v3784, %v3785
      %v3787 = vrot.slane %v3408, 1
      %v3788 = vrot.slane %v3409, 1
      %v3789 = vsel %vm1986, %v3787, %v3788
      %3838 = vst [vmem:[%s3661 + $0x10] sm:$0x80] %v3742
      %3839 = vst [vmem:[%s3661 + $0x28] sm:$0xff] %v3744
      %3840 = vst [vmem:[%s3661 + $0x40] sm:$0x7f] %v3743
      %3841 = vst [vmem:[%s3661 + $0x70] sm:$0x80] %v3745
      %3842 = vst [vmem:[%s3661 + $0x88] sm:$0xff] %v3747
      %3843 = vst [vmem:[%s3661 + $0xa0] sm:$0x7f] %v3746
      %3844 = vst [vmem:[%s3661 + $0xd0] sm:$0x80] %v3748
      %3845 = vst [vmem:[%s3661 + $0xe8] sm:$0xff] %v3750
      %3846 = vst [vmem:[%s3661 + $0x100] sm:$0x7f] %v3749
      %3847 = vst [vmem:[%s3661 + $0x130] sm:$0x80] %v3751
      %3848 = vst [vmem:[%s3661 + $0x148] sm:$0xff] %v3753
      %3849 = vst [vmem:[%s3661 + $0x160] sm:$0x7f] %v3752
      %3850 = vst [vmem:[%s3661 + $0x190] sm:$0x80] %v3754
      %3851 = vst [vmem:[%s3661 + $0x1a8] sm:$0xff] %v3756
      %3852 = vst [vmem:[%s3661 + $0x1c0] sm:$0x7f] %v3755
      %3853 = vst [vmem:[%s3661 + $0x1f0] sm:$0x80] %v3757
      %3854 = vst [vmem:[%s3661 + $0x208] sm:$0xff] %v3759
      %3855 = vst [vmem:[%s3661 + $0x220] sm:$0x7f] %v3758
      %3856 = vst [vmem:[%s3661 + $0x250] sm:$0x80] %v3760
      %3857 = vst [vmem:[%s3661 + $0x268] sm:$0xff] %v3762
      %3858 = vst [vmem:[%s3661 + $0x280] sm:$0x7f] %v3761
      %3859 = vst [vmem:[%s3661 + $0x2b0] sm:$0x80] %v3763
      %3860 = vst [vmem:[%s3661 + $0x2c8] sm:$0xff] %v3765
      %3861 = vst [vmem:[%s3661 + $0x2e0] sm:$0x7f] %v3764
      %3862 = vst [vmem:[%s3661 + $0x310] sm:$0x80] %v3766
      %3863 = vst [vmem:[%s3661 + $0x328] sm:$0xff] %v3768
      %3864 = vst [vmem:[%s3661 + $0x340] sm:$0x7f] %v3767
      %3865 = vst [vmem:[%s3661 + $0x370] sm:$0x80] %v3769
      %3866 = vst [vmem:[%s3661 + $0x388] sm:$0xff] %v3771
      %3867 = vst [vmem:[%s3661 + $0x3a0] sm:$0x7f] %v3770
      %3868 = vst [vmem:[%s3661 + $0x3d0] sm:$0x80] %v3772
      %3869 = vst [vmem:[%s3661 + $0x3e8] sm:$0xff] %v3774
      %3870 = vst [vmem:[%s3661 + $0x400] sm:$0x7f] %v3773
      %3871 = vst [vmem:[%s3661 + $0x430] sm:$0x80] %v3775
      %3872 = vst [vmem:[%s3661 + $0x448] sm:$0xff] %v3777
      %3873 = vst [vmem:[%s3661 + $0x460] sm:$0x7f] %v3776
      %3874 = vst [vmem:[%s3661 + $0x490] sm:$0x80] %v3778
      %3875 = vst [vmem:[%s3661 + $0x4a8] sm:$0xff] %v3780
      %3876 = vst [vmem:[%s3661 + $0x4c0] sm:$0x7f] %v3779
      %3877 = vst [vmem:[%s3661 + $0x4f0] sm:$0x80] %v3781
      %3878 = vst [vmem:[%s3661 + $0x508] sm:$0xff] %v3783
      %3879 = vst [vmem:[%s3661 + $0x520] sm:$0x7f] %v3782
      %3880 = vst [vmem:[%s3661 + $0x550] sm:$0x80] %v3784
      %3881 = vst [vmem:[%s3661 + $0x568] sm:$0xff] %v3786
      %3882 = vst [vmem:[%s3661 + $0x580] sm:$0x7f] %v3785
      %3883 = vst [vmem:[%s3661 + $0x5b0] sm:$0x80] %v3787
      %3884 = vst [vmem:[%s3661 + $0x5c8] sm:$0xff] %v3789
      %3885 = vst [vmem:[%s3661 + $0x5e0] sm:$0x7f] %v3788
      %v3886 = vld [vmem:[#allocation4 + $0x18] sm:$0xff]
      %v3887 = vld [vmem:[#allocation4 + $0x20] sm:$0xff]
      %v3888 = vld [vmem:[#allocation4 + $0x28] sm:$0xff]
      %v3889 = vld [vmem:[#allocation4 + $0x30] sm:$0xff]
      %v3890 = vld [vmem:[#allocation4 + $0x38] sm:$0xff]
      %v3891 = vld [vmem:[#allocation4 + $0x40] sm:$0xff]
      %v3892 = vld [vmem:[#allocation4 + $0x78] sm:$0xff]
      %v3893 = vld [vmem:[#allocation4 + $0x80] sm:$0xff]
      %v3894 = vld [vmem:[#allocation4 + $0x88] sm:$0xff]
      %v3895 = vld [vmem:[#allocation4 + $0x90] sm:$0xff]
      %v3896 = vld [vmem:[#allocation4 + $0x98] sm:$0xff]
      %v3897 = vld [vmem:[#allocation4 + $0xa0] sm:$0xff]
      %v3898 = vld [vmem:[#allocation4 + $0xd8] sm:$0xff]
      %v3899 = vld [vmem:[#allocation4 + $0xe0] sm:$0xff]
      %v3900 = vld [vmem:[#allocation4 + $0xe8] sm:$0xff]
      %v3901 = vld [vmem:[#allocation4 + $0xf0] sm:$0xff]
      %v3902 = vld [vmem:[#allocation4 + $0xf8] sm:$0xff]
      %v3903 = vld [vmem:[#allocation4 + $0x100] sm:$0xff]
      %v3904 = vld [vmem:[#allocation4 + $0x138] sm:$0xff]
      %v3905 = vld [vmem:[#allocation4 + $0x140] sm:$0xff]
      %v3906 = vld [vmem:[#allocation4 + $0x148] sm:$0xff]
      %v3907 = vld [vmem:[#allocation4 + $0x150] sm:$0xff]
      %v3908 = vld [vmem:[#allocation4 + $0x158] sm:$0xff]
      %v3909 = vld [vmem:[#allocation4 + $0x160] sm:$0xff]
      %v3910 = vld [vmem:[#allocation4 + $0x198] sm:$0xff]
      %v3911 = vld [vmem:[#allocation4 + $0x1a0] sm:$0xff]
      %v3912 = vld [vmem:[#allocation4 + $0x1a8] sm:$0xff]
      %v3913 = vld [vmem:[#allocation4 + $0x1b0] sm:$0xff]
      %v3914 = vld [vmem:[#allocation4 + $0x1b8] sm:$0xff]
      %v3915 = vld [vmem:[#allocation4 + $0x1c0] sm:$0xff]
      %v3916 = vld [vmem:[#allocation4 + $0x1f8] sm:$0xff]
      %v3917 = vld [vmem:[#allocation4 + $0x200] sm:$0xff]
      %v3918 = vld [vmem:[#allocation4 + $0x208] sm:$0xff]
      %v3919 = vld [vmem:[#allocation4 + $0x210] sm:$0xff]
      %v3920 = vld [vmem:[#allocation4 + $0x218] sm:$0xff]
      %v3921 = vld [vmem:[#allocation4 + $0x220] sm:$0xff]
      %v3922 = vld [vmem:[#allocation4 + $0x258] sm:$0xff]
      %v3923 = vld [vmem:[#allocation4 + $0x260] sm:$0xff]
      %v3924 = vld [vmem:[#allocation4 + $0x268] sm:$0xff]
      %v3925 = vld [vmem:[#allocation4 + $0x270] sm:$0xff]
      %v3926 = vld [vmem:[#allocation4 + $0x278] sm:$0xff]
      %v3927 = vld [vmem:[#allocation4 + $0x280] sm:$0xff]
      %v3928 = vld [vmem:[#allocation4 + $0x2b8] sm:$0xff]
      %v3929 = vld [vmem:[#allocation4 + $0x2c0] sm:$0xff]
      %v3930 = vld [vmem:[#allocation4 + $0x2c8] sm:$0xff]
      %v3931 = vld [vmem:[#allocation4 + $0x2d0] sm:$0xff]
      %v3932 = vld [vmem:[#allocation4 + $0x2d8] sm:$0xff]
      %v3933 = vld [vmem:[#allocation4 + $0x2e0] sm:$0xff]
      %v3934 = vld [vmem:[#allocation4 + $0x318] sm:$0xff]
      %v3935 = vld [vmem:[#allocation4 + $0x320] sm:$0xff]
      %v3936 = vld [vmem:[#allocation4 + $0x328] sm:$0xff]
      %v3937 = vld [vmem:[#allocation4 + $0x330] sm:$0xff]
      %v3938 = vld [vmem:[#allocation4 + $0x338] sm:$0xff]
      %v3939 = vld [vmem:[#allocation4 + $0x340] sm:$0xff]
      %v3940 = vld [vmem:[#allocation4 + $0x378] sm:$0xff]
      %v3941 = vld [vmem:[#allocation4 + $0x380] sm:$0xff]
      %v3942 = vld [vmem:[#allocation4 + $0x388] sm:$0xff]
      %v3943 = vld [vmem:[#allocation4 + $0x390] sm:$0xff]
      %v3944 = vld [vmem:[#allocation4 + $0x398] sm:$0xff]
      %v3945 = vld [vmem:[#allocation4 + $0x3a0] sm:$0xff]
      %v3946 = vld [vmem:[#allocation4 + $0x3d8] sm:$0xff]
      %v3947 = vld [vmem:[#allocation4 + $0x3e0] sm:$0xff]
      %v3948 = vld [vmem:[#allocation4 + $0x3e8] sm:$0xff]
      %v3949 = vld [vmem:[#allocation4 + $0x3f0] sm:$0xff]
      %v3950 = vld [vmem:[#allocation4 + $0x3f8] sm:$0xff]
      %v3951 = vld [vmem:[#allocation4 + $0x400] sm:$0xff]
      %v3952 = vld [vmem:[#allocation4 + $0x438] sm:$0xff]
      %v3953 = vld [vmem:[#allocation4 + $0x440] sm:$0xff]
      %v3954 = vld [vmem:[#allocation4 + $0x448] sm:$0xff]
      %v3955 = vld [vmem:[#allocation4 + $0x450] sm:$0xff]
      %v3956 = vld [vmem:[#allocation4 + $0x458] sm:$0xff]
      %v3957 = vld [vmem:[#allocation4 + $0x460] sm:$0xff]
      %v3958 = vld [vmem:[#allocation4 + $0x498] sm:$0xff]
      %v3959 = vld [vmem:[#allocation4 + $0x4a0] sm:$0xff]
      %v3960 = vld [vmem:[#allocation4 + $0x4a8] sm:$0xff]
      %v3961 = vld [vmem:[#allocation4 + $0x4b0] sm:$0xff]
      %v3962 = vld [vmem:[#allocation4 + $0x4b8] sm:$0xff]
      %v3963 = vld [vmem:[#allocation4 + $0x4c0] sm:$0xff]
      %v3964 = vld [vmem:[#allocation4 + $0x4f8] sm:$0xff]
      %v3965 = vld [vmem:[#allocation4 + $0x500] sm:$0xff]
      %v3966 = vld [vmem:[#allocation4 + $0x508] sm:$0xff]
      %v3967 = vld [vmem:[#allocation4 + $0x510] sm:$0xff]
      %v3968 = vld [vmem:[#allocation4 + $0x518] sm:$0xff]
      %v3969 = vld [vmem:[#allocation4 + $0x520] sm:$0xff]
      %v3970 = vld [vmem:[#allocation4 + $0x558] sm:$0xff]
      %v3971 = vld [vmem:[#allocation4 + $0x560] sm:$0xff]
      %v3972 = vld [vmem:[#allocation4 + $0x568] sm:$0xff]
      %v3973 = vld [vmem:[#allocation4 + $0x570] sm:$0xff]
      %v3974 = vld [vmem:[#allocation4 + $0x578] sm:$0xff]
      %v3975 = vld [vmem:[#allocation4 + $0x580] sm:$0xff]
      %v3976 = vld [vmem:[#allocation4 + $0x5b8] sm:$0xff]
      %v3977 = vld [vmem:[#allocation4 + $0x5c0] sm:$0xff]
      %v3978 = vld [vmem:[#allocation4 + $0x5c8] sm:$0xff]
      %v3979 = vld [vmem:[#allocation4 + $0x5d0] sm:$0xff]
      %v3980 = vld [vmem:[#allocation4 + $0x5d8] sm:$0xff]
      %v3981 = vld [vmem:[#allocation4 + $0x5e0] sm:$0xff]
      %v3982 = vpack.c.bf16 %v3889, %v3886
      %v3983 = vpack.c.bf16 %v3890, %v3887
      %v3984 = vpack.c.bf16 %v3891, %v3888
      %v3985 = vpack.c.bf16 %v3895, %v3892
      %v3986 = vpack.c.bf16 %v3896, %v3893
      %v3987 = vpack.c.bf16 %v3897, %v3894
      %v3988 = vpack.c.bf16 %v3901, %v3898
      %v3989 = vpack.c.bf16 %v3902, %v3899
      %v3990 = vpack.c.bf16 %v3903, %v3900
      %v3991 = vpack.c.bf16 %v3907, %v3904
      %v3992 = vpack.c.bf16 %v3908, %v3905
      %v3993 = vpack.c.bf16 %v3909, %v3906
      %v3994 = vpack.c.bf16 %v3913, %v3910
      %v3995 = vpack.c.bf16 %v3914, %v3911
      %v3996 = vpack.c.bf16 %v3915, %v3912
      %v3997 = vpack.c.bf16 %v3919, %v3916
      %v3998 = vpack.c.bf16 %v3920, %v3917
      %v3999 = vpack.c.bf16 %v3921, %v3918
      %v4000 = vpack.c.bf16 %v3925, %v3922
      %v4001 = vpack.c.bf16 %v3926, %v3923
      %v4002 = vpack.c.bf16 %v3927, %v3924
      %v4003 = vpack.c.bf16 %v3931, %v3928
      %v4004 = vpack.c.bf16 %v3932, %v3929
      %v4005 = vpack.c.bf16 %v3933, %v3930
      %v4006 = vpack.c.bf16 %v3937, %v3934
      %v4007 = vpack.c.bf16 %v3938, %v3935
      %v4008 = vpack.c.bf16 %v3939, %v3936
      %v4009 = vpack.c.bf16 %v3943, %v3940
      %v4010 = vpack.c.bf16 %v3944, %v3941
      %v4011 = vpack.c.bf16 %v3945, %v3942
      %v4012 = vpack.c.bf16 %v3949, %v3946
      %v4013 = vpack.c.bf16 %v3950, %v3947
      %v4014 = vpack.c.bf16 %v3951, %v3948
      %v4015 = vpack.c.bf16 %v3955, %v3952
      %v4016 = vpack.c.bf16 %v3956, %v3953
      %v4017 = vpack.c.bf16 %v3957, %v3954
      %v4018 = vpack.c.bf16 %v3961, %v3958
      %v4019 = vpack.c.bf16 %v3962, %v3959
      %v4020 = vpack.c.bf16 %v3963, %v3960
      %v4021 = vpack.c.bf16 %v3967, %v3964
      %v4022 = vpack.c.bf16 %v3968, %v3965
      %v4023 = vpack.c.bf16 %v3969, %v3966
      %v4024 = vpack.c.bf16 %v3973, %v3970
      %v4025 = vpack.c.bf16 %v3974, %v3971
      %v4026 = vpack.c.bf16 %v3975, %v3972
      %v4027 = vpack.c.bf16 %v3979, %v3976
      %v4028 = vpack.c.bf16 %v3980, %v3977
      %v4029 = vpack.c.bf16 %v3981, %v3978
      %v4030 = vld [vmem:[%s5] sm:$0xf]
      %v4031 = vld [vmem:[%s5 + $0x4] sm:$0xf]
      %v4032 = vld [vmem:[%s5 + $0x8] sm:$0xf]
      %v4033 = vld [vmem:[%s5 + $0xc] sm:$0xf]
      %v4034 = vld [vmem:[%s5 + $0x10] sm:$0xf]
      %v4035 = vld [vmem:[%s5 + $0x14] sm:$0xf]
      %v4036 = vld [vmem:[%s5 + $0x18] sm:$0xf]
      %v4037 = vld [vmem:[%s5 + $0x1c] sm:$0xf]
      %v4038 = vld [vmem:[%s5 + $0x20] sm:$0xf]
      %v4039 = vld [vmem:[%s5 + $0x24] sm:$0xf]
      %v4040 = vld [vmem:[%s5 + $0x28] sm:$0xf]
      %v4041 = vld [vmem:[%s5 + $0x2c] sm:$0xf]
      %v4042 = vld [vmem:[%s5 + $0x30] sm:$0xf]
      %v4043 = vld [vmem:[%s5 + $0x34] sm:$0xf]
      %v4044 = vld [vmem:[%s5 + $0x38] sm:$0xf]
      %v4045 = vld [vmem:[%s5 + $0x3c] sm:$0xf]
      %v4046 = vld [vmem:[%s5 + $0x40] sm:$0xf]
      %v4047 = vld [vmem:[%s5 + $0x44] sm:$0xf]
      %v4048 = vld [vmem:[%s5 + $0x48] sm:$0xf]
      %v4049 = vld [vmem:[%s5 + $0x4c] sm:$0xf]
      %v4050 = vld [vmem:[%s5 + $0x50] sm:$0xf]
      %v4051 = vld [vmem:[%s5 + $0x54] sm:$0xf]
      %v4052 = vld [vmem:[%s5 + $0x58] sm:$0xf]
      %v4053 = vld [vmem:[%s5 + $0x5c] sm:$0xf]
      %v4054 = vld [vmem:[%s5 + $0x60] sm:$0xf]
      %v4055 = vld [vmem:[%s5 + $0x64] sm:$0xf]
      %v4056 = vld [vmem:[%s5 + $0x68] sm:$0xf]
      %v4057 = vld [vmem:[%s5 + $0x6c] sm:$0xf]
      %v4058 = vld [vmem:[%s5 + $0x70] sm:$0xf]
      %v4059 = vld [vmem:[%s5 + $0x74] sm:$0xf]
      %v4060 = vld [vmem:[%s5 + $0x78] sm:$0xf]
      %v4061 = vld [vmem:[%s5 + $0x7c] sm:$0xf]
      %v4062 = vld [vmem:[%s5 + $0x80] sm:$0xf]
      %v4063 = vld [vmem:[%s5 + $0x84] sm:$0xf]
      %v4064 = vld [vmem:[%s5 + $0x88] sm:$0xf]
      %v4065 = vld [vmem:[%s5 + $0x8c] sm:$0xf]
      %v4066 = vld [vmem:[%s5 + $0x90] sm:$0xf]
      %v4067 = vld [vmem:[%s5 + $0x94] sm:$0xf]
      %v4068 = vld [vmem:[%s5 + $0x98] sm:$0xf]
      %v4069 = vld [vmem:[%s5 + $0x9c] sm:$0xf]
      %v4070 = vld [vmem:[%s5 + $0xa0] sm:$0xf]
      %v4071 = vld [vmem:[%s5 + $0xa4] sm:$0xf]
      %v4072 = vld [vmem:[%s5 + $0xa8] sm:$0xf]
      %v4073 = vld [vmem:[%s5 + $0xac] sm:$0xf]
      %v4074 = vld [vmem:[%s5 + $0xb0] sm:$0xf]
      %v4075 = vld [vmem:[%s5 + $0xb4] sm:$0xf]
      %v4076 = vld [vmem:[%s5 + $0xb8] sm:$0xf]
      %v4077 = vld [vmem:[%s5 + $0xbc] sm:$0xf]
      %v4078 = vld [vmem:[%s3661 + $0x18] sm:$0xff]
      %v4079 = vld [vmem:[%s3661 + $0x20] sm:$0xff]
      %v4080 = vld [vmem:[%s3661 + $0x28] sm:$0xff]
      %v4081 = vld [vmem:[%s3661 + $0x30] sm:$0xff]
      %v4082 = vld [vmem:[%s3661 + $0x38] sm:$0xff]
      %v4083 = vld [vmem:[%s3661 + $0x40] sm:$0xff]
      %v4084 = vld [vmem:[%s3661 + $0x78] sm:$0xff]
      %v4085 = vld [vmem:[%s3661 + $0x80] sm:$0xff]
      %v4086 = vld [vmem:[%s3661 + $0x88] sm:$0xff]
      %v4087 = vld [vmem:[%s3661 + $0x90] sm:$0xff]
      %v4088 = vld [vmem:[%s3661 + $0x98] sm:$0xff]
      %v4089 = vld [vmem:[%s3661 + $0xa0] sm:$0xff]
      %v4090 = vld [vmem:[%s3661 + $0xd8] sm:$0xff]
      %v4091 = vld [vmem:[%s3661 + $0xe0] sm:$0xff]
      %v4092 = vld [vmem:[%s3661 + $0xe8] sm:$0xff]
      %v4093 = vld [vmem:[%s3661 + $0xf0] sm:$0xff]
      %v4094 = vld [vmem:[%s3661 + $0xf8] sm:$0xff]
      %v4095 = vld [vmem:[%s3661 + $0x100] sm:$0xff]
      %v4096 = vld [vmem:[%s3661 + $0x138] sm:$0xff]
      %v4097 = vld [vmem:[%s3661 + $0x140] sm:$0xff]
      %v4098 = vld [vmem:[%s3661 + $0x148] sm:$0xff]
      %v4099 = vld [vmem:[%s3661 + $0x150] sm:$0xff]
      %v4100 = vld [vmem:[%s3661 + $0x158] sm:$0xff]
      %v4101 = vld [vmem:[%s3661 + $0x160] sm:$0xff]
      %v4102 = vld [vmem:[%s3661 + $0x198] sm:$0xff]
      %v4103 = vld [vmem:[%s3661 + $0x1a0] sm:$0xff]
      %v4104 = vld [vmem:[%s3661 + $0x1a8] sm:$0xff]
      %v4105 = vld [vmem:[%s3661 + $0x1b0] sm:$0xff]
      %v4106 = vld [vmem:[%s3661 + $0x1b8] sm:$0xff]
      %v4107 = vld [vmem:[%s3661 + $0x1c0] sm:$0xff]
      %v4108 = vld [vmem:[%s3661 + $0x1f8] sm:$0xff]
      %v4109 = vld [vmem:[%s3661 + $0x200] sm:$0xff]
      %v4110 = vld [vmem:[%s3661 + $0x208] sm:$0xff]
      %v4111 = vld [vmem:[%s3661 + $0x210] sm:$0xff]
      %v4112 = vld [vmem:[%s3661 + $0x218] sm:$0xff]
      %v4113 = vld [vmem:[%s3661 + $0x220] sm:$0xff]
      %v4114 = vld [vmem:[%s3661 + $0x258] sm:$0xff]
      %v4115 = vld [vmem:[%s3661 + $0x260] sm:$0xff]
      %v4116 = vld [vmem:[%s3661 + $0x268] sm:$0xff]
      %v4117 = vld [vmem:[%s3661 + $0x270] sm:$0xff]
      %v4118 = vld [vmem:[%s3661 + $0x278] sm:$0xff]
      %v4119 = vld [vmem:[%s3661 + $0x280] sm:$0xff]
      %v4120 = vld [vmem:[%s3661 + $0x2b8] sm:$0xff]
      %v4121 = vld [vmem:[%s3661 + $0x2c0] sm:$0xff]
      %v4122 = vld [vmem:[%s3661 + $0x2c8] sm:$0xff]
      %v4123 = vld [vmem:[%s3661 + $0x2d0] sm:$0xff]
      %v4124 = vld [vmem:[%s3661 + $0x2d8] sm:$0xff]
      %v4125 = vld [vmem:[%s3661 + $0x2e0] sm:$0xff]
      %v4126 = vld [vmem:[%s3661 + $0x318] sm:$0xff]
      %v4127 = vld [vmem:[%s3661 + $0x320] sm:$0xff]
      %v4128 = vld [vmem:[%s3661 + $0x328] sm:$0xff]
      %v4129 = vld [vmem:[%s3661 + $0x330] sm:$0xff]
      %v4130 = vld [vmem:[%s3661 + $0x338] sm:$0xff]
      %v4131 = vld [vmem:[%s3661 + $0x340] sm:$0xff]
      %v4132 = vld [vmem:[%s3661 + $0x378] sm:$0xff]
      %v4133 = vld [vmem:[%s3661 + $0x380] sm:$0xff]
      %v4134 = vld [vmem:[%s3661 + $0x388] sm:$0xff]
      %v4135 = vld [vmem:[%s3661 + $0x390] sm:$0xff]
      %v4136 = vld [vmem:[%s3661 + $0x398] sm:$0xff]
      %v4137 = vld [vmem:[%s3661 + $0x3a0] sm:$0xff]
      %v4138 = vld [vmem:[%s3661 + $0x3d8] sm:$0xff]
      %v4139 = vld [vmem:[%s3661 + $0x3e0] sm:$0xff]
      %v4140 = vld [vmem:[%s3661 + $0x3e8] sm:$0xff]
      %v4141 = vld [vmem:[%s3661 + $0x3f0] sm:$0xff]
      %v4142 = vld [vmem:[%s3661 + $0x3f8] sm:$0xff]
      %v4143 = vld [vmem:[%s3661 + $0x400] sm:$0xff]
      %v4144 = vld [vmem:[%s3661 + $0x438] sm:$0xff]
      %v4145 = vld [vmem:[%s3661 + $0x440] sm:$0xff]
      %v4146 = vld [vmem:[%s3661 + $0x448] sm:$0xff]
      %v4147 = vld [vmem:[%s3661 + $0x450] sm:$0xff]
      %v4148 = vld [vmem:[%s3661 + $0x458] sm:$0xff]
      %v4149 = vld [vmem:[%s3661 + $0x460] sm:$0xff]
      %v4150 = vld [vmem:[%s3661 + $0x498] sm:$0xff]
      %v4151 = vld [vmem:[%s3661 + $0x4a0] sm:$0xff]
      %v4152 = vld [vmem:[%s3661 + $0x4a8] sm:$0xff]
      %v4153 = vld [vmem:[%s3661 + $0x4b0] sm:$0xff]
      %v4154 = vld [vmem:[%s3661 + $0x4b8] sm:$0xff]
      %v4155 = vld [vmem:[%s3661 + $0x4c0] sm:$0xff]
      %v4156 = vld [vmem:[%s3661 + $0x4f8] sm:$0xff]
      %v4157 = vld [vmem:[%s3661 + $0x500] sm:$0xff]
      %v4158 = vld [vmem:[%s3661 + $0x508] sm:$0xff]
      %v4159 = vld [vmem:[%s3661 + $0x510] sm:$0xff]
      %v4160 = vld [vmem:[%s3661 + $0x518] sm:$0xff]
      %v4161 = vld [vmem:[%s3661 + $0x520] sm:$0xff]
      %v4162 = vld [vmem:[%s3661 + $0x558] sm:$0xff]
      %v4163 = vld [vmem:[%s3661 + $0x560] sm:$0xff]
      %v4164 = vld [vmem:[%s3661 + $0x568] sm:$0xff]
      %v4165 = vld [vmem:[%s3661 + $0x570] sm:$0xff]
      %v4166 = vld [vmem:[%s3661 + $0x578] sm:$0xff]
      %v4167 = vld [vmem:[%s3661 + $0x580] sm:$0xff]
      %v4168 = vld [vmem:[%s3661 + $0x5b8] sm:$0xff]
      %v4169 = vld [vmem:[%s3661 + $0x5c0] sm:$0xff]
      %v4170 = vld [vmem:[%s3661 + $0x5c8] sm:$0xff]
      %v4171 = vld [vmem:[%s3661 + $0x5d0] sm:$0xff]
      %v4172 = vld [vmem:[%s3661 + $0x5d8] sm:$0xff]
      %v4173 = vld [vmem:[%s3661 + $0x5e0] sm:$0xff]
      %v4174 = vpack.c.bf16 %v4081, %v4078
      %v4175 = vpack.c.bf16 %v4082, %v4079
      %v4176 = vpack.c.bf16 %v4083, %v4080
      %v4177 = vpack.c.bf16 %v4087, %v4084
      %v4178 = vpack.c.bf16 %v4088, %v4085
      %v4179 = vpack.c.bf16 %v4089, %v4086
      %v4180 = vpack.c.bf16 %v4093, %v4090
      %v4181 = vpack.c.bf16 %v4094, %v4091
      %v4182 = vpack.c.bf16 %v4095, %v4092
      %v4183 = vpack.c.bf16 %v4099, %v4096
      %v4184 = vpack.c.bf16 %v4100, %v4097
      %v4185 = vpack.c.bf16 %v4101, %v4098
      %v4186 = vpack.c.bf16 %v4105, %v4102
      %v4187 = vpack.c.bf16 %v4106, %v4103
      %v4188 = vpack.c.bf16 %v4107, %v4104
      %v4189 = vpack.c.bf16 %v4111, %v4108
      %v4190 = vpack.c.bf16 %v4112, %v4109
      %v4191 = vpack.c.bf16 %v4113, %v4110
      %v4192 = vpack.c.bf16 %v4117, %v4114
      %v4193 = vpack.c.bf16 %v4118, %v4115
      %v4194 = vpack.c.bf16 %v4119, %v4116
      %v4195 = vpack.c.bf16 %v4123, %v4120
      %v4196 = vpack.c.bf16 %v4124, %v4121
      %v4197 = vpack.c.bf16 %v4125, %v4122
      %v4198 = vpack.c.bf16 %v4129, %v4126
      %v4199 = vpack.c.bf16 %v4130, %v4127
      %v4200 = vpack.c.bf16 %v4131, %v4128
      %v4201 = vpack.c.bf16 %v4135, %v4132
      %v4202 = vpack.c.bf16 %v4136, %v4133
      %v4203 = vpack.c.bf16 %v4137, %v4134
      %v4204 = vpack.c.bf16 %v4141, %v4138
      %v4205 = vpack.c.bf16 %v4142, %v4139
      %v4206 = vpack.c.bf16 %v4143, %v4140
      %v4207 = vpack.c.bf16 %v4147, %v4144
      %v4208 = vpack.c.bf16 %v4148, %v4145
      %v4209 = vpack.c.bf16 %v4149, %v4146
      %v4210 = vpack.c.bf16 %v4153, %v4150
      %v4211 = vpack.c.bf16 %v4154, %v4151
      %v4212 = vpack.c.bf16 %v4155, %v4152
      %v4213 = vpack.c.bf16 %v4159, %v4156
      %v4214 = vpack.c.bf16 %v4160, %v4157
      %v4215 = vpack.c.bf16 %v4161, %v4158
      %v4216 = vpack.c.bf16 %v4165, %v4162
      %v4217 = vpack.c.bf16 %v4166, %v4163
      %v4218 = vpack.c.bf16 %v4167, %v4164
      %v4219 = vpack.c.bf16 %v4171, %v4168
      %v4220 = vpack.c.bf16 %v4172, %v4169
      %v4221 = vpack.c.bf16 %v4173, %v4170
      %s4222 = scalar_lea.vmem %s5, 192
      %v4223 = vld [vmem:[%s4222] sm:$0xf]
      %v4224 = vld [vmem:[%s4222 + $0x4] sm:$0xf]
      %v4225 = vld [vmem:[%s4222 + $0x8] sm:$0xf]
      %v4226 = vld [vmem:[%s4222 + $0xc] sm:$0xf]
      %v4227 = vld [vmem:[%s4222 + $0x10] sm:$0xf]
      %v4228 = vld [vmem:[%s4222 + $0x14] sm:$0xf]
      %v4229 = vld [vmem:[%s4222 + $0x18] sm:$0xf]
      %v4230 = vld [vmem:[%s4222 + $0x1c] sm:$0xf]
      %v4231 = vld [vmem:[%s4222 + $0x20] sm:$0xf]
      %v4232 = vld [vmem:[%s4222 + $0x24] sm:$0xf]
      %v4233 = vld [vmem:[%s4222 + $0x28] sm:$0xf]
      %v4234 = vld [vmem:[%s4222 + $0x2c] sm:$0xf]
      %v4235 = vld [vmem:[%s4222 + $0x30] sm:$0xf]
      %v4236 = vld [vmem:[%s4222 + $0x34] sm:$0xf]
      %v4237 = vld [vmem:[%s4222 + $0x38] sm:$0xf]
      %v4238 = vld [vmem:[%s4222 + $0x3c] sm:$0xf]
      %v4239 = vld [vmem:[%s4222 + $0x40] sm:$0xf]
      %v4240 = vld [vmem:[%s4222 + $0x44] sm:$0xf]
      %v4241 = vld [vmem:[%s4222 + $0x48] sm:$0xf]
      %v4242 = vld [vmem:[%s4222 + $0x4c] sm:$0xf]
      %v4243 = vld [vmem:[%s4222 + $0x50] sm:$0xf]
      %v4244 = vld [vmem:[%s4222 + $0x54] sm:$0xf]
      %v4245 = vld [vmem:[%s4222 + $0x58] sm:$0xf]
      %v4246 = vld [vmem:[%s4222 + $0x5c] sm:$0xf]
      %v4247 = vld [vmem:[%s4222 + $0x60] sm:$0xf]
      %v4248 = vld [vmem:[%s4222 + $0x64] sm:$0xf]
      %v4249 = vld [vmem:[%s4222 + $0x68] sm:$0xf]
      %v4250 = vld [vmem:[%s4222 + $0x6c] sm:$0xf]
      %v4251 = vld [vmem:[%s4222 + $0x70] sm:$0xf]
      %v4252 = vld [vmem:[%s4222 + $0x74] sm:$0xf]
      %v4253 = vld [vmem:[%s4222 + $0x78] sm:$0xf]
      %v4254 = vld [vmem:[%s4222 + $0x7c] sm:$0xf]
      %v4255 = vld [vmem:[%s4222 + $0x80] sm:$0xf]
      %v4256 = vld [vmem:[%s4222 + $0x84] sm:$0xf]
      %v4257 = vld [vmem:[%s4222 + $0x88] sm:$0xf]
      %v4258 = vld [vmem:[%s4222 + $0x8c] sm:$0xf]
      %v4259 = vld [vmem:[%s4222 + $0x90] sm:$0xf]
      %v4260 = vld [vmem:[%s4222 + $0x94] sm:$0xf]
      %v4261 = vld [vmem:[%s4222 + $0x98] sm:$0xf]
      %v4262 = vld [vmem:[%s4222 + $0x9c] sm:$0xf]
      %v4263 = vld [vmem:[%s4222 + $0xa0] sm:$0xf]
      %v4264 = vld [vmem:[%s4222 + $0xa4] sm:$0xf]
      %v4265 = vld [vmem:[%s4222 + $0xa8] sm:$0xf]
      %v4266 = vld [vmem:[%s4222 + $0xac] sm:$0xf]
      %v4267 = vld [vmem:[%s4222 + $0xb0] sm:$0xf]
      %v4268 = vld [vmem:[%s4222 + $0xb4] sm:$0xf]
      %v4269 = vld [vmem:[%s4222 + $0xb8] sm:$0xf]
      %v4270 = vld [vmem:[%s4222 + $0xbc] sm:$0xf]
      %v4319 = vunpack.c.l.b16 %v4223
      %v4320 = vunpack.c.l.b16 %v4224
      %v4321 = vunpack.c.l.b16 %v4225
      %v4322 = vunpack.c.l.b16 %v4226
      %v4323 = vunpack.c.l.b16 %v4227
      %v4324 = vunpack.c.l.b16 %v4228
      %v4325 = vunpack.c.l.b16 %v4229
      %v4326 = vunpack.c.l.b16 %v4230
      %v4327 = vunpack.c.l.b16 %v4231
      %v4328 = vunpack.c.l.b16 %v4232
      %v4329 = vunpack.c.l.b16 %v4233
      %v4330 = vunpack.c.l.b16 %v4234
      %v4331 = vunpack.c.l.b16 %v4235
      %v4332 = vunpack.c.l.b16 %v4236
      %v4333 = vunpack.c.l.b16 %v4237
      %v4334 = vunpack.c.l.b16 %v4238
      %v4335 = vunpack.c.l.b16 %v4239
      %v4336 = vunpack.c.l.b16 %v4240
      %v4337 = vunpack.c.l.b16 %v4241
      %v4338 = vunpack.c.l.b16 %v4242
      %v4339 = vunpack.c.l.b16 %v4243
      %v4340 = vunpack.c.l.b16 %v4244
      %v4341 = vunpack.c.l.b16 %v4245
      %v4342 = vunpack.c.l.b16 %v4246
      %v4343 = vunpack.c.l.b16 %v4247
      %v4344 = vunpack.c.l.b16 %v4248
      %v4345 = vunpack.c.l.b16 %v4249
      %v4346 = vunpack.c.l.b16 %v4250
      %v4347 = vunpack.c.l.b16 %v4251
      %v4348 = vunpack.c.l.b16 %v4252
      %v4349 = vunpack.c.l.b16 %v4253
      %v4350 = vunpack.c.l.b16 %v4254
      %v4351 = vunpack.c.l.b16 %v4255
      %v4352 = vunpack.c.l.b16 %v4256
      %v4353 = vunpack.c.l.b16 %v4257
      %v4354 = vunpack.c.l.b16 %v4258
      %v4355 = vunpack.c.l.b16 %v4259
      %v4356 = vunpack.c.l.b16 %v4260
      %v4357 = vunpack.c.l.b16 %v4261
      %v4358 = vunpack.c.l.b16 %v4262
      %v4359 = vunpack.c.l.b16 %v4263
      %v4360 = vunpack.c.l.b16 %v4264
      %v4361 = vunpack.c.l.b16 %v4265
      %v4362 = vunpack.c.l.b16 %v4266
      %v4363 = vunpack.c.l.b16 %v4267
      %v4364 = vunpack.c.l.b16 %v4268
      %v4365 = vunpack.c.l.b16 %v4269
      %v4366 = vunpack.c.l.b16 %v4270
      %v4367 = vpack.c.b16 %v4320, %v4319
      %v4368 = vpack.c.b16 %v4322, %v4321
      %v4369 = vpack.c.b16 %v4324, %v4323
      %v4370 = vpack.c.b16 %v4326, %v4325
      %v4371 = vpack.c.b16 %v4328, %v4327
      %v4372 = vpack.c.b16 %v4330, %v4329
      %v4373 = vpack.c.b16 %v4332, %v4331
      %v4374 = vpack.c.b16 %v4334, %v4333
      %v4375 = vpack.c.b16 %v4336, %v4335
      %v4376 = vpack.c.b16 %v4338, %v4337
      %v4377 = vpack.c.b16 %v4340, %v4339
      %v4378 = vpack.c.b16 %v4342, %v4341
      %v4379 = vpack.c.b16 %v4344, %v4343
      %v4380 = vpack.c.b16 %v4346, %v4345
      %v4381 = vpack.c.b16 %v4348, %v4347
      %v4382 = vpack.c.b16 %v4350, %v4349
      %v4383 = vpack.c.b16 %v4352, %v4351
      %v4384 = vpack.c.b16 %v4354, %v4353
      %v4385 = vpack.c.b16 %v4356, %v4355
      %v4386 = vpack.c.b16 %v4358, %v4357
      %v4387 = vpack.c.b16 %v4360, %v4359
      %v4388 = vpack.c.b16 %v4362, %v4361
      %v4389 = vpack.c.b16 %v4364, %v4363
      %v4390 = vpack.c.b16 %v4366, %v4365
      %4415 = vmatprep.subr.bf16.mxu0 0
      %4416 = vmatpush1.bf16.msra.mxu0 %v4374
      %4417 = vmatprep.subr.bf16.mxu0 0
      %4418 = vmatpush1.bf16.msra.mxu0 %v4373
      %4419 = vmatprep.subr.bf16.mxu0 0
      %4420 = vmatpush1.bf16.msra.mxu0 %v4372
      %4421 = vmatprep.subr.bf16.mxu0 0
      %4422 = vmatpush1.bf16.msra.mxu0 %v4371
      %4423 = vmatprep.subr.bf16.mxu0 0
      %4424 = vmatpush1.bf16.msra.mxu0 %v4370
      %4425 = vmatprep.subr.bf16.mxu0 0
      %4426 = vmatpush1.bf16.msra.mxu0 %v4369
      %4427 = vmatprep.subr.bf16.mxu0 0
      %4428 = vmatpush1.bf16.msra.mxu0 %v4368
      %4429 = vmatprep.subr.bf16.mxu0 0
      %4430 = vmatpush1.bf16.msra.mxu0 %v4367
      %4431 = vmatprep.subr.bf16.mxu0 0
      %4432 = vmatpush2.bf16.msra.mxu0 %v4382
      %4433 = vmatprep.subr.bf16.mxu0 0
      %4434 = vmatpush2.bf16.msra.mxu0 %v4381
      %4435 = vmatprep.subr.bf16.mxu0 0
      %4436 = vmatpush2.bf16.msra.mxu0 %v4380
      %4437 = vmatprep.subr.bf16.mxu0 0
      %4438 = vmatpush2.bf16.msra.mxu0 %v4379
      %4439 = vmatprep.subr.bf16.mxu0 0
      %4440 = vmatpush2.bf16.msra.mxu0 %v4378
      %4441 = vmatprep.subr.bf16.mxu0 0
      %4442 = vmatpush2.bf16.msra.mxu0 %v4377
      %4443 = vmatprep.subr.bf16.mxu0 0
      %4444 = vmatpush2.bf16.msra.mxu0 %v4376
      %4445 = vmatprep.subr.bf16.mxu0 0
      %4446 = vmatpush2.bf16.msra.mxu0 %v4375
      %4447 = vmatprep.mubr.bf16.mxu0 %v4175
      %4448 = vmatmul.mubr.bf16.gmra.mxu0 %v4174
      %v4449 = vpop.f32.mrf.mxu0
      %v4450 = vadd.f32 0.0, %v4449
      %v4451 = vpop.f32.mrf.mxu0
      %v4452 = vpop.f32.mrf.mxu0
      %v4453 = vadd.f32 0.0, %v4452
      %v4454 = vpop.f32.mrf.mxu0
      %4455 = vmatprep.mubr.bf16.mxu0 %v4178
      %4456 = vmatmul.mubr.bf16.gmra.mxu0 %v4177
      %v4457 = vpop.f32.mrf.mxu0
      %v4458 = vadd.f32 0.0, %v4457
      %v4459 = vpop.f32.mrf.mxu0
      %v4460 = vpop.f32.mrf.mxu0
      %v4461 = vadd.f32 0.0, %v4460
      %v4462 = vpop.f32.mrf.mxu0
      %4463 = vmatprep.mubr.bf16.mxu0 %v4181
      %4464 = vmatmul.mubr.bf16.gmra.mxu0 %v4180
      %v4465 = vpop.f32.mrf.mxu0
      %v4466 = vadd.f32 0.0, %v4465
      %v4467 = vpop.f32.mrf.mxu0
      %v4468 = vpop.f32.mrf.mxu0
      %v4469 = vadd.f32 0.0, %v4468
      %v4470 = vpop.f32.mrf.mxu0
      %4471 = vmatprep.mubr.bf16.mxu0 %v4184
      %4472 = vmatmul.mubr.bf16.gmra.mxu0 %v4183
      %v4473 = vpop.f32.mrf.mxu0
      %v4474 = vadd.f32 0.0, %v4473
      %v4475 = vpop.f32.mrf.mxu0
      %v4476 = vpop.f32.mrf.mxu0
      %v4477 = vadd.f32 0.0, %v4476
      %v4478 = vpop.f32.mrf.mxu0
      %4479 = vmatprep.mubr.bf16.mxu0 %v4187
      %4480 = vmatmul.mubr.bf16.gmra.mxu0 %v4186
      %v4481 = vpop.f32.mrf.mxu0
      %v4482 = vadd.f32 0.0, %v4481
      %v4483 = vpop.f32.mrf.mxu0
      %v4484 = vpop.f32.mrf.mxu0
      %v4485 = vadd.f32 0.0, %v4484
      %v4486 = vpop.f32.mrf.mxu0
      %4487 = vmatprep.mubr.bf16.mxu0 %v4190
      %4488 = vmatmul.mubr.bf16.gmra.mxu0 %v4189
      %v4489 = vpop.f32.mrf.mxu0
      %v4490 = vadd.f32 0.0, %v4489
      %v4491 = vpop.f32.mrf.mxu0
      %v4492 = vpop.f32.mrf.mxu0
      %v4493 = vadd.f32 0.0, %v4492
      %v4494 = vpop.f32.mrf.mxu0
      %4495 = vmatprep.mubr.bf16.mxu0 %v4193
      %4496 = vmatmul.mubr.bf16.gmra.mxu0 %v4192
      %v4497 = vpop.f32.mrf.mxu0
      %v4498 = vadd.f32 0.0, %v4497
      %v4499 = vpop.f32.mrf.mxu0
      %v4500 = vpop.f32.mrf.mxu0
      %v4501 = vadd.f32 0.0, %v4500
      %v4502 = vpop.f32.mrf.mxu0
      %4503 = vmatprep.mubr.bf16.mxu0 %v4196
      %4504 = vmatmul.mubr.bf16.gmra.mxu0 %v4195
      %v4505 = vpop.f32.mrf.mxu0
      %v4506 = vadd.f32 0.0, %v4505
      %v4507 = vpop.f32.mrf.mxu0
      %v4508 = vpop.f32.mrf.mxu0
      %v4509 = vadd.f32 0.0, %v4508
      %v4510 = vpop.f32.mrf.mxu0
      %4511 = vmatprep.mubr.bf16.mxu0 %v4199
      %4512 = vmatmul.mubr.bf16.gmra.mxu0 %v4198
      %v4513 = vpop.f32.mrf.mxu0
      %v4514 = vadd.f32 0.0, %v4513
      %v4515 = vpop.f32.mrf.mxu0
      %v4516 = vpop.f32.mrf.mxu0
      %v4517 = vadd.f32 0.0, %v4516
      %v4518 = vpop.f32.mrf.mxu0
      %4519 = vmatprep.mubr.bf16.mxu0 %v4202
      %4520 = vmatmul.mubr.bf16.gmra.mxu0 %v4201
      %v4521 = vpop.f32.mrf.mxu0
      %v4522 = vadd.f32 0.0, %v4521
      %v4523 = vpop.f32.mrf.mxu0
      %v4524 = vpop.f32.mrf.mxu0
      %v4525 = vadd.f32 0.0, %v4524
      %v4526 = vpop.f32.mrf.mxu0
      %4527 = vmatprep.mubr.bf16.mxu0 %v4205
      %4528 = vmatmul.mubr.bf16.gmra.mxu0 %v4204
      %v4529 = vpop.f32.mrf.mxu0
      %v4530 = vadd.f32 0.0, %v4529
      %v4531 = vpop.f32.mrf.mxu0
      %v4532 = vpop.f32.mrf.mxu0
      %v4533 = vadd.f32 0.0, %v4532
      %v4534 = vpop.f32.mrf.mxu0
      %4535 = vmatprep.mubr.bf16.mxu0 %v4208
      %4536 = vmatmul.mubr.bf16.gmra.mxu0 %v4207
      %v4537 = vpop.f32.mrf.mxu0
      %v4538 = vadd.f32 0.0, %v4537
      %v4539 = vpop.f32.mrf.mxu0
      %v4540 = vpop.f32.mrf.mxu0
      %v4541 = vadd.f32 0.0, %v4540
      %v4542 = vpop.f32.mrf.mxu0
      %4543 = vmatprep.mubr.bf16.mxu0 %v4211
      %4544 = vmatmul.mubr.bf16.gmra.mxu0 %v4210
      %v4545 = vpop.f32.mrf.mxu0
      %v4546 = vadd.f32 0.0, %v4545
      %v4547 = vpop.f32.mrf.mxu0
      %v4548 = vpop.f32.mrf.mxu0
      %v4549 = vadd.f32 0.0, %v4548
      %v4550 = vpop.f32.mrf.mxu0
      %4551 = vmatprep.mubr.bf16.mxu0 %v4214
      %4552 = vmatmul.mubr.bf16.gmra.mxu0 %v4213
      %v4553 = vpop.f32.mrf.mxu0
      %v4554 = vadd.f32 0.0, %v4553
      %v4555 = vpop.f32.mrf.mxu0
      %v4556 = vpop.f32.mrf.mxu0
      %v4557 = vadd.f32 0.0, %v4556
      %v4558 = vpop.f32.mrf.mxu0
      %4559 = vmatprep.mubr.bf16.mxu0 %v4217
      %4560 = vmatmul.mubr.bf16.gmra.mxu0 %v4216
      %v4561 = vpop.f32.mrf.mxu0
      %v4562 = vadd.f32 0.0, %v4561
      %v4563 = vpop.f32.mrf.mxu0
      %v4564 = vpop.f32.mrf.mxu0
      %v4565 = vadd.f32 0.0, %v4564
      %v4566 = vpop.f32.mrf.mxu0
      %4567 = vmatprep.mubr.bf16.mxu0 %v4220
      %4568 = vmatmul.mubr.bf16.gmra.mxu0 %v4219
      %v4569 = vpop.f32.mrf.mxu0
      %v4570 = vadd.f32 0.0, %v4569
      %v4571 = vpop.f32.mrf.mxu0
      %v4572 = vpop.f32.mrf.mxu0
      %v4573 = vadd.f32 0.0, %v4572
      %v4574 = vpop.f32.mrf.mxu0
      %4575 = vdwg.mxu0
      %4576 = vmatprep.subr.bf16.mxu0 0
      %4577 = vmatpush1.bf16.msra.mxu0 %v4390
      %4578 = vmatprep.subr.bf16.mxu0 0
      %4579 = vmatpush1.bf16.msra.mxu0 %v4389
      %4580 = vmatprep.subr.bf16.mxu0 0
      %4581 = vmatpush1.bf16.msra.mxu0 %v4388
      %4582 = vmatprep.subr.bf16.mxu0 0
      %4583 = vmatpush1.bf16.msra.mxu0 %v4387
      %4584 = vmatprep.subr.bf16.mxu0 0
      %4585 = vmatpush1.bf16.msra.mxu0 %v4386
      %4586 = vmatprep.subr.bf16.mxu0 0
      %4587 = vmatpush1.bf16.msra.mxu0 %v4385
      %4588 = vmatprep.subr.bf16.mxu0 0
      %4589 = vmatpush1.bf16.msra.mxu0 %v4384
      %4590 = vmatprep.subr.bf16.mxu0 0
      %4591 = vmatpush1.bf16.msra.mxu0 %v4383
      %4592 = vmatprep.subr.bf16.mxu0 0
      %4593 = vmatpush2.bf16.msra.mxu0 0
      %4594 = vmatprep.subr.bf16.mxu0 0
      %4595 = vmatpush2.bf16.msra.mxu0 0
      %4596 = vmatprep.subr.bf16.mxu0 0
      %4597 = vmatpush2.bf16.msra.mxu0 0
      %4598 = vmatprep.subr.bf16.mxu0 0
      %4599 = vmatpush2.bf16.msra.mxu0 0
      %4600 = vmatprep.subr.bf16.mxu0 0
      %4601 = vmatpush2.bf16.msra.mxu0 0
      %4602 = vmatprep.subr.bf16.mxu0 0
      %4603 = vmatpush2.bf16.msra.mxu0 0
      %4604 = vmatprep.subr.bf16.mxu0 0
      %4605 = vmatpush2.bf16.msra.mxu0 0
      %4606 = vmatprep.subr.bf16.mxu0 0
      %4607 = vmatpush2.bf16.msra.mxu0 0
      %4608 = vmatprep.mubr.bf16.mxu0 0
      %4609 = vmatmul.mubr.bf16.gmra.mxu0 %v4176
      %v4610 = vpop.f32.mrf.mxu0
      %v4611 = vadd.f32 %v4450, %v4610
      %v4612 = vpop.f32.mrf.mxu0
      %v4613 = vpop.f32.mrf.mxu0
      %v4614 = vadd.f32 %v4453, %v4613
      %v4615 = vpop.f32.mrf.mxu0
      %4616 = vmatprep.mubr.bf16.mxu0 0
      %4617 = vmatmul.mubr.bf16.gmra.mxu0 %v4179
      %v4618 = vpop.f32.mrf.mxu0
      %v4619 = vadd.f32 %v4458, %v4618
      %v4620 = vpop.f32.mrf.mxu0
      %v4621 = vpop.f32.mrf.mxu0
      %v4622 = vadd.f32 %v4461, %v4621
      %v4623 = vpop.f32.mrf.mxu0
      %4624 = vmatprep.mubr.bf16.mxu0 0
      %4625 = vmatmul.mubr.bf16.gmra.mxu0 %v4182
      %v4626 = vpop.f32.mrf.mxu0
      %v4627 = vadd.f32 %v4466, %v4626
      %v4628 = vpop.f32.mrf.mxu0
      %v4629 = vpop.f32.mrf.mxu0
      %v4630 = vadd.f32 %v4469, %v4629
      %v4631 = vpop.f32.mrf.mxu0
      %4632 = vmatprep.mubr.bf16.mxu0 0
      %4633 = vmatmul.mubr.bf16.gmra.mxu0 %v4185
      %v4634 = vpop.f32.mrf.mxu0
      %v4635 = vadd.f32 %v4474, %v4634
      %v4636 = vpop.f32.mrf.mxu0
      %v4637 = vpop.f32.mrf.mxu0
      %v4638 = vadd.f32 %v4477, %v4637
      %v4639 = vpop.f32.mrf.mxu0
      %4640 = vmatprep.mubr.bf16.mxu0 0
      %4641 = vmatmul.mubr.bf16.gmra.mxu0 %v4188
      %v4642 = vpop.f32.mrf.mxu0
      %v4643 = vadd.f32 %v4482, %v4642
      %v4644 = vpop.f32.mrf.mxu0
      %v4645 = vpop.f32.mrf.mxu0
      %v4646 = vadd.f32 %v4485, %v4645
      %v4647 = vpop.f32.mrf.mxu0
      %4648 = vmatprep.mubr.bf16.mxu0 0
      %4649 = vmatmul.mubr.bf16.gmra.mxu0 %v4191
      %v4650 = vpop.f32.mrf.mxu0
      %v4651 = vadd.f32 %v4490, %v4650
      %v4652 = vpop.f32.mrf.mxu0
      %v4653 = vpop.f32.mrf.mxu0
      %v4654 = vadd.f32 %v4493, %v4653
      %v4655 = vpop.f32.mrf.mxu0
      %4656 = vmatprep.mubr.bf16.mxu0 0
      %4657 = vmatmul.mubr.bf16.gmra.mxu0 %v4194
      %v4658 = vpop.f32.mrf.mxu0
      %v4659 = vadd.f32 %v4498, %v4658
      %v4660 = vpop.f32.mrf.mxu0
      %v4661 = vpop.f32.mrf.mxu0
      %v4662 = vadd.f32 %v4501, %v4661
      %v4663 = vpop.f32.mrf.mxu0
      %4664 = vmatprep.mubr.bf16.mxu0 0
      %4665 = vmatmul.mubr.bf16.gmra.mxu0 %v4197
      %v4666 = vpop.f32.mrf.mxu0
      %v4667 = vadd.f32 %v4506, %v4666
      %v4668 = vpop.f32.mrf.mxu0
      %v4669 = vpop.f32.mrf.mxu0
      %v4670 = vadd.f32 %v4509, %v4669
      %v4671 = vpop.f32.mrf.mxu0
      %4672 = vmatprep.mubr.bf16.mxu0 0
      %4673 = vmatmul.mubr.bf16.gmra.mxu0 %v4200
      %v4674 = vpop.f32.mrf.mxu0
      %v4675 = vadd.f32 %v4514, %v4674
      %v4676 = vpop.f32.mrf.mxu0
      %v4677 = vpop.f32.mrf.mxu0
      %v4678 = vadd.f32 %v4517, %v4677
      %v4679 = vpop.f32.mrf.mxu0
      %4680 = vmatprep.mubr.bf16.mxu0 0
      %4681 = vmatmul.mubr.bf16.gmra.mxu0 %v4203
      %v4682 = vpop.f32.mrf.mxu0
      %v4683 = vadd.f32 %v4522, %v4682
      %v4684 = vpop.f32.mrf.mxu0
      %v4685 = vpop.f32.mrf.mxu0
      %v4686 = vadd.f32 %v4525, %v4685
      %v4687 = vpop.f32.mrf.mxu0
      %4688 = vmatprep.mubr.bf16.mxu0 0
      %4689 = vmatmul.mubr.bf16.gmra.mxu0 %v4206
      %v4690 = vpop.f32.mrf.mxu0
      %v4691 = vadd.f32 %v4530, %v4690
      %v4692 = vpop.f32.mrf.mxu0
      %v4693 = vpop.f32.mrf.mxu0
      %v4694 = vadd.f32 %v4533, %v4693
      %v4695 = vpop.f32.mrf.mxu0
      %4696 = vmatprep.mubr.bf16.mxu0 0
      %4697 = vmatmul.mubr.bf16.gmra.mxu0 %v4209
      %v4698 = vpop.f32.mrf.mxu0
      %v4699 = vadd.f32 %v4538, %v4698
      %v4700 = vpop.f32.mrf.mxu0
      %v4701 = vpop.f32.mrf.mxu0
      %v4702 = vadd.f32 %v4541, %v4701
      %v4703 = vpop.f32.mrf.mxu0
      %4704 = vmatprep.mubr.bf16.mxu0 0
      %4705 = vmatmul.mubr.bf16.gmra.mxu0 %v4212
      %v4706 = vpop.f32.mrf.mxu0
      %v4707 = vadd.f32 %v4546, %v4706
      %v4708 = vpop.f32.mrf.mxu0
      %v4709 = vpop.f32.mrf.mxu0
      %v4710 = vadd.f32 %v4549, %v4709
      %v4711 = vpop.f32.mrf.mxu0
      %4712 = vmatprep.mubr.bf16.mxu0 0
      %4713 = vmatmul.mubr.bf16.gmra.mxu0 %v4215
      %v4714 = vpop.f32.mrf.mxu0
      %v4715 = vadd.f32 %v4554, %v4714
      %v4716 = vpop.f32.mrf.mxu0
      %v4717 = vpop.f32.mrf.mxu0
      %v4718 = vadd.f32 %v4557, %v4717
      %v4719 = vpop.f32.mrf.mxu0
      %4720 = vmatprep.mubr.bf16.mxu0 0
      %4721 = vmatmul.mubr.bf16.gmra.mxu0 %v4218
      %v4722 = vpop.f32.mrf.mxu0
      %v4723 = vadd.f32 %v4562, %v4722
      %v4724 = vpop.f32.mrf.mxu0
      %v4725 = vpop.f32.mrf.mxu0
      %v4726 = vadd.f32 %v4565, %v4725
      %v4727 = vpop.f32.mrf.mxu0
      %4728 = vmatprep.mubr.bf16.mxu0 0
      %4729 = vmatmul.mubr.bf16.gmra.mxu0 %v4221
      %v4730 = vpop.f32.mrf.mxu0
      %v4731 = vadd.f32 %v4570, %v4730
      %v4732 = vpop.f32.mrf.mxu0
      %v4733 = vpop.f32.mrf.mxu0
      %v4734 = vadd.f32 %v4573, %v4733
      %v4735 = vpop.f32.mrf.mxu0
      %4736 = vdwg.mxu0
      %v4785 = vunpack.c.l.b16 %v4030
      %v4786 = vunpack.c.l.b16 %v4031
      %v4787 = vunpack.c.l.b16 %v4032
      %v4788 = vunpack.c.l.b16 %v4033
      %v4789 = vunpack.c.l.b16 %v4034
      %v4790 = vunpack.c.l.b16 %v4035
      %v4791 = vunpack.c.l.b16 %v4036
      %v4792 = vunpack.c.l.b16 %v4037
      %v4793 = vunpack.c.l.b16 %v4038
      %v4794 = vunpack.c.l.b16 %v4039
      %v4795 = vunpack.c.l.b16 %v4040
      %v4796 = vunpack.c.l.b16 %v4041
      %v4797 = vunpack.c.l.b16 %v4042
      %v4798 = vunpack.c.l.b16 %v4043
      %v4799 = vunpack.c.l.b16 %v4044
      %v4800 = vunpack.c.l.b16 %v4045
      %v4801 = vunpack.c.l.b16 %v4046
      %v4802 = vunpack.c.l.b16 %v4047
      %v4803 = vunpack.c.l.b16 %v4048
      %v4804 = vunpack.c.l.b16 %v4049
      %v4805 = vunpack.c.l.b16 %v4050
      %v4806 = vunpack.c.l.b16 %v4051
      %v4807 = vunpack.c.l.b16 %v4052
      %v4808 = vunpack.c.l.b16 %v4053
      %v4809 = vunpack.c.l.b16 %v4054
      %v4810 = vunpack.c.l.b16 %v4055
      %v4811 = vunpack.c.l.b16 %v4056
      %v4812 = vunpack.c.l.b16 %v4057
      %v4813 = vunpack.c.l.b16 %v4058
      %v4814 = vunpack.c.l.b16 %v4059
      %v4815 = vunpack.c.l.b16 %v4060
      %v4816 = vunpack.c.l.b16 %v4061
      %v4817 = vunpack.c.l.b16 %v4062
      %v4818 = vunpack.c.l.b16 %v4063
      %v4819 = vunpack.c.l.b16 %v4064
      %v4820 = vunpack.c.l.b16 %v4065
      %v4821 = vunpack.c.l.b16 %v4066
      %v4822 = vunpack.c.l.b16 %v4067
      %v4823 = vunpack.c.l.b16 %v4068
      %v4824 = vunpack.c.l.b16 %v4069
      %v4825 = vunpack.c.l.b16 %v4070
      %v4826 = vunpack.c.l.b16 %v4071
      %v4827 = vunpack.c.l.b16 %v4072
      %v4828 = vunpack.c.l.b16 %v4073
      %v4829 = vunpack.c.l.b16 %v4074
      %v4830 = vunpack.c.l.b16 %v4075
      %v4831 = vunpack.c.l.b16 %v4076
      %v4832 = vunpack.c.l.b16 %v4077
      %v4833 = vpack.c.b16 %v4786, %v4785
      %v4834 = vpack.c.b16 %v4788, %v4787
      %v4835 = vpack.c.b16 %v4790, %v4789
      %v4836 = vpack.c.b16 %v4792, %v4791
      %v4837 = vpack.c.b16 %v4794, %v4793
      %v4838 = vpack.c.b16 %v4796, %v4795
      %v4839 = vpack.c.b16 %v4798, %v4797
      %v4840 = vpack.c.b16 %v4800, %v4799
      %v4841 = vpack.c.b16 %v4802, %v4801
      %v4842 = vpack.c.b16 %v4804, %v4803
      %v4843 = vpack.c.b16 %v4806, %v4805
      %v4844 = vpack.c.b16 %v4808, %v4807
      %v4845 = vpack.c.b16 %v4810, %v4809
      %v4846 = vpack.c.b16 %v4812, %v4811
      %v4847 = vpack.c.b16 %v4814, %v4813
      %v4848 = vpack.c.b16 %v4816, %v4815
      %v4849 = vpack.c.b16 %v4818, %v4817
      %v4850 = vpack.c.b16 %v4820, %v4819
      %v4851 = vpack.c.b16 %v4822, %v4821
      %v4852 = vpack.c.b16 %v4824, %v4823
      %v4853 = vpack.c.b16 %v4826, %v4825
      %v4854 = vpack.c.b16 %v4828, %v4827
      %v4855 = vpack.c.b16 %v4830, %v4829
      %v4856 = vpack.c.b16 %v4832, %v4831
      %4881 = vmatprep.subr.bf16.mxu0 0
      %4882 = vmatpush1.bf16.msra.mxu0 %v4840
      %4883 = vmatprep.subr.bf16.mxu0 0
      %4884 = vmatpush1.bf16.msra.mxu0 %v4839
      %4885 = vmatprep.subr.bf16.mxu0 0
      %4886 = vmatpush1.bf16.msra.mxu0 %v4838
      %4887 = vmatprep.subr.bf16.mxu0 0
      %4888 = vmatpush1.bf16.msra.mxu0 %v4837
      %4889 = vmatprep.subr.bf16.mxu0 0
      %4890 = vmatpush1.bf16.msra.mxu0 %v4836
      %4891 = vmatprep.subr.bf16.mxu0 0
      %4892 = vmatpush1.bf16.msra.mxu0 %v4835
      %4893 = vmatprep.subr.bf16.mxu0 0
      %4894 = vmatpush1.bf16.msra.mxu0 %v4834
      %4895 = vmatprep.subr.bf16.mxu0 0
      %4896 = vmatpush1.bf16.msra.mxu0 %v4833
      %4897 = vmatprep.subr.bf16.mxu0 0
      %4898 = vmatpush2.bf16.msra.mxu0 %v4848
      %4899 = vmatprep.subr.bf16.mxu0 0
      %4900 = vmatpush2.bf16.msra.mxu0 %v4847
      %4901 = vmatprep.subr.bf16.mxu0 0
      %4902 = vmatpush2.bf16.msra.mxu0 %v4846
      %4903 = vmatprep.subr.bf16.mxu0 0
      %4904 = vmatpush2.bf16.msra.mxu0 %v4845
      %4905 = vmatprep.subr.bf16.mxu0 0
      %4906 = vmatpush2.bf16.msra.mxu0 %v4844
      %4907 = vmatprep.subr.bf16.mxu0 0
      %4908 = vmatpush2.bf16.msra.mxu0 %v4843
      %4909 = vmatprep.subr.bf16.mxu0 0
      %4910 = vmatpush2.bf16.msra.mxu0 %v4842
      %4911 = vmatprep.subr.bf16.mxu0 0
      %4912 = vmatpush2.bf16.msra.mxu0 %v4841
      %4913 = vmatprep.mubr.bf16.mxu0 %v3983
      %4914 = vmatmul.mubr.bf16.gmra.mxu0 %v3982
      %v4915 = vpop.f32.mrf.mxu0
      %v4916 = vadd.f32 %v4611, %v4915
      %v4917 = vpop.f32.mrf.mxu0
      %v4918 = vpop.f32.mrf.mxu0
      %v4919 = vadd.f32 %v4614, %v4918
      %v4920 = vpop.f32.mrf.mxu0
      %4921 = vmatprep.mubr.bf16.mxu0 %v3986
      %4922 = vmatmul.mubr.bf16.gmra.mxu0 %v3985
      %v4923 = vpop.f32.mrf.mxu0
      %v4924 = vadd.f32 %v4619, %v4923
      %v4925 = vpop.f32.mrf.mxu0
      %v4926 = vpop.f32.mrf.mxu0
      %v4927 = vadd.f32 %v4622, %v4926
      %v4928 = vpop.f32.mrf.mxu0
      %4929 = vmatprep.mubr.bf16.mxu0 %v3989
      %4930 = vmatmul.mubr.bf16.gmra.mxu0 %v3988
      %v4931 = vpop.f32.mrf.mxu0
      %v4932 = vadd.f32 %v4627, %v4931
      %v4933 = vpop.f32.mrf.mxu0
      %v4934 = vpop.f32.mrf.mxu0
      %v4935 = vadd.f32 %v4630, %v4934
      %v4936 = vpop.f32.mrf.mxu0
      %4937 = vmatprep.mubr.bf16.mxu0 %v3992
      %4938 = vmatmul.mubr.bf16.gmra.mxu0 %v3991
      %v4939 = vpop.f32.mrf.mxu0
      %v4940 = vadd.f32 %v4635, %v4939
      %v4941 = vpop.f32.mrf.mxu0
      %v4942 = vpop.f32.mrf.mxu0
      %v4943 = vadd.f32 %v4638, %v4942
      %v4944 = vpop.f32.mrf.mxu0
      %4945 = vmatprep.mubr.bf16.mxu0 %v3995
      %4946 = vmatmul.mubr.bf16.gmra.mxu0 %v3994
      %v4947 = vpop.f32.mrf.mxu0
      %v4948 = vadd.f32 %v4643, %v4947
      %v4949 = vpop.f32.mrf.mxu0
      %v4950 = vpop.f32.mrf.mxu0
      %v4951 = vadd.f32 %v4646, %v4950
      %v4952 = vpop.f32.mrf.mxu0
      %4953 = vmatprep.mubr.bf16.mxu0 %v3998
      %4954 = vmatmul.mubr.bf16.gmra.mxu0 %v3997
      %v4955 = vpop.f32.mrf.mxu0
      %v4956 = vadd.f32 %v4651, %v4955
      %v4957 = vpop.f32.mrf.mxu0
      %v4958 = vpop.f32.mrf.mxu0
      %v4959 = vadd.f32 %v4654, %v4958
      %v4960 = vpop.f32.mrf.mxu0
      %4961 = vmatprep.mubr.bf16.mxu0 %v4001
      %4962 = vmatmul.mubr.bf16.gmra.mxu0 %v4000
      %v4963 = vpop.f32.mrf.mxu0
      %v4964 = vadd.f32 %v4659, %v4963
      %v4965 = vpop.f32.mrf.mxu0
      %v4966 = vpop.f32.mrf.mxu0
      %v4967 = vadd.f32 %v4662, %v4966
      %v4968 = vpop.f32.mrf.mxu0
      %4969 = vmatprep.mubr.bf16.mxu0 %v4004
      %4970 = vmatmul.mubr.bf16.gmra.mxu0 %v4003
      %v4971 = vpop.f32.mrf.mxu0
      %v4972 = vadd.f32 %v4667, %v4971
      %v4973 = vpop.f32.mrf.mxu0
      %v4974 = vpop.f32.mrf.mxu0
      %v4975 = vadd.f32 %v4670, %v4974
      %v4976 = vpop.f32.mrf.mxu0
      %4977 = vmatprep.mubr.bf16.mxu0 %v4007
      %4978 = vmatmul.mubr.bf16.gmra.mxu0 %v4006
      %v4979 = vpop.f32.mrf.mxu0
      %v4980 = vadd.f32 %v4675, %v4979
      %v4981 = vpop.f32.mrf.mxu0
      %v4982 = vpop.f32.mrf.mxu0
      %v4983 = vadd.f32 %v4678, %v4982
      %v4984 = vpop.f32.mrf.mxu0
      %4985 = vmatprep.mubr.bf16.mxu0 %v4010
      %4986 = vmatmul.mubr.bf16.gmra.mxu0 %v4009
      %v4987 = vpop.f32.mrf.mxu0
      %v4988 = vadd.f32 %v4683, %v4987
      %v4989 = vpop.f32.mrf.mxu0
      %v4990 = vpop.f32.mrf.mxu0
      %v4991 = vadd.f32 %v4686, %v4990
      %v4992 = vpop.f32.mrf.mxu0
      %4993 = vmatprep.mubr.bf16.mxu0 %v4013
      %4994 = vmatmul.mubr.bf16.gmra.mxu0 %v4012
      %v4995 = vpop.f32.mrf.mxu0
      %v4996 = vadd.f32 %v4691, %v4995
      %v4997 = vpop.f32.mrf.mxu0
      %v4998 = vpop.f32.mrf.mxu0
      %v4999 = vadd.f32 %v4694, %v4998
      %v5000 = vpop.f32.mrf.mxu0
      %5001 = vmatprep.mubr.bf16.mxu0 %v4016
      %5002 = vmatmul.mubr.bf16.gmra.mxu0 %v4015
      %v5003 = vpop.f32.mrf.mxu0
      %v5004 = vadd.f32 %v4699, %v5003
      %v5005 = vpop.f32.mrf.mxu0
      %v5006 = vpop.f32.mrf.mxu0
      %v5007 = vadd.f32 %v4702, %v5006
      %v5008 = vpop.f32.mrf.mxu0
      %5009 = vmatprep.mubr.bf16.mxu0 %v4019
      %5010 = vmatmul.mubr.bf16.gmra.mxu0 %v4018
      %v5011 = vpop.f32.mrf.mxu0
      %v5012 = vadd.f32 %v4707, %v5011
      %v5013 = vpop.f32.mrf.mxu0
      %v5014 = vpop.f32.mrf.mxu0
      %v5015 = vadd.f32 %v4710, %v5014
      %v5016 = vpop.f32.mrf.mxu0
      %5017 = vmatprep.mubr.bf16.mxu0 %v4022
      %5018 = vmatmul.mubr.bf16.gmra.mxu0 %v4021
      %v5019 = vpop.f32.mrf.mxu0
      %v5020 = vadd.f32 %v4715, %v5019
      %v5021 = vpop.f32.mrf.mxu0
      %v5022 = vpop.f32.mrf.mxu0
      %v5023 = vadd.f32 %v4718, %v5022
      %v5024 = vpop.f32.mrf.mxu0
      %5025 = vmatprep.mubr.bf16.mxu0 %v4025
      %5026 = vmatmul.mubr.bf16.gmra.mxu0 %v4024
      %v5027 = vpop.f32.mrf.mxu0
      %v5028 = vadd.f32 %v4723, %v5027
      %v5029 = vpop.f32.mrf.mxu0
      %v5030 = vpop.f32.mrf.mxu0
      %v5031 = vadd.f32 %v4726, %v5030
      %v5032 = vpop.f32.mrf.mxu0
      %5033 = vmatprep.mubr.bf16.mxu0 %v4028
      %5034 = vmatmul.mubr.bf16.gmra.mxu0 %v4027
      %v5035 = vpop.f32.mrf.mxu0
      %v5036 = vadd.f32 %v4731, %v5035
      %v5037 = vpop.f32.mrf.mxu0
      %v5038 = vpop.f32.mrf.mxu0
      %v5039 = vadd.f32 %v4734, %v5038
      %v5040 = vpop.f32.mrf.mxu0
      %5041 = vdwg.mxu0
      %5042 = vmatprep.subr.bf16.mxu0 0
      %5043 = vmatpush1.bf16.msra.mxu0 %v4856
      %5044 = vmatprep.subr.bf16.mxu0 0
      %5045 = vmatpush1.bf16.msra.mxu0 %v4855
      %5046 = vmatprep.subr.bf16.mxu0 0
      %5047 = vmatpush1.bf16.msra.mxu0 %v4854
      %5048 = vmatprep.subr.bf16.mxu0 0
      %5049 = vmatpush1.bf16.msra.mxu0 %v4853
      %5050 = vmatprep.subr.bf16.mxu0 0
      %5051 = vmatpush1.bf16.msra.mxu0 %v4852
      %5052 = vmatprep.subr.bf16.mxu0 0
      %5053 = vmatpush1.bf16.msra.mxu0 %v4851
      %5054 = vmatprep.subr.bf16.mxu0 0
      %5055 = vmatpush1.bf16.msra.mxu0 %v4850
      %5056 = vmatprep.subr.bf16.mxu0 0
      %5057 = vmatpush1.bf16.msra.mxu0 %v4849
      %5058 = vmatprep.subr.bf16.mxu0 0
      %5059 = vmatpush2.bf16.msra.mxu0 0
      %5060 = vmatprep.subr.bf16.mxu0 0
      %5061 = vmatpush2.bf16.msra.mxu0 0
      %5062 = vmatprep.subr.bf16.mxu0 0
      %5063 = vmatpush2.bf16.msra.mxu0 0
      %5064 = vmatprep.subr.bf16.mxu0 0
      %5065 = vmatpush2.bf16.msra.mxu0 0
      %5066 = vmatprep.subr.bf16.mxu0 0
      %5067 = vmatpush2.bf16.msra.mxu0 0
      %5068 = vmatprep.subr.bf16.mxu0 0
      %5069 = vmatpush2.bf16.msra.mxu0 0
      %5070 = vmatprep.subr.bf16.mxu0 0
      %5071 = vmatpush2.bf16.msra.mxu0 0
      %5072 = vmatprep.subr.bf16.mxu0 0
      %5073 = vmatpush2.bf16.msra.mxu0 0
      %5074 = vmatprep.mubr.bf16.mxu0 0
      %5075 = vmatmul.mubr.bf16.gmra.mxu0 %v3984
      %v5076 = vpop.f32.mrf.mxu0
      %v5077 = vadd.f32 %v4916, %v5076
      %v5078 = vpop.f32.mrf.mxu0
      %v5079 = vpop.f32.mrf.mxu0
      %v5080 = vadd.f32 %v4919, %v5079
      %v5081 = vpop.f32.mrf.mxu0
      %5082 = vmatprep.mubr.bf16.mxu0 0
      %5083 = vmatmul.mubr.bf16.gmra.mxu0 %v3987
      %v5084 = vpop.f32.mrf.mxu0
      %v5085 = vadd.f32 %v4924, %v5084
      %v5086 = vpop.f32.mrf.mxu0
      %v5087 = vpop.f32.mrf.mxu0
      %v5088 = vadd.f32 %v4927, %v5087
      %v5089 = vpop.f32.mrf.mxu0
      %5090 = vmatprep.mubr.bf16.mxu0 0
      %5091 = vmatmul.mubr.bf16.gmra.mxu0 %v3990
      %v5092 = vpop.f32.mrf.mxu0
      %v5093 = vadd.f32 %v4932, %v5092
      %v5094 = vpop.f32.mrf.mxu0
      %v5095 = vpop.f32.mrf.mxu0
      %v5096 = vadd.f32 %v4935, %v5095
      %v5097 = vpop.f32.mrf.mxu0
      %5098 = vmatprep.mubr.bf16.mxu0 0
      %5099 = vmatmul.mubr.bf16.gmra.mxu0 %v3993
      %v5100 = vpop.f32.mrf.mxu0
      %v5101 = vadd.f32 %v4940, %v5100
      %v5102 = vpop.f32.mrf.mxu0
      %v5103 = vpop.f32.mrf.mxu0
      %v5104 = vadd.f32 %v4943, %v5103
      %v5105 = vpop.f32.mrf.mxu0
      %5106 = vmatprep.mubr.bf16.mxu0 0
      %5107 = vmatmul.mubr.bf16.gmra.mxu0 %v3996
      %v5108 = vpop.f32.mrf.mxu0
      %v5109 = vadd.f32 %v4948, %v5108
      %v5110 = vpop.f32.mrf.mxu0
      %v5111 = vpop.f32.mrf.mxu0
      %v5112 = vadd.f32 %v4951, %v5111
      %v5113 = vpop.f32.mrf.mxu0
      %5114 = vmatprep.mubr.bf16.mxu0 0
      %5115 = vmatmul.mubr.bf16.gmra.mxu0 %v3999
      %v5116 = vpop.f32.mrf.mxu0
      %v5117 = vadd.f32 %v4956, %v5116
      %v5118 = vpop.f32.mrf.mxu0
      %v5119 = vpop.f32.mrf.mxu0
      %v5120 = vadd.f32 %v4959, %v5119
      %v5121 = vpop.f32.mrf.mxu0
      %5122 = vmatprep.mubr.bf16.mxu0 0
      %5123 = vmatmul.mubr.bf16.gmra.mxu0 %v4002
      %v5124 = vpop.f32.mrf.mxu0
      %v5125 = vadd.f32 %v4964, %v5124
      %v5126 = vpop.f32.mrf.mxu0
      %v5127 = vpop.f32.mrf.mxu0
      %v5128 = vadd.f32 %v4967, %v5127
      %v5129 = vpop.f32.mrf.mxu0
      %5130 = vmatprep.mubr.bf16.mxu0 0
      %5131 = vmatmul.mubr.bf16.gmra.mxu0 %v4005
      %v5132 = vpop.f32.mrf.mxu0
      %v5133 = vadd.f32 %v4972, %v5132
      %v5134 = vpop.f32.mrf.mxu0
      %v5135 = vpop.f32.mrf.mxu0
      %v5136 = vadd.f32 %v4975, %v5135
      %v5137 = vpop.f32.mrf.mxu0
      %5138 = vmatprep.mubr.bf16.mxu0 0
      %5139 = vmatmul.mubr.bf16.gmra.mxu0 %v4008
      %v5140 = vpop.f32.mrf.mxu0
      %v5141 = vadd.f32 %v4980, %v5140
      %v5142 = vpop.f32.mrf.mxu0
      %v5143 = vpop.f32.mrf.mxu0
      %v5144 = vadd.f32 %v4983, %v5143
      %v5145 = vpop.f32.mrf.mxu0
      %5146 = vmatprep.mubr.bf16.mxu0 0
      %5147 = vmatmul.mubr.bf16.gmra.mxu0 %v4011
      %v5148 = vpop.f32.mrf.mxu0
      %v5149 = vadd.f32 %v4988, %v5148
      %v5150 = vpop.f32.mrf.mxu0
      %v5151 = vpop.f32.mrf.mxu0
      %v5152 = vadd.f32 %v4991, %v5151
      %v5153 = vpop.f32.mrf.mxu0
      %5154 = vmatprep.mubr.bf16.mxu0 0
      %5155 = vmatmul.mubr.bf16.gmra.mxu0 %v4014
      %v5156 = vpop.f32.mrf.mxu0
      %v5157 = vadd.f32 %v4996, %v5156
      %v5158 = vpop.f32.mrf.mxu0
      %v5159 = vpop.f32.mrf.mxu0
      %v5160 = vadd.f32 %v4999, %v5159
      %v5161 = vpop.f32.mrf.mxu0
      %5162 = vmatprep.mubr.bf16.mxu0 0
      %5163 = vmatmul.mubr.bf16.gmra.mxu0 %v4017
      %v5164 = vpop.f32.mrf.mxu0
      %v5165 = vadd.f32 %v5004, %v5164
      %v5166 = vpop.f32.mrf.mxu0
      %v5167 = vpop.f32.mrf.mxu0
      %v5168 = vadd.f32 %v5007, %v5167
      %v5169 = vpop.f32.mrf.mxu0
      %5170 = vmatprep.mubr.bf16.mxu0 0
      %5171 = vmatmul.mubr.bf16.gmra.mxu0 %v4020
      %v5172 = vpop.f32.mrf.mxu0
      %v5173 = vadd.f32 %v5012, %v5172
      %v5174 = vpop.f32.mrf.mxu0
      %v5175 = vpop.f32.mrf.mxu0
      %v5176 = vadd.f32 %v5015, %v5175
      %v5177 = vpop.f32.mrf.mxu0
      %5178 = vmatprep.mubr.bf16.mxu0 0
      %5179 = vmatmul.mubr.bf16.gmra.mxu0 %v4023
      %v5180 = vpop.f32.mrf.mxu0
      %v5181 = vadd.f32 %v5020, %v5180
      %v5182 = vpop.f32.mrf.mxu0
      %v5183 = vpop.f32.mrf.mxu0
      %v5184 = vadd.f32 %v5023, %v5183
      %v5185 = vpop.f32.mrf.mxu0
      %5186 = vmatprep.mubr.bf16.mxu0 0
      %5187 = vmatmul.mubr.bf16.gmra.mxu0 %v4026
      %v5188 = vpop.f32.mrf.mxu0
      %v5189 = vadd.f32 %v5028, %v5188
      %v5190 = vpop.f32.mrf.mxu0
      %v5191 = vpop.f32.mrf.mxu0
      %v5192 = vadd.f32 %v5031, %v5191
      %v5193 = vpop.f32.mrf.mxu0
      %5194 = vmatprep.mubr.bf16.mxu0 0
      %5195 = vmatmul.mubr.bf16.gmra.mxu0 %v4029
      %v5196 = vpop.f32.mrf.mxu0
      %v5197 = vadd.f32 %v5036, %v5196
      %v5198 = vpop.f32.mrf.mxu0
      %v5199 = vpop.f32.mrf.mxu0
      %v5200 = vadd.f32 %v5039, %v5199
      %v5201 = vpop.f32.mrf.mxu0
      %5202 = vdwg.mxu0
      %s5203 = scalar_lea.vmem [#allocation4], 192
      %v5204 = vld [vmem:[%s5203 + $0x18] sm:$0xff]
      %v5205 = vld [vmem:[%s5203 + $0x20] sm:$0xff]
      %v5206 = vld [vmem:[%s5203 + $0x28] sm:$0xff]
      %v5207 = vld [vmem:[%s5203 + $0x30] sm:$0xff]
      %v5208 = vld [vmem:[%s5203 + $0x38] sm:$0xff]
      %v5209 = vld [vmem:[%s5203 + $0x40] sm:$0xff]
      %v5210 = vld [vmem:[%s5203 + $0x78] sm:$0xff]
      %v5211 = vld [vmem:[%s5203 + $0x80] sm:$0xff]
      %v5212 = vld [vmem:[%s5203 + $0x88] sm:$0xff]
      %v5213 = vld [vmem:[%s5203 + $0x90] sm:$0xff]
      %v5214 = vld [vmem:[%s5203 + $0x98] sm:$0xff]
      %v5215 = vld [vmem:[%s5203 + $0xa0] sm:$0xff]
      %v5216 = vld [vmem:[%s5203 + $0xd8] sm:$0xff]
      %v5217 = vld [vmem:[%s5203 + $0xe0] sm:$0xff]
      %v5218 = vld [vmem:[%s5203 + $0xe8] sm:$0xff]
      %v5219 = vld [vmem:[%s5203 + $0xf0] sm:$0xff]
      %v5220 = vld [vmem:[%s5203 + $0xf8] sm:$0xff]
      %v5221 = vld [vmem:[%s5203 + $0x100] sm:$0xff]
      %v5222 = vld [vmem:[%s5203 + $0x138] sm:$0xff]
      %v5223 = vld [vmem:[%s5203 + $0x140] sm:$0xff]
      %v5224 = vld [vmem:[%s5203 + $0x148] sm:$0xff]
      %v5225 = vld [vmem:[%s5203 + $0x150] sm:$0xff]
      %v5226 = vld [vmem:[%s5203 + $0x158] sm:$0xff]
      %v5227 = vld [vmem:[%s5203 + $0x160] sm:$0xff]
      %v5228 = vld [vmem:[%s5203 + $0x198] sm:$0xff]
      %v5229 = vld [vmem:[%s5203 + $0x1a0] sm:$0xff]
      %v5230 = vld [vmem:[%s5203 + $0x1a8] sm:$0xff]
      %v5231 = vld [vmem:[%s5203 + $0x1b0] sm:$0xff]
      %v5232 = vld [vmem:[%s5203 + $0x1b8] sm:$0xff]
      %v5233 = vld [vmem:[%s5203 + $0x1c0] sm:$0xff]
      %v5234 = vld [vmem:[%s5203 + $0x1f8] sm:$0xff]
      %v5235 = vld [vmem:[%s5203 + $0x200] sm:$0xff]
      %v5236 = vld [vmem:[%s5203 + $0x208] sm:$0xff]
      %v5237 = vld [vmem:[%s5203 + $0x210] sm:$0xff]
      %v5238 = vld [vmem:[%s5203 + $0x218] sm:$0xff]
      %v5239 = vld [vmem:[%s5203 + $0x220] sm:$0xff]
      %v5240 = vld [vmem:[%s5203 + $0x258] sm:$0xff]
      %v5241 = vld [vmem:[%s5203 + $0x260] sm:$0xff]
      %v5242 = vld [vmem:[%s5203 + $0x268] sm:$0xff]
      %v5243 = vld [vmem:[%s5203 + $0x270] sm:$0xff]
      %v5244 = vld [vmem:[%s5203 + $0x278] sm:$0xff]
      %v5245 = vld [vmem:[%s5203 + $0x280] sm:$0xff]
      %v5246 = vld [vmem:[%s5203 + $0x2b8] sm:$0xff]
      %v5247 = vld [vmem:[%s5203 + $0x2c0] sm:$0xff]
      %v5248 = vld [vmem:[%s5203 + $0x2c8] sm:$0xff]
      %v5249 = vld [vmem:[%s5203 + $0x2d0] sm:$0xff]
      %v5250 = vld [vmem:[%s5203 + $0x2d8] sm:$0xff]
      %v5251 = vld [vmem:[%s5203 + $0x2e0] sm:$0xff]
      %v5252 = vld [vmem:[%s5203 + $0x318] sm:$0xff]
      %v5253 = vld [vmem:[%s5203 + $0x320] sm:$0xff]
      %v5254 = vld [vmem:[%s5203 + $0x328] sm:$0xff]
      %v5255 = vld [vmem:[%s5203 + $0x330] sm:$0xff]
      %v5256 = vld [vmem:[%s5203 + $0x338] sm:$0xff]
      %v5257 = vld [vmem:[%s5203 + $0x340] sm:$0xff]
      %v5258 = vld [vmem:[%s5203 + $0x378] sm:$0xff]
      %v5259 = vld [vmem:[%s5203 + $0x380] sm:$0xff]
      %v5260 = vld [vmem:[%s5203 + $0x388] sm:$0xff]
      %v5261 = vld [vmem:[%s5203 + $0x390] sm:$0xff]
      %v5262 = vld [vmem:[%s5203 + $0x398] sm:$0xff]
      %v5263 = vld [vmem:[%s5203 + $0x3a0] sm:$0xff]
      %v5264 = vld [vmem:[%s5203 + $0x3d8] sm:$0xff]
      %v5265 = vld [vmem:[%s5203 + $0x3e0] sm:$0xff]
      %v5266 = vld [vmem:[%s5203 + $0x3e8] sm:$0xff]
      %v5267 = vld [vmem:[%s5203 + $0x3f0] sm:$0xff]
      %v5268 = vld [vmem:[%s5203 + $0x3f8] sm:$0xff]
      %v5269 = vld [vmem:[%s5203 + $0x400] sm:$0xff]
      %v5270 = vld [vmem:[%s5203 + $0x438] sm:$0xff]
      %v5271 = vld [vmem:[%s5203 + $0x440] sm:$0xff]
      %v5272 = vld [vmem:[%s5203 + $0x448] sm:$0xff]
      %v5273 = vld [vmem:[%s5203 + $0x450] sm:$0xff]
      %v5274 = vld [vmem:[%s5203 + $0x458] sm:$0xff]
      %v5275 = vld [vmem:[%s5203 + $0x460] sm:$0xff]
      %v5276 = vld [vmem:[%s5203 + $0x498] sm:$0xff]
      %v5277 = vld [vmem:[%s5203 + $0x4a0] sm:$0xff]
      %v5278 = vld [vmem:[%s5203 + $0x4a8] sm:$0xff]
      %v5279 = vld [vmem:[%s5203 + $0x4b0] sm:$0xff]
      %v5280 = vld [vmem:[%s5203 + $0x4b8] sm:$0xff]
      %v5281 = vld [vmem:[%s5203 + $0x4c0] sm:$0xff]
      %v5282 = vld [vmem:[%s5203 + $0x4f8] sm:$0xff]
      %v5283 = vld [vmem:[%s5203 + $0x500] sm:$0xff]
      %v5284 = vld [vmem:[%s5203 + $0x508] sm:$0xff]
      %v5285 = vld [vmem:[%s5203 + $0x510] sm:$0xff]
      %v5286 = vld [vmem:[%s5203 + $0x518] sm:$0xff]
      %v5287 = vld [vmem:[%s5203 + $0x520] sm:$0xff]
      %v5288 = vld [vmem:[%s5203 + $0x558] sm:$0xff]
      %v5289 = vld [vmem:[%s5203 + $0x560] sm:$0xff]
      %v5290 = vld [vmem:[%s5203 + $0x568] sm:$0xff]
      %v5291 = vld [vmem:[%s5203 + $0x570] sm:$0xff]
      %v5292 = vld [vmem:[%s5203 + $0x578] sm:$0xff]
      %v5293 = vld [vmem:[%s5203 + $0x580] sm:$0xff]
      %v5294 = vld [vmem:[%s5203 + $0x5b8] sm:$0xff]
      %v5295 = vld [vmem:[%s5203 + $0x5c0] sm:$0xff]
      %v5296 = vld [vmem:[%s5203 + $0x5c8] sm:$0xff]
      %v5297 = vld [vmem:[%s5203 + $0x5d0] sm:$0xff]
      %v5298 = vld [vmem:[%s5203 + $0x5d8] sm:$0xff]
      %v5299 = vld [vmem:[%s5203 + $0x5e0] sm:$0xff]
      %v5300 = vpack.c.bf16 %v5207, %v5204
      %v5301 = vpack.c.bf16 %v5208, %v5205
      %v5302 = vpack.c.bf16 %v5209, %v5206
      %v5303 = vpack.c.bf16 %v5213, %v5210
      %v5304 = vpack.c.bf16 %v5214, %v5211
      %v5305 = vpack.c.bf16 %v5215, %v5212
      %v5306 = vpack.c.bf16 %v5219, %v5216
      %v5307 = vpack.c.bf16 %v5220, %v5217
      %v5308 = vpack.c.bf16 %v5221, %v5218
      %v5309 = vpack.c.bf16 %v5225, %v5222
      %v5310 = vpack.c.bf16 %v5226, %v5223
      %v5311 = vpack.c.bf16 %v5227, %v5224
      %v5312 = vpack.c.bf16 %v5231, %v5228
      %v5313 = vpack.c.bf16 %v5232, %v5229
      %v5314 = vpack.c.bf16 %v5233, %v5230
      %v5315 = vpack.c.bf16 %v5237, %v5234
      %v5316 = vpack.c.bf16 %v5238, %v5235
      %v5317 = vpack.c.bf16 %v5239, %v5236
      %v5318 = vpack.c.bf16 %v5243, %v5240
      %v5319 = vpack.c.bf16 %v5244, %v5241
      %v5320 = vpack.c.bf16 %v5245, %v5242
      %v5321 = vpack.c.bf16 %v5249, %v5246
      %v5322 = vpack.c.bf16 %v5250, %v5247
      %v5323 = vpack.c.bf16 %v5251, %v5248
      %v5324 = vpack.c.bf16 %v5255, %v5252
      %v5325 = vpack.c.bf16 %v5256, %v5253
      %v5326 = vpack.c.bf16 %v5257, %v5254
      %v5327 = vpack.c.bf16 %v5261, %v5258
      %v5328 = vpack.c.bf16 %v5262, %v5259
      %v5329 = vpack.c.bf16 %v5263, %v5260
      %v5330 = vpack.c.bf16 %v5267, %v5264
      %v5331 = vpack.c.bf16 %v5268, %v5265
      %v5332 = vpack.c.bf16 %v5269, %v5266
      %v5333 = vpack.c.bf16 %v5273, %v5270
      %v5334 = vpack.c.bf16 %v5274, %v5271
      %v5335 = vpack.c.bf16 %v5275, %v5272
      %v5336 = vpack.c.bf16 %v5279, %v5276
      %v5337 = vpack.c.bf16 %v5280, %v5277
      %v5338 = vpack.c.bf16 %v5281, %v5278
      %v5339 = vpack.c.bf16 %v5285, %v5282
      %v5340 = vpack.c.bf16 %v5286, %v5283
      %v5341 = vpack.c.bf16 %v5287, %v5284
      %v5342 = vpack.c.bf16 %v5291, %v5288
      %v5343 = vpack.c.bf16 %v5292, %v5289
      %v5344 = vpack.c.bf16 %v5293, %v5290
      %v5345 = vpack.c.bf16 %v5297, %v5294
      %v5346 = vpack.c.bf16 %v5298, %v5295
      %v5347 = vpack.c.bf16 %v5299, %v5296
      %s5348 = scalar_lea.vmem %s5, 384
      %v5349 = vld [vmem:[%s5348] sm:$0xf]
      %v5350 = vld [vmem:[%s5348 + $0x4] sm:$0xf]
      %v5351 = vld [vmem:[%s5348 + $0x8] sm:$0xf]
      %v5352 = vld [vmem:[%s5348 + $0xc] sm:$0xf]
      %v5353 = vld [vmem:[%s5348 + $0x10] sm:$0xf]
      %v5354 = vld [vmem:[%s5348 + $0x14] sm:$0xf]
      %v5355 = vld [vmem:[%s5348 + $0x18] sm:$0xf]
      %v5356 = vld [vmem:[%s5348 + $0x1c] sm:$0xf]
      %v5357 = vld [vmem:[%s5348 + $0x20] sm:$0xf]
      %v5358 = vld [vmem:[%s5348 + $0x24] sm:$0xf]
      %v5359 = vld [vmem:[%s5348 + $0x28] sm:$0xf]
      %v5360 = vld [vmem:[%s5348 + $0x2c] sm:$0xf]
      %v5361 = vld [vmem:[%s5348 + $0x30] sm:$0xf]
      %v5362 = vld [vmem:[%s5348 + $0x34] sm:$0xf]
      %v5363 = vld [vmem:[%s5348 + $0x38] sm:$0xf]
      %v5364 = vld [vmem:[%s5348 + $0x3c] sm:$0xf]
      %v5365 = vld [vmem:[%s5348 + $0x40] sm:$0xf]
      %v5366 = vld [vmem:[%s5348 + $0x44] sm:$0xf]
      %v5367 = vld [vmem:[%s5348 + $0x48] sm:$0xf]
      %v5368 = vld [vmem:[%s5348 + $0x4c] sm:$0xf]
      %v5369 = vld [vmem:[%s5348 + $0x50] sm:$0xf]
      %v5370 = vld [vmem:[%s5348 + $0x54] sm:$0xf]
      %v5371 = vld [vmem:[%s5348 + $0x58] sm:$0xf]
      %v5372 = vld [vmem:[%s5348 + $0x5c] sm:$0xf]
      %v5373 = vld [vmem:[%s5348 + $0x60] sm:$0xf]
      %v5374 = vld [vmem:[%s5348 + $0x64] sm:$0xf]
      %v5375 = vld [vmem:[%s5348 + $0x68] sm:$0xf]
      %v5376 = vld [vmem:[%s5348 + $0x6c] sm:$0xf]
      %v5377 = vld [vmem:[%s5348 + $0x70] sm:$0xf]
      %v5378 = vld [vmem:[%s5348 + $0x74] sm:$0xf]
      %v5379 = vld [vmem:[%s5348 + $0x78] sm:$0xf]
      %v5380 = vld [vmem:[%s5348 + $0x7c] sm:$0xf]
      %v5381 = vld [vmem:[%s5348 + $0x80] sm:$0xf]
      %v5382 = vld [vmem:[%s5348 + $0x84] sm:$0xf]
      %v5383 = vld [vmem:[%s5348 + $0x88] sm:$0xf]
      %v5384 = vld [vmem:[%s5348 + $0x8c] sm:$0xf]
      %v5385 = vld [vmem:[%s5348 + $0x90] sm:$0xf]
      %v5386 = vld [vmem:[%s5348 + $0x94] sm:$0xf]
      %v5387 = vld [vmem:[%s5348 + $0x98] sm:$0xf]
      %v5388 = vld [vmem:[%s5348 + $0x9c] sm:$0xf]
      %v5389 = vld [vmem:[%s5348 + $0xa0] sm:$0xf]
      %v5390 = vld [vmem:[%s5348 + $0xa4] sm:$0xf]
      %v5391 = vld [vmem:[%s5348 + $0xa8] sm:$0xf]
      %v5392 = vld [vmem:[%s5348 + $0xac] sm:$0xf]
      %v5393 = vld [vmem:[%s5348 + $0xb0] sm:$0xf]
      %v5394 = vld [vmem:[%s5348 + $0xb4] sm:$0xf]
      %v5395 = vld [vmem:[%s5348 + $0xb8] sm:$0xf]
      %v5396 = vld [vmem:[%s5348 + $0xbc] sm:$0xf]
      %v5445 = vunpack.c.l.b16 %v5349
      %v5446 = vunpack.c.l.b16 %v5350
      %v5447 = vunpack.c.l.b16 %v5351
      %v5448 = vunpack.c.l.b16 %v5352
      %v5449 = vunpack.c.l.b16 %v5353
      %v5450 = vunpack.c.l.b16 %v5354
      %v5451 = vunpack.c.l.b16 %v5355
      %v5452 = vunpack.c.l.b16 %v5356
      %v5453 = vunpack.c.l.b16 %v5357
      %v5454 = vunpack.c.l.b16 %v5358
      %v5455 = vunpack.c.l.b16 %v5359
      %v5456 = vunpack.c.l.b16 %v5360
      %v5457 = vunpack.c.l.b16 %v5361
      %v5458 = vunpack.c.l.b16 %v5362
      %v5459 = vunpack.c.l.b16 %v5363
      %v5460 = vunpack.c.l.b16 %v5364
      %v5461 = vunpack.c.l.b16 %v5365
      %v5462 = vunpack.c.l.b16 %v5366
      %v5463 = vunpack.c.l.b16 %v5367
      %v5464 = vunpack.c.l.b16 %v5368
      %v5465 = vunpack.c.l.b16 %v5369
      %v5466 = vunpack.c.l.b16 %v5370
      %v5467 = vunpack.c.l.b16 %v5371
      %v5468 = vunpack.c.l.b16 %v5372
      %v5469 = vunpack.c.l.b16 %v5373
      %v5470 = vunpack.c.l.b16 %v5374
      %v5471 = vunpack.c.l.b16 %v5375
      %v5472 = vunpack.c.l.b16 %v5376
      %v5473 = vunpack.c.l.b16 %v5377
      %v5474 = vunpack.c.l.b16 %v5378
      %v5475 = vunpack.c.l.b16 %v5379
      %v5476 = vunpack.c.l.b16 %v5380
      %v5477 = vunpack.c.l.b16 %v5381
      %v5478 = vunpack.c.l.b16 %v5382
      %v5479 = vunpack.c.l.b16 %v5383
      %v5480 = vunpack.c.l.b16 %v5384
      %v5481 = vunpack.c.l.b16 %v5385
      %v5482 = vunpack.c.l.b16 %v5386
      %v5483 = vunpack.c.l.b16 %v5387
      %v5484 = vunpack.c.l.b16 %v5388
      %v5485 = vunpack.c.l.b16 %v5389
      %v5486 = vunpack.c.l.b16 %v5390
      %v5487 = vunpack.c.l.b16 %v5391
      %v5488 = vunpack.c.l.b16 %v5392
      %v5489 = vunpack.c.l.b16 %v5393
      %v5490 = vunpack.c.l.b16 %v5394
      %v5491 = vunpack.c.l.b16 %v5395
      %v5492 = vunpack.c.l.b16 %v5396
      %v5493 = vpack.c.b16 %v5446, %v5445
      %v5494 = vpack.c.b16 %v5448, %v5447
      %v5495 = vpack.c.b16 %v5450, %v5449
      %v5496 = vpack.c.b16 %v5452, %v5451
      %v5497 = vpack.c.b16 %v5454, %v5453
      %v5498 = vpack.c.b16 %v5456, %v5455
      %v5499 = vpack.c.b16 %v5458, %v5457
      %v5500 = vpack.c.b16 %v5460, %v5459
      %v5501 = vpack.c.b16 %v5462, %v5461
      %v5502 = vpack.c.b16 %v5464, %v5463
      %v5503 = vpack.c.b16 %v5466, %v5465
      %v5504 = vpack.c.b16 %v5468, %v5467
      %v5505 = vpack.c.b16 %v5470, %v5469
      %v5506 = vpack.c.b16 %v5472, %v5471
      %v5507 = vpack.c.b16 %v5474, %v5473
      %v5508 = vpack.c.b16 %v5476, %v5475
      %v5509 = vpack.c.b16 %v5478, %v5477
      %v5510 = vpack.c.b16 %v5480, %v5479
      %v5511 = vpack.c.b16 %v5482, %v5481
      %v5512 = vpack.c.b16 %v5484, %v5483
      %v5513 = vpack.c.b16 %v5486, %v5485
      %v5514 = vpack.c.b16 %v5488, %v5487
      %v5515 = vpack.c.b16 %v5490, %v5489
      %v5516 = vpack.c.b16 %v5492, %v5491
      %5541 = vmatprep.subr.bf16.mxu0 0
      %5542 = vmatpush1.bf16.msra.mxu0 %v5500
      %5543 = vmatprep.subr.bf16.mxu0 0
      %5544 = vmatpush1.bf16.msra.mxu0 %v5499
      %5545 = vmatprep.subr.bf16.mxu0 0
      %5546 = vmatpush1.bf16.msra.mxu0 %v5498
      %5547 = vmatprep.subr.bf16.mxu0 0
      %5548 = vmatpush1.bf16.msra.mxu0 %v5497
      %5549 = vmatprep.subr.bf16.mxu0 0
      %5550 = vmatpush1.bf16.msra.mxu0 %v5496
      %5551 = vmatprep.subr.bf16.mxu0 0
      %5552 = vmatpush1.bf16.msra.mxu0 %v5495
      %5553 = vmatprep.subr.bf16.mxu0 0
      %5554 = vmatpush1.bf16.msra.mxu0 %v5494
      %5555 = vmatprep.subr.bf16.mxu0 0
      %5556 = vmatpush1.bf16.msra.mxu0 %v5493
      %5557 = vmatprep.subr.bf16.mxu0 0
      %5558 = vmatpush2.bf16.msra.mxu0 %v5508
      %5559 = vmatprep.subr.bf16.mxu0 0
      %5560 = vmatpush2.bf16.msra.mxu0 %v5507
      %5561 = vmatprep.subr.bf16.mxu0 0
      %5562 = vmatpush2.bf16.msra.mxu0 %v5506
      %5563 = vmatprep.subr.bf16.mxu0 0
      %5564 = vmatpush2.bf16.msra.mxu0 %v5505
      %5565 = vmatprep.subr.bf16.mxu0 0
      %5566 = vmatpush2.bf16.msra.mxu0 %v5504
      %5567 = vmatprep.subr.bf16.mxu0 0
      %5568 = vmatpush2.bf16.msra.mxu0 %v5503
      %5569 = vmatprep.subr.bf16.mxu0 0
      %5570 = vmatpush2.bf16.msra.mxu0 %v5502
      %5571 = vmatprep.subr.bf16.mxu0 0
      %5572 = vmatpush2.bf16.msra.mxu0 %v5501
      %5573 = vmatprep.mubr.bf16.mxu0 %v5301
      %5574 = vmatmul.mubr.bf16.gmra.mxu0 %v5300
      %v5575 = vpop.f32.mrf.mxu0
      %v5576 = vadd.f32 0.0, %v5575
      %v5577 = vpop.f32.mrf.mxu0
      %v5578 = vpop.f32.mrf.mxu0
      %v5579 = vadd.f32 0.0, %v5578
      %v5580 = vpop.f32.mrf.mxu0
      %5581 = vmatprep.mubr.bf16.mxu0 %v5304
      %5582 = vmatmul.mubr.bf16.gmra.mxu0 %v5303
      %v5583 = vpop.f32.mrf.mxu0
      %v5584 = vadd.f32 0.0, %v5583
      %v5585 = vpop.f32.mrf.mxu0
      %v5586 = vpop.f32.mrf.mxu0
      %v5587 = vadd.f32 0.0, %v5586
      %v5588 = vpop.f32.mrf.mxu0
      %5589 = vmatprep.mubr.bf16.mxu0 %v5307
      %5590 = vmatmul.mubr.bf16.gmra.mxu0 %v5306
      %v5591 = vpop.f32.mrf.mxu0
      %v5592 = vadd.f32 0.0, %v5591
      %v5593 = vpop.f32.mrf.mxu0
      %v5594 = vpop.f32.mrf.mxu0
      %v5595 = vadd.f32 0.0, %v5594
      %v5596 = vpop.f32.mrf.mxu0
      %5597 = vmatprep.mubr.bf16.mxu0 %v5310
      %5598 = vmatmul.mubr.bf16.gmra.mxu0 %v5309
      %v5599 = vpop.f32.mrf.mxu0
      %v5600 = vadd.f32 0.0, %v5599
      %v5601 = vpop.f32.mrf.mxu0
      %v5602 = vpop.f32.mrf.mxu0
      %v5603 = vadd.f32 0.0, %v5602
      %v5604 = vpop.f32.mrf.mxu0
      %5605 = vmatprep.mubr.bf16.mxu0 %v5313
      %5606 = vmatmul.mubr.bf16.gmra.mxu0 %v5312
      %v5607 = vpop.f32.mrf.mxu0
      %v5608 = vadd.f32 0.0, %v5607
      %v5609 = vpop.f32.mrf.mxu0
      %v5610 = vpop.f32.mrf.mxu0
      %v5611 = vadd.f32 0.0, %v5610
      %v5612 = vpop.f32.mrf.mxu0
      %5613 = vmatprep.mubr.bf16.mxu0 %v5316
      %5614 = vmatmul.mubr.bf16.gmra.mxu0 %v5315
      %v5615 = vpop.f32.mrf.mxu0
      %v5616 = vadd.f32 0.0, %v5615
      %v5617 = vpop.f32.mrf.mxu0
      %v5618 = vpop.f32.mrf.mxu0
      %v5619 = vadd.f32 0.0, %v5618
      %v5620 = vpop.f32.mrf.mxu0
      %5621 = vmatprep.mubr.bf16.mxu0 %v5319
      %5622 = vmatmul.mubr.bf16.gmra.mxu0 %v5318
      %v5623 = vpop.f32.mrf.mxu0
      %v5624 = vadd.f32 0.0, %v5623
      %v5625 = vpop.f32.mrf.mxu0
      %v5626 = vpop.f32.mrf.mxu0
      %v5627 = vadd.f32 0.0, %v5626
      %v5628 = vpop.f32.mrf.mxu0
      %5629 = vmatprep.mubr.bf16.mxu0 %v5322
      %5630 = vmatmul.mubr.bf16.gmra.mxu0 %v5321
      %v5631 = vpop.f32.mrf.mxu0
      %v5632 = vadd.f32 0.0, %v5631
      %v5633 = vpop.f32.mrf.mxu0
      %v5634 = vpop.f32.mrf.mxu0
      %v5635 = vadd.f32 0.0, %v5634
      %v5636 = vpop.f32.mrf.mxu0
      %5637 = vmatprep.mubr.bf16.mxu0 %v5325
      %5638 = vmatmul.mubr.bf16.gmra.mxu0 %v5324
      %v5639 = vpop.f32.mrf.mxu0
      %v5640 = vadd.f32 0.0, %v5639
      %v5641 = vpop.f32.mrf.mxu0
      %v5642 = vpop.f32.mrf.mxu0
      %v5643 = vadd.f32 0.0, %v5642
      %v5644 = vpop.f32.mrf.mxu0
      %5645 = vmatprep.mubr.bf16.mxu0 %v5328
      %5646 = vmatmul.mubr.bf16.gmra.mxu0 %v5327
      %v5647 = vpop.f32.mrf.mxu0
      %v5648 = vadd.f32 0.0, %v5647
      %v5649 = vpop.f32.mrf.mxu0
      %v5650 = vpop.f32.mrf.mxu0
      %v5651 = vadd.f32 0.0, %v5650
      %v5652 = vpop.f32.mrf.mxu0
      %5653 = vmatprep.mubr.bf16.mxu0 %v5331
      %5654 = vmatmul.mubr.bf16.gmra.mxu0 %v5330
      %v5655 = vpop.f32.mrf.mxu0
      %v5656 = vadd.f32 0.0, %v5655
      %v5657 = vpop.f32.mrf.mxu0
      %v5658 = vpop.f32.mrf.mxu0
      %v5659 = vadd.f32 0.0, %v5658
      %v5660 = vpop.f32.mrf.mxu0
      %5661 = vmatprep.mubr.bf16.mxu0 %v5334
      %5662 = vmatmul.mubr.bf16.gmra.mxu0 %v5333
      %v5663 = vpop.f32.mrf.mxu0
      %v5664 = vadd.f32 0.0, %v5663
      %v5665 = vpop.f32.mrf.mxu0
      %v5666 = vpop.f32.mrf.mxu0
      %v5667 = vadd.f32 0.0, %v5666
      %v5668 = vpop.f32.mrf.mxu0
      %5669 = vmatprep.mubr.bf16.mxu0 %v5337
      %5670 = vmatmul.mubr.bf16.gmra.mxu0 %v5336
      %v5671 = vpop.f32.mrf.mxu0
      %v5672 = vadd.f32 0.0, %v5671
      %v5673 = vpop.f32.mrf.mxu0
      %v5674 = vpop.f32.mrf.mxu0
      %v5675 = vadd.f32 0.0, %v5674
      %v5676 = vpop.f32.mrf.mxu0
      %5677 = vmatprep.mubr.bf16.mxu0 %v5340
      %5678 = vmatmul.mubr.bf16.gmra.mxu0 %v5339
      %v5679 = vpop.f32.mrf.mxu0
      %v5680 = vadd.f32 0.0, %v5679
      %v5681 = vpop.f32.mrf.mxu0
      %v5682 = vpop.f32.mrf.mxu0
      %v5683 = vadd.f32 0.0, %v5682
      %v5684 = vpop.f32.mrf.mxu0
      %5685 = vmatprep.mubr.bf16.mxu0 %v5343
      %5686 = vmatmul.mubr.bf16.gmra.mxu0 %v5342
      %v5687 = vpop.f32.mrf.mxu0
      %v5688 = vadd.f32 0.0, %v5687
      %v5689 = vpop.f32.mrf.mxu0
      %v5690 = vpop.f32.mrf.mxu0
      %v5691 = vadd.f32 0.0, %v5690
      %v5692 = vpop.f32.mrf.mxu0
      %5693 = vmatprep.mubr.bf16.mxu0 %v5346
      %5694 = vmatmul.mubr.bf16.gmra.mxu0 %v5345
      %v5695 = vpop.f32.mrf.mxu0
      %v5696 = vadd.f32 0.0, %v5695
      %v5697 = vpop.f32.mrf.mxu0
      %v5698 = vpop.f32.mrf.mxu0
      %v5699 = vadd.f32 0.0, %v5698
      %v5700 = vpop.f32.mrf.mxu0
      %5701 = vdwg.mxu0
      %5702 = vmatprep.subr.bf16.mxu0 0
      %5703 = vmatpush1.bf16.msra.mxu0 %v5516
      %5704 = vmatprep.subr.bf16.mxu0 0
      %5705 = vmatpush1.bf16.msra.mxu0 %v5515
      %5706 = vmatprep.subr.bf16.mxu0 0
      %5707 = vmatpush1.bf16.msra.mxu0 %v5514
      %5708 = vmatprep.subr.bf16.mxu0 0
      %5709 = vmatpush1.bf16.msra.mxu0 %v5513
      %5710 = vmatprep.subr.bf16.mxu0 0
      %5711 = vmatpush1.bf16.msra.mxu0 %v5512
      %5712 = vmatprep.subr.bf16.mxu0 0
      %5713 = vmatpush1.bf16.msra.mxu0 %v5511
      %5714 = vmatprep.subr.bf16.mxu0 0
      %5715 = vmatpush1.bf16.msra.mxu0 %v5510
      %5716 = vmatprep.subr.bf16.mxu0 0
      %5717 = vmatpush1.bf16.msra.mxu0 %v5509
      %5718 = vmatprep.subr.bf16.mxu0 0
      %5719 = vmatpush2.bf16.msra.mxu0 0
      %5720 = vmatprep.subr.bf16.mxu0 0
      %5721 = vmatpush2.bf16.msra.mxu0 0
      %5722 = vmatprep.subr.bf16.mxu0 0
      %5723 = vmatpush2.bf16.msra.mxu0 0
      %5724 = vmatprep.subr.bf16.mxu0 0
      %5725 = vmatpush2.bf16.msra.mxu0 0
      %5726 = vmatprep.subr.bf16.mxu0 0
      %5727 = vmatpush2.bf16.msra.mxu0 0
      %5728 = vmatprep.subr.bf16.mxu0 0
      %5729 = vmatpush2.bf16.msra.mxu0 0
      %5730 = vmatprep.subr.bf16.mxu0 0
      %5731 = vmatpush2.bf16.msra.mxu0 0
      %5732 = vmatprep.subr.bf16.mxu0 0
      %5733 = vmatpush2.bf16.msra.mxu0 0
      %5734 = vmatprep.mubr.bf16.mxu0 0
      %5735 = vmatmul.mubr.bf16.gmra.mxu0 %v5302
      %v5736 = vpop.f32.mrf.mxu0
      %v5737 = vadd.f32 %v5576, %v5736
      %v5738 = vpop.f32.mrf.mxu0
      %v5739 = vpop.f32.mrf.mxu0
      %v5740 = vadd.f32 %v5579, %v5739
      %v5741 = vpop.f32.mrf.mxu0
      %5742 = vmatprep.mubr.bf16.mxu0 0
      %5743 = vmatmul.mubr.bf16.gmra.mxu0 %v5305
      %v5744 = vpop.f32.mrf.mxu0
      %v5745 = vadd.f32 %v5584, %v5744
      %v5746 = vpop.f32.mrf.mxu0
      %v5747 = vpop.f32.mrf.mxu0
      %v5748 = vadd.f32 %v5587, %v5747
      %v5749 = vpop.f32.mrf.mxu0
      %5750 = vmatprep.mubr.bf16.mxu0 0
      %5751 = vmatmul.mubr.bf16.gmra.mxu0 %v5308
      %v5752 = vpop.f32.mrf.mxu0
      %v5753 = vadd.f32 %v5592, %v5752
      %v5754 = vpop.f32.mrf.mxu0
      %v5755 = vpop.f32.mrf.mxu0
      %v5756 = vadd.f32 %v5595, %v5755
      %v5757 = vpop.f32.mrf.mxu0
      %5758 = vmatprep.mubr.bf16.mxu0 0
      %5759 = vmatmul.mubr.bf16.gmra.mxu0 %v5311
      %v5760 = vpop.f32.mrf.mxu0
      %v5761 = vadd.f32 %v5600, %v5760
      %v5762 = vpop.f32.mrf.mxu0
      %v5763 = vpop.f32.mrf.mxu0
      %v5764 = vadd.f32 %v5603, %v5763
      %v5765 = vpop.f32.mrf.mxu0
      %5766 = vmatprep.mubr.bf16.mxu0 0
      %5767 = vmatmul.mubr.bf16.gmra.mxu0 %v5314
      %v5768 = vpop.f32.mrf.mxu0
      %v5769 = vadd.f32 %v5608, %v5768
      %v5770 = vpop.f32.mrf.mxu0
      %v5771 = vpop.f32.mrf.mxu0
      %v5772 = vadd.f32 %v5611, %v5771
      %v5773 = vpop.f32.mrf.mxu0
      %5774 = vmatprep.mubr.bf16.mxu0 0
      %5775 = vmatmul.mubr.bf16.gmra.mxu0 %v5317
      %v5776 = vpop.f32.mrf.mxu0
      %v5777 = vadd.f32 %v5616, %v5776
      %v5778 = vpop.f32.mrf.mxu0
      %v5779 = vpop.f32.mrf.mxu0
      %v5780 = vadd.f32 %v5619, %v5779
      %v5781 = vpop.f32.mrf.mxu0
      %5782 = vmatprep.mubr.bf16.mxu0 0
      %5783 = vmatmul.mubr.bf16.gmra.mxu0 %v5320
      %v5784 = vpop.f32.mrf.mxu0
      %v5785 = vadd.f32 %v5624, %v5784
      %v5786 = vpop.f32.mrf.mxu0
      %v5787 = vpop.f32.mrf.mxu0
      %v5788 = vadd.f32 %v5627, %v5787
      %v5789 = vpop.f32.mrf.mxu0
      %5790 = vmatprep.mubr.bf16.mxu0 0
      %5791 = vmatmul.mubr.bf16.gmra.mxu0 %v5323
      %v5792 = vpop.f32.mrf.mxu0
      %v5793 = vadd.f32 %v5632, %v5792
      %v5794 = vpop.f32.mrf.mxu0
      %v5795 = vpop.f32.mrf.mxu0
      %v5796 = vadd.f32 %v5635, %v5795
      %v5797 = vpop.f32.mrf.mxu0
      %5798 = vmatprep.mubr.bf16.mxu0 0
      %5799 = vmatmul.mubr.bf16.gmra.mxu0 %v5326
      %v5800 = vpop.f32.mrf.mxu0
      %v5801 = vadd.f32 %v5640, %v5800
      %v5802 = vpop.f32.mrf.mxu0
      %v5803 = vpop.f32.mrf.mxu0
      %v5804 = vadd.f32 %v5643, %v5803
      %v5805 = vpop.f32.mrf.mxu0
      %5806 = vmatprep.mubr.bf16.mxu0 0
      %5807 = vmatmul.mubr.bf16.gmra.mxu0 %v5329
      %v5808 = vpop.f32.mrf.mxu0
      %v5809 = vadd.f32 %v5648, %v5808
      %v5810 = vpop.f32.mrf.mxu0
      %v5811 = vpop.f32.mrf.mxu0
      %v5812 = vadd.f32 %v5651, %v5811
      %v5813 = vpop.f32.mrf.mxu0
      %5814 = vmatprep.mubr.bf16.mxu0 0
      %5815 = vmatmul.mubr.bf16.gmra.mxu0 %v5332
      %v5816 = vpop.f32.mrf.mxu0
      %v5817 = vadd.f32 %v5656, %v5816
      %v5818 = vpop.f32.mrf.mxu0
      %v5819 = vpop.f32.mrf.mxu0
      %v5820 = vadd.f32 %v5659, %v5819
      %v5821 = vpop.f32.mrf.mxu0
      %5822 = vmatprep.mubr.bf16.mxu0 0
      %5823 = vmatmul.mubr.bf16.gmra.mxu0 %v5335
      %v5824 = vpop.f32.mrf.mxu0
      %v5825 = vadd.f32 %v5664, %v5824
      %v5826 = vpop.f32.mrf.mxu0
      %v5827 = vpop.f32.mrf.mxu0
      %v5828 = vadd.f32 %v5667, %v5827
      %v5829 = vpop.f32.mrf.mxu0
      %5830 = vmatprep.mubr.bf16.mxu0 0
      %5831 = vmatmul.mubr.bf16.gmra.mxu0 %v5338
      %v5832 = vpop.f32.mrf.mxu0
      %v5833 = vadd.f32 %v5672, %v5832
      %v5834 = vpop.f32.mrf.mxu0
      %v5835 = vpop.f32.mrf.mxu0
      %v5836 = vadd.f32 %v5675, %v5835
      %v5837 = vpop.f32.mrf.mxu0
      %5838 = vmatprep.mubr.bf16.mxu0 0
      %5839 = vmatmul.mubr.bf16.gmra.mxu0 %v5341
      %v5840 = vpop.f32.mrf.mxu0
      %v5841 = vadd.f32 %v5680, %v5840
      %v5842 = vpop.f32.mrf.mxu0
      %v5843 = vpop.f32.mrf.mxu0
      %v5844 = vadd.f32 %v5683, %v5843
      %v5845 = vpop.f32.mrf.mxu0
      %5846 = vmatprep.mubr.bf16.mxu0 0
      %5847 = vmatmul.mubr.bf16.gmra.mxu0 %v5344
      %v5848 = vpop.f32.mrf.mxu0
      %v5849 = vadd.f32 %v5688, %v5848
      %v5850 = vpop.f32.mrf.mxu0
      %v5851 = vpop.f32.mrf.mxu0
      %v5852 = vadd.f32 %v5691, %v5851
      %v5853 = vpop.f32.mrf.mxu0
      %5854 = vmatprep.mubr.bf16.mxu0 0
      %5855 = vmatmul.mubr.bf16.gmra.mxu0 %v5347
      %v5856 = vpop.f32.mrf.mxu0
      %v5857 = vadd.f32 %v5696, %v5856
      %v5858 = vpop.f32.mrf.mxu0
      %v5859 = vpop.f32.mrf.mxu0
      %v5860 = vadd.f32 %v5699, %v5859
      %v5861 = vpop.f32.mrf.mxu0
      %5862 = vdwg.mxu0
      %v5863 = vadd.f32 %v5077, %v5737
      %v5864 = vadd.f32 %v5080, %v5740
      %v5865 = vadd.f32 %v5085, %v5745
      %v5866 = vadd.f32 %v5088, %v5748
      %v5867 = vadd.f32 %v5093, %v5753
      %v5868 = vadd.f32 %v5096, %v5756
      %v5869 = vadd.f32 %v5101, %v5761
      %v5870 = vadd.f32 %v5104, %v5764
      %v5871 = vadd.f32 %v5109, %v5769
      %v5872 = vadd.f32 %v5112, %v5772
      %v5873 = vadd.f32 %v5117, %v5777
      %v5874 = vadd.f32 %v5120, %v5780
      %v5875 = vadd.f32 %v5125, %v5785
      %v5876 = vadd.f32 %v5128, %v5788
      %v5877 = vadd.f32 %v5133, %v5793
      %v5878 = vadd.f32 %v5136, %v5796
      %v5879 = vadd.f32 %v5141, %v5801
      %v5880 = vadd.f32 %v5144, %v5804
      %v5881 = vadd.f32 %v5149, %v5809
      %v5882 = vadd.f32 %v5152, %v5812
      %v5883 = vadd.f32 %v5157, %v5817
      %v5884 = vadd.f32 %v5160, %v5820
      %v5885 = vadd.f32 %v5165, %v5825
      %v5886 = vadd.f32 %v5168, %v5828
      %v5887 = vadd.f32 %v5173, %v5833
      %v5888 = vadd.f32 %v5176, %v5836
      %v5889 = vadd.f32 %v5181, %v5841
      %v5890 = vadd.f32 %v5184, %v5844
      %v5891 = vadd.f32 %v5189, %v5849
      %v5892 = vadd.f32 %v5192, %v5852
      %v5893 = vadd.f32 %v5197, %v5857
      %v5894 = vadd.f32 %v5200, %v5860
      %v5895 = vld [vmem:[%s6] sm:$0x1]
      %v5897 = vlaneseq
      %v5898 = vshrl.u32 %v5897, 7
      %v5899 = vsub.s32 0, %v5898
      %v5900 = vrot.slane %v5895, %v5899
      %v5902 = vadd.f32 %v5863, %v5900
      %v5903 = vadd.f32 %v5864, %v5900
      %v5904 = vadd.f32 %v5865, %v5900
      %v5905 = vadd.f32 %v5866, %v5900
      %v5906 = vadd.f32 %v5867, %v5900
      %v5907 = vadd.f32 %v5868, %v5900
      %v5908 = vadd.f32 %v5869, %v5900
      %v5909 = vadd.f32 %v5870, %v5900
      %v5910 = vadd.f32 %v5871, %v5900
      %v5911 = vadd.f32 %v5872, %v5900
      %v5912 = vadd.f32 %v5873, %v5900
      %v5913 = vadd.f32 %v5874, %v5900
      %v5914 = vadd.f32 %v5875, %v5900
      %v5915 = vadd.f32 %v5876, %v5900
      %v5916 = vadd.f32 %v5877, %v5900
      %v5917 = vadd.f32 %v5878, %v5900
      %v5918 = vadd.f32 %v5879, %v5900
      %v5919 = vadd.f32 %v5880, %v5900
      %v5920 = vadd.f32 %v5881, %v5900
      %v5921 = vadd.f32 %v5882, %v5900
      %v5922 = vadd.f32 %v5883, %v5900
      %v5923 = vadd.f32 %v5884, %v5900
      %v5924 = vadd.f32 %v5885, %v5900
      %v5925 = vadd.f32 %v5886, %v5900
      %v5926 = vadd.f32 %v5887, %v5900
      %v5927 = vadd.f32 %v5888, %v5900
      %v5928 = vadd.f32 %v5889, %v5900
      %v5929 = vadd.f32 %v5890, %v5900
      %v5930 = vadd.f32 %v5891, %v5900
      %v5931 = vadd.f32 %v5892, %v5900
      %v5932 = vadd.f32 %v5893, %v5900
      %v5933 = vadd.f32 %v5894, %v5900
      %5934 = vst [vmem:[%s278] sm:$0xff] %v5902
      %5935 = vst [vmem:[%s278 + $0x8] sm:$0xff] %v5903
      %5936 = vst [vmem:[%s278 + $0x10] sm:$0xff] %v5904
      %5937 = vst [vmem:[%s278 + $0x18] sm:$0xff] %v5905
      %5938 = vst [vmem:[%s278 + $0x20] sm:$0xff] %v5906
      %5939 = vst [vmem:[%s278 + $0x28] sm:$0xff] %v5907
      %5940 = vst [vmem:[%s278 + $0x30] sm:$0xff] %v5908
      %5941 = vst [vmem:[%s278 + $0x38] sm:$0xff] %v5909
      %5942 = vst [vmem:[%s278 + $0x40] sm:$0xff] %v5910
      %5943 = vst [vmem:[%s278 + $0x48] sm:$0xff] %v5911
      %5944 = vst [vmem:[%s278 + $0x50] sm:$0xff] %v5912
      %5945 = vst [vmem:[%s278 + $0x58] sm:$0xff] %v5913
      %5946 = vst [vmem:[%s278 + $0x60] sm:$0xff] %v5914
      %5947 = vst [vmem:[%s278 + $0x68] sm:$0xff] %v5915
      %5948 = vst [vmem:[%s278 + $0x70] sm:$0xff] %v5916
      %5949 = vst [vmem:[%s278 + $0x78] sm:$0xff] %v5917
      %5950 = vst [vmem:[%s278 + $0x80] sm:$0xff] %v5918
      %5951 = vst [vmem:[%s278 + $0x88] sm:$0xff] %v5919
      %5952 = vst [vmem:[%s278 + $0x90] sm:$0xff] %v5920
      %5953 = vst [vmem:[%s278 + $0x98] sm:$0xff] %v5921
      %5954 = vst [vmem:[%s278 + $0xa0] sm:$0xff] %v5922
      %5955 = vst [vmem:[%s278 + $0xa8] sm:$0xff] %v5923
      %5956 = vst [vmem:[%s278 + $0xb0] sm:$0xff] %v5924
      %5957 = vst [vmem:[%s278 + $0xb8] sm:$0xff] %v5925
      %5958 = vst [vmem:[%s278 + $0xc0] sm:$0xff] %v5926
      %5959 = vst [vmem:[%s278 + $0xc8] sm:$0xff] %v5927
      %5960 = vst [vmem:[%s278 + $0xd0] sm:$0xff] %v5928
      %5961 = vst [vmem:[%s278 + $0xd8] sm:$0xff] %v5929
      %5962 = vst [vmem:[%s278 + $0xe0] sm:$0xff] %v5930
      %5963 = vst [vmem:[%s278 + $0xe8] sm:$0xff] %v5931
      %5964 = vst [vmem:[%s278 + $0xf0] sm:$0xff] %v5932
      %5965 = vst [vmem:[%s278 + $0xf8] sm:$0xff] %v5933
      %p5966 = scmp.lt.s32.totalorder %s18, 1
      %s5967 = scalar_select %p5966, %s18, 1
      %s5968 = smul.addr %s5967, 32
      %s5969 = smul.addr %s5968, 8
      %s5970 = scalar_lea.vmem %s7, %s5969
      // Predicated region
      $region49: #{model_forward.1} parent=47 // pred_check
        %p5971 = pneg %p188
      $region50: #{model_forward.1} parent=47 // pred_check_branch
        %5973 = sbr.rel (%p5971) target = $region52
      $region51: #{model_forward.1} parent=47 // pred_region
        _
      $region52: #{model_forward.1} parent=47 // pred_fallthru
        _
    $region48: #{model_forward.1} parent=5 // pred_fallthru
      _
    %p5974 = scmp.le.s32.totalorder 2, %s13
    // Predicated region
    $region53: #{model_forward.1} parent=5 // pred_check
      %p5975 = pneg %p5974
    $region54: #{model_forward.1} parent=5 // pred_check_branch
      %5977 = sbr.rel (%p5975) target = $region56
    $region55: #{model_forward.1} parent=5 // pred_region
      %s5978 = ssub.s32 %s13, 2
      // Predicated region
      $region57: #{model_forward.1} parent=55 // pred_check
        %p5979 = pneg %p194
      $region58: #{model_forward.1} parent=55 // pred_check_branch
        %5981 = sbr.rel (%p5979) target = $region60
      $region59: #{model_forward.1} parent=55 // pred_region
        %p5982 = scmp.lt.s32.totalorder %s19, 1
        %s5983 = scalar_select %p5982, %s19, 1
        %s5984 = smul.addr %s5983, 32
        %s5985 = smul.addr %s5984, 8
        %s5986 = scalar_lea.vmem %s7, %s5985
      $region60: #{model_forward.1} parent=55 // pred_fallthru
        _
    $region56: #{model_forward.1} parent=5 // pred_fallthru
      _
  $region6: #{model_forward.1} parent=0 // loop_footer
    %s17 = sadd.s32 1, %s13
  $region7: #{model_forward.1} parent=0 // loop_footer_branch
    %12 = sbr.rel target = $region3
  $region8: #{model_forward.1} parent=0 // loop_exit
    _

</llo_original>
